<compile_context>
chip_gen: v5e
topology: v5e:2x2
jax: 0.10.0
libtpu: 0.0.40
codegen_flags: <defaults>
</compile_context>

<pallas_src>
import functools

import jax
import jax.numpy as jnp
from jax.experimental import pallas as pl
from jax.experimental.pallas import tpu as pltpu

LANE = 128                     # channel / K padding target (TPU lane width)
MAX_TM = 512                   # cap on rows (M) per grid step
VMEM_LIMIT_BYTES = 48 * 1024 * 1024   # > v5e 16MiB default scoped, < v7x 64MiB


def _round_up(v, m):
    return pl.cdiv(v, m) * m


def _tile_m(m):
    # bf16 LHS tiles: round rows to 16 (one packed sublane group), not 8.
    mp = _round_up(m, 16)
    tm = mp if mp <= MAX_TM else MAX_TM
    mp = _round_up(mp, tm)
    return mp, tm


def _cn_tile(cpad):
    # Output-channel tile: prefer 256 (full MXU width on v6e/v7x) when it
    # divides, else 128; small layers keep the whole padded width.
    if cpad <= 256:
        return cpad
    return 256 if cpad % 256 == 0 else LANE


# ----------------------------- Pallas kernels ------------------------------

def _conv_kernel(*refs, relu, res_mode):
    """Fused im2col-matmul conv + folded-BN bias (+ bf16 identity residual)
    (+ ReLU).  All blocks are lane dense (last dim a multiple of 128)."""
    if res_mode == "add":
        p_ref, w_ref, b_ref, r_ref, o_ref = refs
    else:
        p_ref, w_ref, b_ref, o_ref = refs
    y = jnp.dot(p_ref[...], w_ref[...], preferred_element_type=jnp.float32)
    y = y + b_ref[...]
    if res_mode == "add":
        y = y + r_ref[...].astype(jnp.float32)   # bf16 residual, f32 add
    if relu:
        y = jnp.maximum(y, 0.0)
    o_ref[...] = y.astype(o_ref.dtype)           # bf16 store (half writeback)


def _maxpool_kernel(p_ref, o_ref):
    """Max over the window axis of pre-gathered bf16 patches (KK, tm, C)."""
    acc = p_ref[0]
    for i in range(1, p_ref.shape[0]):
        acc = jnp.maximum(acc, p_ref[i])
    o_ref[...] = acc


def _avgpool_kernel(x_ref, o_ref, *, inv_hw):
    """Global average pool: bf16 (N, H*W, C) -> f32 (N, C)."""
    o_ref[...] = jnp.sum(x_ref[...].astype(jnp.float32), axis=1) * inv_hw


# ------------------- single-buffering capability probe ---------------------

def _probe_single_buffering():
    """Return {'pipeline_mode': pl.Buffered(1)} if the installed Pallas
    accepts single-buffered BlockSpecs, else {} (graceful fallback)."""
    def k(x_ref, o_ref):
        o_ref[...] = x_ref[...]
    try:
        spec = pl.BlockSpec((8, LANE), lambda i: (0, 0),
                            pipeline_mode=pl.Buffered(1))
        f = pl.pallas_call(
            k, out_shape=jax.ShapeDtypeStruct((8, LANE), jnp.float32),
            grid=(1,), in_specs=[spec],
            out_specs=pl.BlockSpec((8, LANE), lambda i: (0, 0)))
        jax.block_until_ready(f(jnp.zeros((8, LANE), jnp.float32)))
        return {"pipeline_mode": pl.Buffered(1)}
    except Exception:
        return {}


_SINGLE_BUF_KWARGS = _probe_single_buffering()


# ------------------------------ JAX glue ----------------------------------

def _im2col(x, kh, kw, stride, pad, pad_value=0.0):
    """x: NHWC -> patches (N*Ho*Wo, kh*kw*C). Static (XLA-side) slicing only."""
    N, H, W, C = x.shape
    if pad:
        x = jnp.pad(x, ((0, 0), (pad, pad), (pad, pad), (0, 0)),
                    constant_values=pad_value)
    Ho = (H + 2 * pad - kh) // stride + 1
    Wo = (W + 2 * pad - kw) // stride + 1
    cols = [x[:, i:i + stride * Ho:stride, j:j + stride * Wo:stride, :]
            for i in range(kh) for j in range(kw)]
    patches = cols[0] if len(cols) == 1 else jnp.concatenate(cols, axis=-1)
    return patches.reshape(N * Ho * Wo, kh * kw * C), Ho, Wo


def _fold_bn(conv_w, bn, cpad, kpad):
    """(Cout,Cin,kh,kw) + eval-mode BN -> bf16 (kpad,cpad) weight, f32 bias."""
    cout, cin, kh, kw = conv_w.shape
    k = kh * kw * cin
    gamma, beta, mean, var = bn
    scale = gamma * jax.lax.rsqrt(var + 1e-5)
    bias = beta - mean * scale
    wmat = jnp.transpose(conv_w, (2, 3, 1, 0)).reshape(k, cout) * scale[None, :]
    wmat = jnp.pad(wmat, ((0, kpad - k), (0, cpad - cout))).astype(jnp.bfloat16)
    bias = jnp.pad(bias, (0, cpad - cout)).reshape(1, cpad).astype(jnp.float32)
    return wmat, bias


def conv_bn_act(x, conv_w, bn, *, stride, pad, relu,
                residual=None, downsample=None):
    """One fused pallas_call: conv (im2col matmul, bf16/f32-acc) + folded-BN
    bias + optional identity residual add or K-concatenated 1x1-downsample
    branch + optional ReLU.  Output is bf16 NHWC with channels zero-padded to
    a multiple of 128 (lane dense)."""
    N = x.shape[0]
    cout, cin, kh, kw = conv_w.shape
    cpad = _round_up(cout, LANE)

    patches, Ho, Wo = _im2col(x[..., :cin].astype(jnp.bfloat16),
                              kh, kw, stride, pad)
    M, K = patches.shape
    Kp = _round_up(K, LANE)
    Mp, tm = _tile_m(M)
    patches = jnp.pad(patches, ((0, Mp - M), (0, Kp - K)))
    wmat, bias = _fold_bn(conv_w, bn, cpad, Kp)

    if downsample is not None:
        # Fold the block's 1x1 downsample conv+bn into the SAME matmul by
        # concatenating along K (weight concat is free at trace time).
        xd, wd, bnd, sd = downsample
        cind = wd.shape[1]
        pd, Hd, Wd = _im2col(xd[..., :cind].astype(jnp.bfloat16), 1, 1, sd, 0)
        assert pd.shape[0] == M and (Hd, Wd) == (Ho, Wo)
        Kd = pd.shape[1]
        Kdp = _round_up(Kd, LANE)
        pd = jnp.pad(pd, ((0, Mp - M), (0, Kdp - Kd)))
        wdm, bd = _fold_bn(wd, bnd, cpad, Kdp)
        patches = jnp.concatenate([patches, pd], axis=1)
        wmat = jnp.concatenate([wmat, wdm], axis=0)
        bias = bias + bd
    Ktot = patches.shape[1]

    cn = _cn_tile(cpad)
    n_cn = cpad // cn
    # Weight / bias blocks have a constant index map when there is a single
    # channel tile -> single-buffer them (no wasted VMEM copy).
    const_kwargs = dict(_SINGLE_BUF_KWARGS) if n_cn == 1 else {}

    p_spec = pl.BlockSpec((tm, Ktot), lambda i, j: (i, 0))
    w_spec = pl.BlockSpec((Ktot, cn), lambda i, j: (0, j), **const_kwargs)
    b_spec = pl.BlockSpec((1, cn), lambda i, j: (0, j), **const_kwargs)
    o_spec = pl.BlockSpec((tm, cn), lambda i, j: (i, j))

    flops = 2 * Mp * Ktot * cpad
    nbytes = (patches.size * 2 + wmat.size * 2 + bias.size * 4
              + Mp * cpad * 2)
    io_aliases = {}

    if residual is not None:
        assert residual.shape == (N, Ho, Wo, cpad)
        res = jnp.pad(residual.reshape(M, cpad).astype(jnp.bfloat16),
                      ((0, Mp - M), (0, 0)))
        args = [patches, wmat, bias, res]
        in_specs = [p_spec, w_spec, b_spec,
                    pl.BlockSpec((tm, cn), lambda i, j: (i, j))]
        nbytes += res.size * 2
        io_aliases = {3: 0}       # bf16 residual add writes in place
        res_mode = "add"
    else:
        args = [patches, wmat, bias]
        in_specs = [p_spec, w_spec, b_spec]
        res_mode = "none"

    out = pl.pallas_call(
        functools.partial(_conv_kernel, relu=relu, res_mode=res_mode),
        out_shape=jax.ShapeDtypeStruct((Mp, cpad), jnp.bfloat16),
        grid=(Mp // tm, n_cn),
        in_specs=in_specs,
        out_specs=o_spec,
        compiler_params=pltpu.CompilerParams(
            dimension_semantics=("parallel", "parallel"),
            vmem_limit_bytes=VMEM_LIMIT_BYTES),
        cost_estimate=pl.CostEstimate(flops=flops, transcendentals=0,
                                      bytes_accessed=nbytes),
        input_output_aliases=io_aliases,
    )(*args)
    return out[:M].reshape(N, Ho, Wo, cpad)


def maxpool2d_3x3s2p1(x):
    """nn.MaxPool2d(3, stride=2, padding=1) on a channel-padded bf16 NHWC."""
    N, H, W, C = x.shape
    k, stride, pad = 3, 2, 1
    xp = jnp.pad(x.astype(jnp.bfloat16),
                 ((0, 0), (pad, pad), (pad, pad), (0, 0)),
                 constant_values=-jnp.inf)
    Ho = (H + 2 * pad - k) // stride + 1
    Wo = (W + 2 * pad - k) // stride + 1
    cols = [xp[:, i:i + stride * Ho:stride, j:j + stride * Wo:stride, :]
            for i in range(k) for j in range(k)]
    M = N * Ho * Wo
    Mp, tm = _tile_m(M)
    patches = jnp.stack(cols, axis=0).reshape(k * k, M, C)
    patches = jnp.pad(patches, ((0, 0), (0, Mp - M), (0, 0)))
    out = pl.pallas_call(
        _maxpool_kernel,
        out_shape=jax.ShapeDtypeStruct((Mp, C), jnp.bfloat16),
        grid=(Mp // tm,),
        in_specs=[pl.BlockSpec((k * k, tm, C), lambda i: (0, i, 0))],
        out_specs=pl.BlockSpec((tm, C), lambda i: (i, 0)),
        compiler_params=pltpu.CompilerParams(
            dimension_semantics=("parallel",),
            vmem_limit_bytes=VMEM_LIMIT_BYTES),
    )(patches)
    return out[:M].reshape(N, Ho, Wo, C)


def global_avgpool(x):
    """F.avg_pool2d(x, (H, W)).view(N, -1) on channel-padded NHWC -> f32 (N, C)."""
    N, H, W, C = x.shape
    flat = x.reshape(N, H * W, C)
    return pl.pallas_call(
        functools.partial(_avgpool_kernel, inv_hw=1.0 / (H * W)),
        out_shape=jax.ShapeDtypeStruct((N, C), jnp.float32),
        grid=(1,),
        in_specs=[pl.BlockSpec((N, H * W, C), lambda i: (0, 0, 0))],
        out_specs=pl.BlockSpec((N, C), lambda i: (0, 0)),
    )(flat)


# --------------------------- ResNet-18 structure ---------------------------

def basic_block(x, p, stride):
    out = conv_bn_act(x, p['conv1'], p['bn1'], stride=stride, pad=1, relu=True)
    if 'downsample' in p:
        # conv2+bn2 + K-concatenated 1x1 downsample conv+bn + add + ReLU.
        return conv_bn_act(out, p['conv2'], p['bn2'], stride=1, pad=1,
                           relu=True,
                           downsample=(x, p['downsample']['conv'],
                                       p['downsample']['bn'], stride))
    return conv_bn_act(out, p['conv2'], p['bn2'], stride=1, pad=1, relu=True,
                       residual=x)


def resnet_forward(params, x_nchw, pooling=False):
    x = jnp.transpose(x_nchw, (0, 2, 3, 1))  # NCHW -> NHWC (internal layout)
    # stem: conv1 (7x7 s2 p3) + bn1 + relu, maxpool 3x3 s2 p1
    x = conv_bn_act(x, params['conv1'], params['bn1'], stride=2, pad=3,
                    relu=True)
    x = maxpool2d_3x3s2p1(x)
    # layer1..layer4 (2 BasicBlocks each, strides 1,2,2,2)
    for name, stride in zip(('layer1', 'layer2', 'layer3', 'layer4'),
                            (1, 2, 2, 2)):
        for bi, bp in enumerate(params[name]):
            x = basic_block(x, bp, stride if bi == 0 else 1)
    c_real = params['layer4'][-1]['conv2'].shape[0]   # drop channel padding
    if pooling:
        return global_avgpool(x)[:, :c_real]                 # f32 (N, C)
    return jnp.transpose(x[..., :c_real],
                         (0, 3, 1, 2)).astype(jnp.float32)   # NCHW f32


# ------------------------- deterministic parameters ------------------------

def _init_conv(key, cout, cin, kh, kw):
    return 0.1 * jax.random.normal(key, (cout, cin, kh, kw), jnp.float32)


def _init_bn(key, c):
    k1, k2, k3, k4 = jax.random.split(key, 4)
    gamma = 1.0 + 0.1 * jax.random.normal(k1, (c,), jnp.float32)
    beta = 0.1 * jax.random.normal(k2, (c,), jnp.float32)
    mean = 0.1 * jax.random.normal(k3, (c,), jnp.float32)
    var = 1.0 + 0.1 * jnp.abs(jax.random.normal(k4, (c,), jnp.float32))
    return (gamma, beta, mean, var)


def init_resnet18_params(key, in_channels=3, width=8):
    """ResNet-18 topology (BasicBlock, [2,2,2,2]), width-scaled channels."""
    counter = [0]

    def nk():
        counter[0] += 1
        return jax.random.fold_in(key, counter[0])

    params = {
        'conv1': _init_conv(nk(), width, in_channels, 7, 7),
        'bn1': _init_bn(nk(), width),
    }
    inplanes = width
    for name, planes, stride, nblocks in zip(
            ('layer1', 'layer2', 'layer3', 'layer4'),
            (width, 2 * width, 4 * width, 8 * width),
            (1, 2, 2, 2), (2, 2, 2, 2)):
        blocks = []
        for bi in range(nblocks):
            s = stride if bi == 0 else 1
            bp = {
                'conv1': _init_conv(nk(), planes, inplanes, 3, 3),
                'bn1': _init_bn(nk(), planes),
                'conv2': _init_conv(nk(), planes, planes, 3, 3),
                'bn2': _init_bn(nk(), planes),
            }
            if s != 1 or inplanes != planes:
                bp['downsample'] = {
                    'conv': _init_conv(nk(), planes, inplanes, 1, 1),
                    'bn': _init_bn(nk(), planes)}
            inplanes = planes
            blocks.append(bp)
        params[name] = blocks
    return params


# ----------------------------------- main ----------------------------------

if __name__ == "__main__":
    key = jax.random.PRNGKey(0)
    pkey, xkey = jax.random.split(key)

    width = 8
    params = init_resnet18_params(pkey, in_channels=3, width=width)
    x = jax.random.normal(xkey, (2, 3, 32, 32), jnp.float32)  # NCHW like PyTorch

    fwd = jax.jit(resnet_forward, static_argnames=("pooling",))

    feats = jax.block_until_ready(fwd(params, x, pooling=False))   # ResNet(pooling=False)
    pooled = jax.block_until_ready(fwd(params, x, pooling=True))   # ResNet(pooling=True)

    assert feats.shape == (2, 8 * width, 1, 1), feats.shape
    assert pooled.shape == (2, 8 * width), pooled.shape
    assert feats.dtype == jnp.float32 and pooled.dtype == jnp.float32

    print("KERNEL_OK")
</pallas_src>

<mosaic_0001>
module attributes {stable_mosaic.version = 11 : i64} {
  func.func @k(%arg0: i32, %arg1: memref<8x128xf32, #tpu.memory_space<vmem>>, %arg2: memref<8x128xf32, #tpu.memory_space<vmem>>) attributes {dimension_semantics = [#tpu.dimension_semantics<arbitrary>], iteration_bounds = array<i64: 1>, scalar_prefetch = 0 : i64, scratch_operands = 0 : i64, tpu.core_type = #tpu.core_type<tc>, window_params = [{pipeline_mode = #tpu.pipeline_mode<synchronous>, transform_indices = @transform_0, window_bounds = array<i64: 8, 128>}, {pipeline_mode = #tpu.pipeline_mode<synchronous>, transform_indices = @transform_1, window_bounds = array<i64: 8, 128>}]} {
    %c0 = arith.constant 0 : index
    %c0_0 = arith.constant 0 : index
    %0 = vector.load %arg1[%c0, %c0_0] : memref<8x128xf32, #tpu.memory_space<vmem>>, vector<8x128xf32>
    %c0_1 = arith.constant 0 : index
    %c0_2 = arith.constant 0 : index
    %1 = vector.load %arg2[%c0_1, %c0_2] : memref<8x128xf32, #tpu.memory_space<vmem>>, vector<8x128xf32>
    tpu.vector_store %arg2[%c0_1, %c0_2], %0 {strides = array<i32>} : memref<8x128xf32, #tpu.memory_space<vmem>>, vector<8x128xf32>,
    return
  }
  func.func @transform_0(%arg0: i32) -> (i32, i32) {
    %c0_i32 = arith.constant 0 : i32
    %c0_i32_0 = arith.constant 0 : i32
    %c0_i32_1 = arith.constant 0 : i32
    return %c0_i32, %c0_i32_0 : i32, i32
  }
  func.func @transform_1(%arg0: i32) -> (i32, i32) {
    %c0_i32 = arith.constant 0 : i32
    %c0_i32_0 = arith.constant 0 : i32
    %c0_i32_1 = arith.constant 0 : i32
    return %c0_i32, %c0_i32_0 : i32, i32
  }
}

module attributes {stable_mosaic.version = 11 : i64} {
  func.func @_conv_kernel(%arg0: i32, %arg1: i32, %arg2: memref<512x256xbf16, #tpu.memory_space<vmem>>, %arg3: memref<256x128xbf16, #tpu.memory_space<vmem>>, %arg4: memref<1x128xf32, #tpu.memory_space<vmem>>, %arg5: memref<512x128xbf16, #tpu.memory_space<vmem>>) attributes {dimension_semantics = [#tpu.dimension_semantics<parallel>, #tpu.dimension_semantics<parallel>], iteration_bounds = array<i64: 1, 1>, scalar_prefetch = 0 : i64, scratch_operands = 0 : i64, tpu.core_type = #tpu.core_type<tc>, window_params = [{transform_indices = @transform_0, window_bounds = array<i64: 512, 256>}, {transform_indices = @transform_1, window_bounds = array<i64: 256, 128>}, {transform_indices = @transform_2, window_bounds = array<i64: 1, 128>}, {transform_indices = @transform_3, window_bounds = array<i64: 512, 128>}]} {
    %c0 = arith.constant 0 : index
    %c0_0 = arith.constant 0 : index
    %0 = vector.load %arg2[%c0, %c0_0] : memref<512x256xbf16, #tpu.memory_space<vmem>>, vector<512x256xbf16>
    %c0_1 = arith.constant 0 : index
    %c0_2 = arith.constant 0 : index
    %1 = vector.load %arg3[%c0_1, %c0_2] : memref<256x128xbf16, #tpu.memory_space<vmem>>, vector<256x128xbf16>
    %cst = arith.constant dense<0.000000e+00> : vector<512x128xf32>
    %2 = tpu.matmul %0, %1, %cst {dimension_numbers = #tpu.dot_dimension_numbers<[1], [0], [0], [1], [0, 0, 1, 1], [], []>} : vector<512x256xbf16>, vector<256x128xbf16>, vector<512x128xf32> -> vector<512x128xf32>
    %c0_3 = arith.constant 0 : index
    %c0_4 = arith.constant 0 : index
    %3 = vector.load %arg4[%c0_3, %c0_4] : memref<1x128xf32, #tpu.memory_space<vmem>>, vector<1x128xf32>
    %4 = vector.broadcast %3 : vector<1x128xf32> to vector<512x128xf32>
    %5 = arith.addf %2, %4 : vector<512x128xf32>
    %cst_5 = arith.constant 0.000000e+00 : f32
    %6 = vector.broadcast %cst_5 : f32 to vector<512x128xf32>
    %7 = arith.maximumf %5, %6 : vector<512x128xf32>
    %8 = arith.truncf %7 : vector<512x128xf32> to vector<512x128xbf16>
    %c0_6 = arith.constant 0 : index
    %c0_7 = arith.constant 0 : index
    %9 = vector.load %arg5[%c0_6, %c0_7] : memref<512x128xbf16, #tpu.memory_space<vmem>>, vector<512x128xbf16>
    tpu.vector_store %arg5[%c0_6, %c0_7], %8 {strides = array<i32>} : memref<512x128xbf16, #tpu.memory_space<vmem>>, vector<512x128xbf16>,
    return
  }
  func.func @transform_0(%arg0: i32, %arg1: i32) -> (i32, i32) {
    %c0_i32 = arith.constant 0 : i32
    %c0_i32_0 = arith.constant 0 : i32
    return %arg0, %c0_i32 : i32, i32
  }
  func.func @transform_1(%arg0: i32, %arg1: i32) -> (i32, i32) {
    %c0_i32 = arith.constant 0 : i32
    %c0_i32_0 = arith.constant 0 : i32
    return %c0_i32, %arg1 : i32, i32
  }
  func.func @transform_2(%arg0: i32, %arg1: i32) -> (i32, i32) {
    %c0_i32 = arith.constant 0 : i32
    %c0_i32_0 = arith.constant 0 : i32
    return %c0_i32, %arg1 : i32, i32
  }
  func.func @transform_3(%arg0: i32, %arg1: i32) -> (i32, i32) {
    %c0_i32 = arith.constant 0 : i32
    return %arg0, %arg1 : i32, i32
  }
}

module attributes {stable_mosaic.version = 11 : i64} {
  func.func @_maxpool_kernel(%arg0: i32, %arg1: memref<9x128x128xbf16, #tpu.memory_space<vmem>>, %arg2: memref<128x128xbf16, #tpu.memory_space<vmem>>) attributes {dimension_semantics = [#tpu.dimension_semantics<parallel>], iteration_bounds = array<i64: 1>, scalar_prefetch = 0 : i64, scratch_operands = 0 : i64, tpu.core_type = #tpu.core_type<tc>, window_params = [{transform_indices = @transform_0, window_bounds = array<i64: 9, 128, 128>}, {transform_indices = @transform_1, window_bounds = array<i64: 128, 128>}]} {
    %c0 = arith.constant 0 : index
    %c0_0 = arith.constant 0 : index
    %c0_1 = arith.constant 0 : index
    %0 = vector.load %arg1[%c0, %c0_0, %c0_1] : memref<9x128x128xbf16, #tpu.memory_space<vmem>>, vector<1x128x128xbf16>
    %1 = vector.shape_cast %0 : vector<1x128x128xbf16> to vector<128x128xbf16>
    %c1 = arith.constant 1 : index
    %c0_2 = arith.constant 0 : index
    %c0_3 = arith.constant 0 : index
    %2 = vector.load %arg1[%c1, %c0_2, %c0_3] : memref<9x128x128xbf16, #tpu.memory_space<vmem>>, vector<1x128x128xbf16>
    %3 = vector.shape_cast %2 : vector<1x128x128xbf16> to vector<128x128xbf16>
    %4 = arith.maximumf %1, %3 : vector<128x128xbf16>
    %c2 = arith.constant 2 : index
    %c0_4 = arith.constant 0 : index
    %c0_5 = arith.constant 0 : index
    %5 = vector.load %arg1[%c2, %c0_4, %c0_5] : memref<9x128x128xbf16, #tpu.memory_space<vmem>>, vector<1x128x128xbf16>
    %6 = vector.shape_cast %5 : vector<1x128x128xbf16> to vector<128x128xbf16>
    %7 = arith.maximumf %4, %6 : vector<128x128xbf16>
    %c3 = arith.constant 3 : index
    %c0_6 = arith.constant 0 : index
    %c0_7 = arith.constant 0 : index
    %8 = vector.load %arg1[%c3, %c0_6, %c0_7] : memref<9x128x128xbf16, #tpu.memory_space<vmem>>, vector<1x128x128xbf16>
    %9 = vector.shape_cast %8 : vector<1x128x128xbf16> to vector<128x128xbf16>
    %10 = arith.maximumf %7, %9 : vector<128x128xbf16>
    %c4 = arith.constant 4 : index
    %c0_8 = arith.constant 0 : index
    %c0_9 = arith.constant 0 : index
    %11 = vector.load %arg1[%c4, %c0_8, %c0_9] : memref<9x128x128xbf16, #tpu.memory_space<vmem>>, vector<1x128x128xbf16>
    %12 = vector.shape_cast %11 : vector<1x128x128xbf16> to vector<128x128xbf16>
    %13 = arith.maximumf %10, %12 : vector<128x128xbf16>
    %c5 = arith.constant 5 : index
    %c0_10 = arith.constant 0 : index
    %c0_11 = arith.constant 0 : index
    %14 = vector.load %arg1[%c5, %c0_10, %c0_11] : memref<9x128x128xbf16, #tpu.memory_space<vmem>>, vector<1x128x128xbf16>
    %15 = vector.shape_cast %14 : vector<1x128x128xbf16> to vector<128x128xbf16>
    %16 = arith.maximumf %13, %15 : vector<128x128xbf16>
    %c6 = arith.constant 6 : index
    %c0_12 = arith.constant 0 : index
    %c0_13 = arith.constant 0 : index
    %17 = vector.load %arg1[%c6, %c0_12, %c0_13] : memref<9x128x128xbf16, #tpu.memory_space<vmem>>, vector<1x128x128xbf16>
    %18 = vector.shape_cast %17 : vector<1x128x128xbf16> to vector<128x128xbf16>
    %19 = arith.maximumf %16, %18 : vector<128x128xbf16>
    %c7 = arith.constant 7 : index
    %c0_14 = arith.constant 0 : index
    %c0_15 = arith.constant 0 : index
    %20 = vector.load %arg1[%c7, %c0_14, %c0_15] : memref<9x128x128xbf16, #tpu.memory_space<vmem>>, vector<1x128x128xbf16>
    %21 = vector.shape_cast %20 : vector<1x128x128xbf16> to vector<128x128xbf16>
    %22 = arith.maximumf %19, %21 : vector<128x128xbf16>
    %c8 = arith.constant 8 : index
    %c0_16 = arith.constant 0 : index
    %c0_17 = arith.constant 0 : index
    %23 = vector.load %arg1[%c8, %c0_16, %c0_17] : memref<9x128x128xbf16, #tpu.memory_space<vmem>>, vector<1x128x128xbf16>
    %24 = vector.shape_cast %23 : vector<1x128x128xbf16> to vector<128x128xbf16>
    %25 = arith.maximumf %22, %24 : vector<128x128xbf16>
    %c0_18 = arith.constant 0 : index
    %c0_19 = arith.constant 0 : index
    %26 = vector.load %arg2[%c0_18, %c0_19] : memref<128x128xbf16, #tpu.memory_space<vmem>>, vector<128x128xbf16>
    tpu.vector_store %arg2[%c0_18, %c0_19], %25 {strides = array<i32>} : memref<128x128xbf16, #tpu.memory_space<vmem>>, vector<128x128xbf16>,
    return
  }
  func.func @transform_0(%arg0: i32) -> (i32, i32, i32) {
    %c0_i32 = arith.constant 0 : i32
    %c0_i32_0 = arith.constant 0 : i32
    %c0_i32_1 = arith.constant 0 : i32
    return %c0_i32, %arg0, %c0_i32_0 : i32, i32, i32
  }
  func.func @transform_1(%arg0: i32) -> (i32, i32) {
    %c0_i32 = arith.constant 0 : i32
    %c0_i32_0 = arith.constant 0 : i32
    return %arg0, %c0_i32 : i32, i32
  }
}

module attributes {stable_mosaic.version = 11 : i64} {
  func.func @_conv_kernel(%arg0: i32, %arg1: i32, %arg2: memref<128x128xbf16, #tpu.memory_space<vmem>>, %arg3: memref<128x128xbf16, #tpu.memory_space<vmem>>, %arg4: memref<1x128xf32, #tpu.memory_space<vmem>>, %arg5: memref<128x128xbf16, #tpu.memory_space<vmem>>, %arg6: memref<128x128xbf16, #tpu.memory_space<vmem>>) attributes {dimension_semantics = [#tpu.dimension_semantics<parallel>, #tpu.dimension_semantics<parallel>], iteration_bounds = array<i64: 1, 1>, scalar_prefetch = 0 : i64, scratch_operands = 0 : i64, tpu.core_type = #tpu.core_type<tc>, window_params = [{transform_indices = @transform_0, window_bounds = array<i64: 128, 128>}, {transform_indices = @transform_1, window_bounds = array<i64: 128, 128>}, {transform_indices = @transform_2, window_bounds = array<i64: 1, 128>}, {transform_indices = @transform_3, window_bounds = array<i64: 128, 128>}, {transform_indices = @transform_4, window_bounds = array<i64: 128, 128>}]} {
    %c0 = arith.constant 0 : index
    %c0_0 = arith.constant 0 : index
    %0 = vector.load %arg2[%c0, %c0_0] : memref<128x128xbf16, #tpu.memory_space<vmem>>, vector<128x128xbf16>
    %c0_1 = arith.constant 0 : index
    %c0_2 = arith.constant 0 : index
    %1 = vector.load %arg3[%c0_1, %c0_2] : memref<128x128xbf16, #tpu.memory_space<vmem>>, vector<128x128xbf16>
    %cst = arith.constant dense<0.000000e+00> : vector<128x128xf32>
    %2 = tpu.matmul %0, %1, %cst {dimension_numbers = #tpu.dot_dimension_numbers<[1], [0], [0], [1], [0, 0, 1, 1], [], []>} : vector<128x128xbf16>, vector<128x128xbf16>, vector<128x128xf32> -> vector<128x128xf32>
    %c0_3 = arith.constant 0 : index
    %c0_4 = arith.constant 0 : index
    %3 = vector.load %arg4[%c0_3, %c0_4] : memref<1x128xf32, #tpu.memory_space<vmem>>, vector<1x128xf32>
    %4 = vector.broadcast %3 : vector<1x128xf32> to vector<128x128xf32>
    %5 = arith.addf %2, %4 : vector<128x128xf32>
    %c0_5 = arith.constant 0 : index
    %c0_6 = arith.constant 0 : index
    %6 = vector.load %arg5[%c0_5, %c0_6] : memref<128x128xbf16, #tpu.memory_space<vmem>>, vector<128x128xbf16>
    %7 = arith.extf %6 : vector<128x128xbf16> to vector<128x128xf32>
    %8 = arith.addf %5, %7 : vector<128x128xf32>
    %cst_7 = arith.constant 0.000000e+00 : f32
    %9 = vector.broadcast %cst_7 : f32 to vector<128x128xf32>
    %10 = arith.maximumf %8, %9 : vector<128x128xf32>
    %11 = arith.truncf %10 : vector<128x128xf32> to vector<128x128xbf16>
    %c0_8 = arith.constant 0 : index
    %c0_9 = arith.constant 0 : index
    %12 = vector.load %arg6[%c0_8, %c0_9] : memref<128x128xbf16, #tpu.memory_space<vmem>>, vector<128x128xbf16>
    tpu.vector_store %arg6[%c0_8, %c0_9], %11 {strides = array<i32>} : memref<128x128xbf16, #tpu.memory_space<vmem>>, vector<128x128xbf16>,
    return
  }
  func.func @transform_0(%arg0: i32, %arg1: i32) -> (i32, i32) {
    %c0_i32 = arith.constant 0 : i32
    %c0_i32_0 = arith.constant 0 : i32
    return %arg0, %c0_i32 : i32, i32
  }
  func.func @transform_1(%arg0: i32, %arg1: i32) -> (i32, i32) {
    %c0_i32 = arith.constant 0 : i32
    %c0_i32_0 = arith.constant 0 : i32
    return %c0_i32, %arg1 : i32, i32
  }
  func.func @transform_2(%arg0: i32, %arg1: i32) -> (i32, i32) {
    %c0_i32 = arith.constant 0 : i32
    %c0_i32_0 = arith.constant 0 : i32
    return %c0_i32, %arg1 : i32, i32
  }
  func.func @transform_3(%arg0: i32, %arg1: i32) -> (i32, i32) {
    %c0_i32 = arith.constant 0 : i32
    return %arg0, %arg1 : i32, i32
  }
  func.func @transform_4(%arg0: i32, %arg1: i32) -> (i32, i32) {
    %c0_i32 = arith.constant 0 : i32
    return %arg0, %arg1 : i32, i32
  }
}

module attributes {stable_mosaic.version = 11 : i64} {
  func.func @_conv_kernel(%arg0: i32, %arg1: i32, %arg2: memref<128x128xbf16, #tpu.memory_space<vmem>>, %arg3: memref<128x128xbf16, #tpu.memory_space<vmem>>, %arg4: memref<1x128xf32, #tpu.memory_space<vmem>>, %arg5: memref<128x128xbf16, #tpu.memory_space<vmem>>) attributes {dimension_semantics = [#tpu.dimension_semantics<parallel>, #tpu.dimension_semantics<parallel>], iteration_bounds = array<i64: 1, 1>, scalar_prefetch = 0 : i64, scratch_operands = 0 : i64, tpu.core_type = #tpu.core_type<tc>, window_params = [{transform_indices = @transform_0, window_bounds = array<i64: 128, 128>}, {transform_indices = @transform_1, window_bounds = array<i64: 128, 128>}, {transform_indices = @transform_2, window_bounds = array<i64: 1, 128>}, {transform_indices = @transform_3, window_bounds = array<i64: 128, 128>}]} {
    %c0 = arith.constant 0 : index
    %c0_0 = arith.constant 0 : index
    %0 = vector.load %arg2[%c0, %c0_0] : memref<128x128xbf16, #tpu.memory_space<vmem>>, vector<128x128xbf16>
    %c0_1 = arith.constant 0 : index
    %c0_2 = arith.constant 0 : index
    %1 = vector.load %arg3[%c0_1, %c0_2] : memref<128x128xbf16, #tpu.memory_space<vmem>>, vector<128x128xbf16>
    %cst = arith.constant dense<0.000000e+00> : vector<128x128xf32>
    %2 = tpu.matmul %0, %1, %cst {dimension_numbers = #tpu.dot_dimension_numbers<[1], [0], [0], [1], [0, 0, 1, 1], [], []>} : vector<128x128xbf16>, vector<128x128xbf16>, vector<128x128xf32> -> vector<128x128xf32>
    %c0_3 = arith.constant 0 : index
    %c0_4 = arith.constant 0 : index
    %3 = vector.load %arg4[%c0_3, %c0_4] : memref<1x128xf32, #tpu.memory_space<vmem>>, vector<1x128xf32>
    %4 = vector.broadcast %3 : vector<1x128xf32> to vector<128x128xf32>
    %5 = arith.addf %2, %4 : vector<128x128xf32>
    %cst_5 = arith.constant 0.000000e+00 : f32
    %6 = vector.broadcast %cst_5 : f32 to vector<128x128xf32>
    %7 = arith.maximumf %5, %6 : vector<128x128xf32>
    %8 = arith.truncf %7 : vector<128x128xf32> to vector<128x128xbf16>
    %c0_6 = arith.constant 0 : index
    %c0_7 = arith.constant 0 : index
    %9 = vector.load %arg5[%c0_6, %c0_7] : memref<128x128xbf16, #tpu.memory_space<vmem>>, vector<128x128xbf16>
    tpu.vector_store %arg5[%c0_6, %c0_7], %8 {strides = array<i32>} : memref<128x128xbf16, #tpu.memory_space<vmem>>, vector<128x128xbf16>,
    return
  }
  func.func @transform_0(%arg0: i32, %arg1: i32) -> (i32, i32) {
    %c0_i32 = arith.constant 0 : i32
    %c0_i32_0 = arith.constant 0 : i32
    return %arg0, %c0_i32 : i32, i32
  }
  func.func @transform_1(%arg0: i32, %arg1: i32) -> (i32, i32) {
    %c0_i32 = arith.constant 0 : i32
    %c0_i32_0 = arith.constant 0 : i32
    return %c0_i32, %arg1 : i32, i32
  }
  func.func @transform_2(%arg0: i32, %arg1: i32) -> (i32, i32) {
    %c0_i32 = arith.constant 0 : i32
    %c0_i32_0 = arith.constant 0 : i32
    return %c0_i32, %arg1 : i32, i32
  }
  func.func @transform_3(%arg0: i32, %arg1: i32) -> (i32, i32) {
    %c0_i32 = arith.constant 0 : i32
    return %arg0, %arg1 : i32, i32
  }
}

module attributes {stable_mosaic.version = 11 : i64} {
  func.func @_conv_kernel(%arg0: i32, %arg1: i32, %arg2: memref<32x128xbf16, #tpu.memory_space<vmem>>, %arg3: memref<128x128xbf16, #tpu.memory_space<vmem>>, %arg4: memref<1x128xf32, #tpu.memory_space<vmem>>, %arg5: memref<32x128xbf16, #tpu.memory_space<vmem>>) attributes {dimension_semantics = [#tpu.dimension_semantics<parallel>, #tpu.dimension_semantics<parallel>], iteration_bounds = array<i64: 1, 1>, scalar_prefetch = 0 : i64, scratch_operands = 0 : i64, tpu.core_type = #tpu.core_type<tc>, window_params = [{transform_indices = @transform_0, window_bounds = array<i64: 32, 128>}, {transform_indices = @transform_1, window_bounds = array<i64: 128, 128>}, {transform_indices = @transform_2, window_bounds = array<i64: 1, 128>}, {transform_indices = @transform_3, window_bounds = array<i64: 32, 128>}]} {
    %c0 = arith.constant 0 : index
    %c0_0 = arith.constant 0 : index
    %0 = vector.load %arg2[%c0, %c0_0] : memref<32x128xbf16, #tpu.memory_space<vmem>>, vector<32x128xbf16>
    %c0_1 = arith.constant 0 : index
    %c0_2 = arith.constant 0 : index
    %1 = vector.load %arg3[%c0_1, %c0_2] : memref<128x128xbf16, #tpu.memory_space<vmem>>, vector<128x128xbf16>
    %cst = arith.constant dense<0.000000e+00> : vector<32x128xf32>
    %2 = tpu.matmul %0, %1, %cst {dimension_numbers = #tpu.dot_dimension_numbers<[1], [0], [0], [1], [0, 0, 1, 1], [], []>} : vector<32x128xbf16>, vector<128x128xbf16>, vector<32x128xf32> -> vector<32x128xf32>
    %c0_3 = arith.constant 0 : index
    %c0_4 = arith.constant 0 : index
    %3 = vector.load %arg4[%c0_3, %c0_4] : memref<1x128xf32, #tpu.memory_space<vmem>>, vector<1x128xf32>
    %4 = vector.broadcast %3 : vector<1x128xf32> to vector<32x128xf32>
    %5 = arith.addf %2, %4 : vector<32x128xf32>
    %cst_5 = arith.constant 0.000000e+00 : f32
    %6 = vector.broadcast %cst_5 : f32 to vector<32x128xf32>
    %7 = arith.maximumf %5, %6 : vector<32x128xf32>
    %8 = arith.truncf %7 : vector<32x128xf32> to vector<32x128xbf16>
    %c0_6 = arith.constant 0 : index
    %c0_7 = arith.constant 0 : index
    %9 = vector.load %arg5[%c0_6, %c0_7] : memref<32x128xbf16, #tpu.memory_space<vmem>>, vector<32x128xbf16>
    tpu.vector_store %arg5[%c0_6, %c0_7], %8 {strides = array<i32>} : memref<32x128xbf16, #tpu.memory_space<vmem>>, vector<32x128xbf16>,
    return
  }
  func.func @transform_0(%arg0: i32, %arg1: i32) -> (i32, i32) {
    %c0_i32 = arith.constant 0 : i32
    %c0_i32_0 = arith.constant 0 : i32
    return %arg0, %c0_i32 : i32, i32
  }
  func.func @transform_1(%arg0: i32, %arg1: i32) -> (i32, i32) {
    %c0_i32 = arith.constant 0 : i32
    %c0_i32_0 = arith.constant 0 : i32
    return %c0_i32, %arg1 : i32, i32
  }
  func.func @transform_2(%arg0: i32, %arg1: i32) -> (i32, i32) {
    %c0_i32 = arith.constant 0 : i32
    %c0_i32_0 = arith.constant 0 : i32
    return %c0_i32, %arg1 : i32, i32
  }
  func.func @transform_3(%arg0: i32, %arg1: i32) -> (i32, i32) {
    %c0_i32 = arith.constant 0 : i32
    return %arg0, %arg1 : i32, i32
  }
}

module attributes {stable_mosaic.version = 11 : i64} {
  func.func @_conv_kernel(%arg0: i32, %arg1: i32, %arg2: memref<32x384xbf16, #tpu.memory_space<vmem>>, %arg3: memref<384x128xbf16, #tpu.memory_space<vmem>>, %arg4: memref<1x128xf32, #tpu.memory_space<vmem>>, %arg5: memref<32x128xbf16, #tpu.memory_space<vmem>>) attributes {dimension_semantics = [#tpu.dimension_semantics<parallel>, #tpu.dimension_semantics<parallel>], iteration_bounds = array<i64: 1, 1>, scalar_prefetch = 0 : i64, scratch_operands = 0 : i64, tpu.core_type = #tpu.core_type<tc>, window_params = [{transform_indices = @transform_0, window_bounds = array<i64: 32, 384>}, {transform_indices = @transform_1, window_bounds = array<i64: 384, 128>}, {transform_indices = @transform_2, window_bounds = array<i64: 1, 128>}, {transform_indices = @transform_3, window_bounds = array<i64: 32, 128>}]} {
    %c0 = arith.constant 0 : index
    %c0_0 = arith.constant 0 : index
    %0 = vector.load %arg2[%c0, %c0_0] : memref<32x384xbf16, #tpu.memory_space<vmem>>, vector<32x384xbf16>
    %c0_1 = arith.constant 0 : index
    %c0_2 = arith.constant 0 : index
    %1 = vector.load %arg3[%c0_1, %c0_2] : memref<384x128xbf16, #tpu.memory_space<vmem>>, vector<384x128xbf16>
    %cst = arith.constant dense<0.000000e+00> : vector<32x128xf32>
    %2 = tpu.matmul %0, %1, %cst {dimension_numbers = #tpu.dot_dimension_numbers<[1], [0], [0], [1], [0, 0, 1, 1], [], []>} : vector<32x384xbf16>, vector<384x128xbf16>, vector<32x128xf32> -> vector<32x128xf32>
    %c0_3 = arith.constant 0 : index
    %c0_4 = arith.constant 0 : index
    %3 = vector.load %arg4[%c0_3, %c0_4] : memref<1x128xf32, #tpu.memory_space<vmem>>, vector<1x128xf32>
    %4 = vector.broadcast %3 : vector<1x128xf32> to vector<32x128xf32>
    %5 = arith.addf %2, %4 : vector<32x128xf32>
    %cst_5 = arith.constant 0.000000e+00 : f32
    %6 = vector.broadcast %cst_5 : f32 to vector<32x128xf32>
    %7 = arith.maximumf %5, %6 : vector<32x128xf32>
    %8 = arith.truncf %7 : vector<32x128xf32> to vector<32x128xbf16>
    %c0_6 = arith.constant 0 : index
    %c0_7 = arith.constant 0 : index
    %9 = vector.load %arg5[%c0_6, %c0_7] : memref<32x128xbf16, #tpu.memory_space<vmem>>, vector<32x128xbf16>
    tpu.vector_store %arg5[%c0_6, %c0_7], %8 {strides = array<i32>} : memref<32x128xbf16, #tpu.memory_space<vmem>>, vector<32x128xbf16>,
    return
  }
  func.func @transform_0(%arg0: i32, %arg1: i32) -> (i32, i32) {
    %c0_i32 = arith.constant 0 : i32
    %c0_i32_0 = arith.constant 0 : i32
    return %arg0, %c0_i32 : i32, i32
  }
  func.func @transform_1(%arg0: i32, %arg1: i32) -> (i32, i32) {
    %c0_i32 = arith.constant 0 : i32
    %c0_i32_0 = arith.constant 0 : i32
    return %c0_i32, %arg1 : i32, i32
  }
  func.func @transform_2(%arg0: i32, %arg1: i32) -> (i32, i32) {
    %c0_i32 = arith.constant 0 : i32
    %c0_i32_0 = arith.constant 0 : i32
    return %c0_i32, %arg1 : i32, i32
  }
  func.func @transform_3(%arg0: i32, %arg1: i32) -> (i32, i32) {
    %c0_i32 = arith.constant 0 : i32
    return %arg0, %arg1 : i32, i32
  }
}

module attributes {stable_mosaic.version = 11 : i64} {
  func.func @_conv_kernel(%arg0: i32, %arg1: i32, %arg2: memref<32x256xbf16, #tpu.memory_space<vmem>>, %arg3: memref<256x128xbf16, #tpu.memory_space<vmem>>, %arg4: memref<1x128xf32, #tpu.memory_space<vmem>>, %arg5: memref<32x128xbf16, #tpu.memory_space<vmem>>) attributes {dimension_semantics = [#tpu.dimension_semantics<parallel>, #tpu.dimension_semantics<parallel>], iteration_bounds = array<i64: 1, 1>, scalar_prefetch = 0 : i64, scratch_operands = 0 : i64, tpu.core_type = #tpu.core_type<tc>, window_params = [{transform_indices = @transform_0, window_bounds = array<i64: 32, 256>}, {transform_indices = @transform_1, window_bounds = array<i64: 256, 128>}, {transform_indices = @transform_2, window_bounds = array<i64: 1, 128>}, {transform_indices = @transform_3, window_bounds = array<i64: 32, 128>}]} {
    %c0 = arith.constant 0 : index
    %c0_0 = arith.constant 0 : index
    %0 = vector.load %arg2[%c0, %c0_0] : memref<32x256xbf16, #tpu.memory_space<vmem>>, vector<32x256xbf16>
    %c0_1 = arith.constant 0 : index
    %c0_2 = arith.constant 0 : index
    %1 = vector.load %arg3[%c0_1, %c0_2] : memref<256x128xbf16, #tpu.memory_space<vmem>>, vector<256x128xbf16>
    %cst = arith.constant dense<0.000000e+00> : vector<32x128xf32>
    %2 = tpu.matmul %0, %1, %cst {dimension_numbers = #tpu.dot_dimension_numbers<[1], [0], [0], [1], [0, 0, 1, 1], [], []>} : vector<32x256xbf16>, vector<256x128xbf16>, vector<32x128xf32> -> vector<32x128xf32>
    %c0_3 = arith.constant 0 : index
    %c0_4 = arith.constant 0 : index
    %3 = vector.load %arg4[%c0_3, %c0_4] : memref<1x128xf32, #tpu.memory_space<vmem>>, vector<1x128xf32>
    %4 = vector.broadcast %3 : vector<1x128xf32> to vector<32x128xf32>
    %5 = arith.addf %2, %4 : vector<32x128xf32>
    %cst_5 = arith.constant 0.000000e+00 : f32
    %6 = vector.broadcast %cst_5 : f32 to vector<32x128xf32>
    %7 = arith.maximumf %5, %6 : vector<32x128xf32>
    %8 = arith.truncf %7 : vector<32x128xf32> to vector<32x128xbf16>
    %c0_6 = arith.constant 0 : index
    %c0_7 = arith.constant 0 : index
    %9 = vector.load %arg5[%c0_6, %c0_7] : memref<32x128xbf16, #tpu.memory_space<vmem>>, vector<32x128xbf16>
    tpu.vector_store %arg5[%c0_6, %c0_7], %8 {strides = array<i32>} : memref<32x128xbf16, #tpu.memory_space<vmem>>, vector<32x128xbf16>,
    return
  }
  func.func @transform_0(%arg0: i32, %arg1: i32) -> (i32, i32) {
    %c0_i32 = arith.constant 0 : i32
    %c0_i32_0 = arith.constant 0 : i32
    return %arg0, %c0_i32 : i32, i32
  }
  func.func @transform_1(%arg0: i32, %arg1: i32) -> (i32, i32) {
    %c0_i32 = arith.constant 0 : i32
    %c0_i32_0 = arith.constant 0 : i32
    return %c0_i32, %arg1 : i32, i32
  }
  func.func @transform_2(%arg0: i32, %arg1: i32) -> (i32, i32) {
    %c0_i32 = arith.constant 0 : i32
    %c0_i32_0 = arith.constant 0 : i32
    return %c0_i32, %arg1 : i32, i32
  }
  func.func @transform_3(%arg0: i32, %arg1: i32) -> (i32, i32) {
    %c0_i32 = arith.constant 0 : i32
    return %arg0, %arg1 : i32, i32
  }
}

module attributes {stable_mosaic.version = 11 : i64} {
  func.func @_conv_kernel(%arg0: i32, %arg1: i32, %arg2: memref<32x256xbf16, #tpu.memory_space<vmem>>, %arg3: memref<256x128xbf16, #tpu.memory_space<vmem>>, %arg4: memref<1x128xf32, #tpu.memory_space<vmem>>, %arg5: memref<32x128xbf16, #tpu.memory_space<vmem>>, %arg6: memref<32x128xbf16, #tpu.memory_space<vmem>>) attributes {dimension_semantics = [#tpu.dimension_semantics<parallel>, #tpu.dimension_semantics<parallel>], iteration_bounds = array<i64: 1, 1>, scalar_prefetch = 0 : i64, scratch_operands = 0 : i64, tpu.core_type = #tpu.core_type<tc>, window_params = [{transform_indices = @transform_0, window_bounds = array<i64: 32, 256>}, {transform_indices = @transform_1, window_bounds = array<i64: 256, 128>}, {transform_indices = @transform_2, window_bounds = array<i64: 1, 128>}, {transform_indices = @transform_3, window_bounds = array<i64: 32, 128>}, {transform_indices = @transform_4, window_bounds = array<i64: 32, 128>}]} {
    %c0 = arith.constant 0 : index
    %c0_0 = arith.constant 0 : index
    %0 = vector.load %arg2[%c0, %c0_0] : memref<32x256xbf16, #tpu.memory_space<vmem>>, vector<32x256xbf16>
    %c0_1 = arith.constant 0 : index
    %c0_2 = arith.constant 0 : index
    %1 = vector.load %arg3[%c0_1, %c0_2] : memref<256x128xbf16, #tpu.memory_space<vmem>>, vector<256x128xbf16>
    %cst = arith.constant dense<0.000000e+00> : vector<32x128xf32>
    %2 = tpu.matmul %0, %1, %cst {dimension_numbers = #tpu.dot_dimension_numbers<[1], [0], [0], [1], [0, 0, 1, 1], [], []>} : vector<32x256xbf16>, vector<256x128xbf16>, vector<32x128xf32> -> vector<32x128xf32>
    %c0_3 = arith.constant 0 : index
    %c0_4 = arith.constant 0 : index
    %3 = vector.load %arg4[%c0_3, %c0_4] : memref<1x128xf32, #tpu.memory_space<vmem>>, vector<1x128xf32>
    %4 = vector.broadcast %3 : vector<1x128xf32> to vector<32x128xf32>
    %5 = arith.addf %2, %4 : vector<32x128xf32>
    %c0_5 = arith.constant 0 : index
    %c0_6 = arith.constant 0 : index
    %6 = vector.load %arg5[%c0_5, %c0_6] : memref<32x128xbf16, #tpu.memory_space<vmem>>, vector<32x128xbf16>
    %7 = arith.extf %6 : vector<32x128xbf16> to vector<32x128xf32>
    %8 = arith.addf %5, %7 : vector<32x128xf32>
    %cst_7 = arith.constant 0.000000e+00 : f32
    %9 = vector.broadcast %cst_7 : f32 to vector<32x128xf32>
    %10 = arith.maximumf %8, %9 : vector<32x128xf32>
    %11 = arith.truncf %10 : vector<32x128xf32> to vector<32x128xbf16>
    %c0_8 = arith.constant 0 : index
    %c0_9 = arith.constant 0 : index
    %12 = vector.load %arg6[%c0_8, %c0_9] : memref<32x128xbf16, #tpu.memory_space<vmem>>, vector<32x128xbf16>
    tpu.vector_store %arg6[%c0_8, %c0_9], %11 {strides = array<i32>} : memref<32x128xbf16, #tpu.memory_space<vmem>>, vector<32x128xbf16>,
    return
  }
  func.func @transform_0(%arg0: i32, %arg1: i32) -> (i32, i32) {
    %c0_i32 = arith.constant 0 : i32
    %c0_i32_0 = arith.constant 0 : i32
    return %arg0, %c0_i32 : i32, i32
  }
  func.func @transform_1(%arg0: i32, %arg1: i32) -> (i32, i32) {
    %c0_i32 = arith.constant 0 : i32
    %c0_i32_0 = arith.constant 0 : i32
    return %c0_i32, %arg1 : i32, i32
  }
  func.func @transform_2(%arg0: i32, %arg1: i32) -> (i32, i32) {
    %c0_i32 = arith.constant 0 : i32
    %c0_i32_0 = arith.constant 0 : i32
    return %c0_i32, %arg1 : i32, i32
  }
  func.func @transform_3(%arg0: i32, %arg1: i32) -> (i32, i32) {
    %c0_i32 = arith.constant 0 : i32
    return %arg0, %arg1 : i32, i32
  }
  func.func @transform_4(%arg0: i32, %arg1: i32) -> (i32, i32) {
    %c0_i32 = arith.constant 0 : i32
    return %arg0, %arg1 : i32, i32
  }
}

module attributes {stable_mosaic.version = 11 : i64} {
  func.func @_conv_kernel(%arg0: i32, %arg1: i32, %arg2: memref<16x256xbf16, #tpu.memory_space<vmem>>, %arg3: memref<256x128xbf16, #tpu.memory_space<vmem>>, %arg4: memref<1x128xf32, #tpu.memory_space<vmem>>, %arg5: memref<16x128xbf16, #tpu.memory_space<vmem>>) attributes {dimension_semantics = [#tpu.dimension_semantics<parallel>, #tpu.dimension_semantics<parallel>], iteration_bounds = array<i64: 1, 1>, scalar_prefetch = 0 : i64, scratch_operands = 0 : i64, tpu.core_type = #tpu.core_type<tc>, window_params = [{transform_indices = @transform_0, window_bounds = array<i64: 16, 256>}, {transform_indices = @transform_1, window_bounds = array<i64: 256, 128>}, {transform_indices = @transform_2, window_bounds = array<i64: 1, 128>}, {transform_indices = @transform_3, window_bounds = array<i64: 16, 128>}]} {
    %c0 = arith.constant 0 : index
    %c0_0 = arith.constant 0 : index
    %0 = vector.load %arg2[%c0, %c0_0] : memref<16x256xbf16, #tpu.memory_space<vmem>>, vector<16x256xbf16>
    %c0_1 = arith.constant 0 : index
    %c0_2 = arith.constant 0 : index
    %1 = vector.load %arg3[%c0_1, %c0_2] : memref<256x128xbf16, #tpu.memory_space<vmem>>, vector<256x128xbf16>
    %cst = arith.constant dense<0.000000e+00> : vector<16x128xf32>
    %2 = tpu.matmul %0, %1, %cst {dimension_numbers = #tpu.dot_dimension_numbers<[1], [0], [0], [1], [0, 0, 1, 1], [], []>} : vector<16x256xbf16>, vector<256x128xbf16>, vector<16x128xf32> -> vector<16x128xf32>
    %c0_3 = arith.constant 0 : index
    %c0_4 = arith.constant 0 : index
    %3 = vector.load %arg4[%c0_3, %c0_4] : memref<1x128xf32, #tpu.memory_space<vmem>>, vector<1x128xf32>
    %4 = vector.broadcast %3 : vector<1x128xf32> to vector<16x128xf32>
    %5 = arith.addf %2, %4 : vector<16x128xf32>
    %cst_5 = arith.constant 0.000000e+00 : f32
    %6 = vector.broadcast %cst_5 : f32 to vector<16x128xf32>
    %7 = arith.maximumf %5, %6 : vector<16x128xf32>
    %8 = arith.truncf %7 : vector<16x128xf32> to vector<16x128xbf16>
    %c0_6 = arith.constant 0 : index
    %c0_7 = arith.constant 0 : index
    %9 = vector.load %arg5[%c0_6, %c0_7] : memref<16x128xbf16, #tpu.memory_space<vmem>>, vector<16x128xbf16>
    tpu.vector_store %arg5[%c0_6, %c0_7], %8 {strides = array<i32>} : memref<16x128xbf16, #tpu.memory_space<vmem>>, vector<16x128xbf16>,
    return
  }
  func.func @transform_0(%arg0: i32, %arg1: i32) -> (i32, i32) {
    %c0_i32 = arith.constant 0 : i32
    %c0_i32_0 = arith.constant 0 : i32
    return %arg0, %c0_i32 : i32, i32
  }
  func.func @transform_1(%arg0: i32, %arg1: i32) -> (i32, i32) {
    %c0_i32 = arith.constant 0 : i32
    %c0_i32_0 = arith.constant 0 : i32
    return %c0_i32, %arg1 : i32, i32
  }
  func.func @transform_2(%arg0: i32, %arg1: i32) -> (i32, i32) {
    %c0_i32 = arith.constant 0 : i32
    %c0_i32_0 = arith.constant 0 : i32
    return %c0_i32, %arg1 : i32, i32
  }
  func.func @transform_3(%arg0: i32, %arg1: i32) -> (i32, i32) {
    %c0_i32 = arith.constant 0 : i32
    return %arg0, %arg1 : i32, i32
  }
}

module attributes {stable_mosaic.version = 11 : i64} {
  func.func @_conv_kernel(%arg0: i32, %arg1: i32, %arg2: memref<16x512xbf16, #tpu.memory_space<vmem>>, %arg3: memref<512x128xbf16, #tpu.memory_space<vmem>>, %arg4: memref<1x128xf32, #tpu.memory_space<vmem>>, %arg5: memref<16x128xbf16, #tpu.memory_space<vmem>>) attributes {dimension_semantics = [#tpu.dimension_semantics<parallel>, #tpu.dimension_semantics<parallel>], iteration_bounds = array<i64: 1, 1>, scalar_prefetch = 0 : i64, scratch_operands = 0 : i64, tpu.core_type = #tpu.core_type<tc>, window_params = [{transform_indices = @transform_0, window_bounds = array<i64: 16, 512>}, {transform_indices = @transform_1, window_bounds = array<i64: 512, 128>}, {transform_indices = @transform_2, window_bounds = array<i64: 1, 128>}, {transform_indices = @transform_3, window_bounds = array<i64: 16, 128>}]} {
    %c0 = arith.constant 0 : index
    %c0_0 = arith.constant 0 : index
    %0 = vector.load %arg2[%c0, %c0_0] : memref<16x512xbf16, #tpu.memory_space<vmem>>, vector<16x512xbf16>
    %c0_1 = arith.constant 0 : index
    %c0_2 = arith.constant 0 : index
    %1 = vector.load %arg3[%c0_1, %c0_2] : memref<512x128xbf16, #tpu.memory_space<vmem>>, vector<512x128xbf16>
    %cst = arith.constant dense<0.000000e+00> : vector<16x128xf32>
    %2 = tpu.matmul %0, %1, %cst {dimension_numbers = #tpu.dot_dimension_numbers<[1], [0], [0], [1], [0, 0, 1, 1], [], []>} : vector<16x512xbf16>, vector<512x128xbf16>, vector<16x128xf32> -> vector<16x128xf32>
    %c0_3 = arith.constant 0 : index
    %c0_4 = arith.constant 0 : index
    %3 = vector.load %arg4[%c0_3, %c0_4] : memref<1x128xf32, #tpu.memory_space<vmem>>, vector<1x128xf32>
    %4 = vector.broadcast %3 : vector<1x128xf32> to vector<16x128xf32>
    %5 = arith.addf %2, %4 : vector<16x128xf32>
    %cst_5 = arith.constant 0.000000e+00 : f32
    %6 = vector.broadcast %cst_5 : f32 to vector<16x128xf32>
    %7 = arith.maximumf %5, %6 : vector<16x128xf32>
    %8 = arith.truncf %7 : vector<16x128xf32> to vector<16x128xbf16>
    %c0_6 = arith.constant 0 : index
    %c0_7 = arith.constant 0 : index
    %9 = vector.load %arg5[%c0_6, %c0_7] : memref<16x128xbf16, #tpu.memory_space<vmem>>, vector<16x128xbf16>
    tpu.vector_store %arg5[%c0_6, %c0_7], %8 {strides = array<i32>} : memref<16x128xbf16, #tpu.memory_space<vmem>>, vector<16x128xbf16>,
    return
  }
  func.func @transform_0(%arg0: i32, %arg1: i32) -> (i32, i32) {
    %c0_i32 = arith.constant 0 : i32
    %c0_i32_0 = arith.constant 0 : i32
    return %arg0, %c0_i32 : i32, i32
  }
  func.func @transform_1(%arg0: i32, %arg1: i32) -> (i32, i32) {
    %c0_i32 = arith.constant 0 : i32
    %c0_i32_0 = arith.constant 0 : i32
    return %c0_i32, %arg1 : i32, i32
  }
  func.func @transform_2(%arg0: i32, %arg1: i32) -> (i32, i32) {
    %c0_i32 = arith.constant 0 : i32
    %c0_i32_0 = arith.constant 0 : i32
    return %c0_i32, %arg1 : i32, i32
  }
  func.func @transform_3(%arg0: i32, %arg1: i32) -> (i32, i32) {
    %c0_i32 = arith.constant 0 : i32
    return %arg0, %arg1 : i32, i32
  }
}

module attributes {stable_mosaic.version = 11 : i64} {
  func.func @_conv_kernel(%arg0: i32, %arg1: i32, %arg2: memref<16x384xbf16, #tpu.memory_space<vmem>>, %arg3: memref<384x128xbf16, #tpu.memory_space<vmem>>, %arg4: memref<1x128xf32, #tpu.memory_space<vmem>>, %arg5: memref<16x128xbf16, #tpu.memory_space<vmem>>, %arg6: memref<16x128xbf16, #tpu.memory_space<vmem>>) attributes {dimension_semantics = [#tpu.dimension_semantics<parallel>, #tpu.dimension_semantics<parallel>], iteration_bounds = array<i64: 1, 1>, scalar_prefetch = 0 : i64, scratch_operands = 0 : i64, tpu.core_type = #tpu.core_type<tc>, window_params = [{transform_indices = @transform_0, window_bounds = array<i64: 16, 384>}, {transform_indices = @transform_1, window_bounds = array<i64: 384, 128>}, {transform_indices = @transform_2, window_bounds = array<i64: 1, 128>}, {transform_indices = @transform_3, window_bounds = array<i64: 16, 128>}, {transform_indices = @transform_4, window_bounds = array<i64: 16, 128>}]} {
    %c0 = arith.constant 0 : index
    %c0_0 = arith.constant 0 : index
    %0 = vector.load %arg2[%c0, %c0_0] : memref<16x384xbf16, #tpu.memory_space<vmem>>, vector<16x384xbf16>
    %c0_1 = arith.constant 0 : index
    %c0_2 = arith.constant 0 : index
    %1 = vector.load %arg3[%c0_1, %c0_2] : memref<384x128xbf16, #tpu.memory_space<vmem>>, vector<384x128xbf16>
    %cst = arith.constant dense<0.000000e+00> : vector<16x128xf32>
    %2 = tpu.matmul %0, %1, %cst {dimension_numbers = #tpu.dot_dimension_numbers<[1], [0], [0], [1], [0, 0, 1, 1], [], []>} : vector<16x384xbf16>, vector<384x128xbf16>, vector<16x128xf32> -> vector<16x128xf32>
    %c0_3 = arith.constant 0 : index
    %c0_4 = arith.constant 0 : index
    %3 = vector.load %arg4[%c0_3, %c0_4] : memref<1x128xf32, #tpu.memory_space<vmem>>, vector<1x128xf32>
    %4 = vector.broadcast %3 : vector<1x128xf32> to vector<16x128xf32>
    %5 = arith.addf %2, %4 : vector<16x128xf32>
    %c0_5 = arith.constant 0 : index
    %c0_6 = arith.constant 0 : index
    %6 = vector.load %arg5[%c0_5, %c0_6] : memref<16x128xbf16, #tpu.memory_space<vmem>>, vector<16x128xbf16>
    %7 = arith.extf %6 : vector<16x128xbf16> to vector<16x128xf32>
    %8 = arith.addf %5, %7 : vector<16x128xf32>
    %cst_7 = arith.constant 0.000000e+00 : f32
    %9 = vector.broadcast %cst_7 : f32 to vector<16x128xf32>
    %10 = arith.maximumf %8, %9 : vector<16x128xf32>
    %11 = arith.truncf %10 : vector<16x128xf32> to vector<16x128xbf16>
    %c0_8 = arith.constant 0 : index
    %c0_9 = arith.constant 0 : index
    %12 = vector.load %arg6[%c0_8, %c0_9] : memref<16x128xbf16, #tpu.memory_space<vmem>>, vector<16x128xbf16>
    tpu.vector_store %arg6[%c0_8, %c0_9], %11 {strides = array<i32>} : memref<16x128xbf16, #tpu.memory_space<vmem>>, vector<16x128xbf16>,
    return
  }
  func.func @transform_0(%arg0: i32, %arg1: i32) -> (i32, i32) {
    %c0_i32 = arith.constant 0 : i32
    %c0_i32_0 = arith.constant 0 : i32
    return %arg0, %c0_i32 : i32, i32
  }
  func.func @transform_1(%arg0: i32, %arg1: i32) -> (i32, i32) {
    %c0_i32 = arith.constant 0 : i32
    %c0_i32_0 = arith.constant 0 : i32
    return %c0_i32, %arg1 : i32, i32
  }
  func.func @transform_2(%arg0: i32, %arg1: i32) -> (i32, i32) {
    %c0_i32 = arith.constant 0 : i32
    %c0_i32_0 = arith.constant 0 : i32
    return %c0_i32, %arg1 : i32, i32
  }
  func.func @transform_3(%arg0: i32, %arg1: i32) -> (i32, i32) {
    %c0_i32 = arith.constant 0 : i32
    return %arg0, %arg1 : i32, i32
  }
  func.func @transform_4(%arg0: i32, %arg1: i32) -> (i32, i32) {
    %c0_i32 = arith.constant 0 : i32
    return %arg0, %arg1 : i32, i32
  }
}

module attributes {stable_mosaic.version = 11 : i64} {
  func.func @_conv_kernel(%arg0: i32, %arg1: i32, %arg2: memref<16x384xbf16, #tpu.memory_space<vmem>>, %arg3: memref<384x128xbf16, #tpu.memory_space<vmem>>, %arg4: memref<1x128xf32, #tpu.memory_space<vmem>>, %arg5: memref<16x128xbf16, #tpu.memory_space<vmem>>) attributes {dimension_semantics = [#tpu.dimension_semantics<parallel>, #tpu.dimension_semantics<parallel>], iteration_bounds = array<i64: 1, 1>, scalar_prefetch = 0 : i64, scratch_operands = 0 : i64, tpu.core_type = #tpu.core_type<tc>, window_params = [{transform_indices = @transform_0, window_bounds = array<i64: 16, 384>}, {transform_indices = @transform_1, window_bounds = array<i64: 384, 128>}, {transform_indices = @transform_2, window_bounds = array<i64: 1, 128>}, {transform_indices = @transform_3, window_bounds = array<i64: 16, 128>}]} {
    %c0 = arith.constant 0 : index
    %c0_0 = arith.constant 0 : index
    %0 = vector.load %arg2[%c0, %c0_0] : memref<16x384xbf16, #tpu.memory_space<vmem>>, vector<16x384xbf16>
    %c0_1 = arith.constant 0 : index
    %c0_2 = arith.constant 0 : index
    %1 = vector.load %arg3[%c0_1, %c0_2] : memref<384x128xbf16, #tpu.memory_space<vmem>>, vector<384x128xbf16>
    %cst = arith.constant dense<0.000000e+00> : vector<16x128xf32>
    %2 = tpu.matmul %0, %1, %cst {dimension_numbers = #tpu.dot_dimension_numbers<[1], [0], [0], [1], [0, 0, 1, 1], [], []>} : vector<16x384xbf16>, vector<384x128xbf16>, vector<16x128xf32> -> vector<16x128xf32>
    %c0_3 = arith.constant 0 : index
    %c0_4 = arith.constant 0 : index
    %3 = vector.load %arg4[%c0_3, %c0_4] : memref<1x128xf32, #tpu.memory_space<vmem>>, vector<1x128xf32>
    %4 = vector.broadcast %3 : vector<1x128xf32> to vector<16x128xf32>
    %5 = arith.addf %2, %4 : vector<16x128xf32>
    %cst_5 = arith.constant 0.000000e+00 : f32
    %6 = vector.broadcast %cst_5 : f32 to vector<16x128xf32>
    %7 = arith.maximumf %5, %6 : vector<16x128xf32>
    %8 = arith.truncf %7 : vector<16x128xf32> to vector<16x128xbf16>
    %c0_6 = arith.constant 0 : index
    %c0_7 = arith.constant 0 : index
    %9 = vector.load %arg5[%c0_6, %c0_7] : memref<16x128xbf16, #tpu.memory_space<vmem>>, vector<16x128xbf16>
    tpu.vector_store %arg5[%c0_6, %c0_7], %8 {strides = array<i32>} : memref<16x128xbf16, #tpu.memory_space<vmem>>, vector<16x128xbf16>,
    return
  }
  func.func @transform_0(%arg0: i32, %arg1: i32) -> (i32, i32) {
    %c0_i32 = arith.constant 0 : i32
    %c0_i32_0 = arith.constant 0 : i32
    return %arg0, %c0_i32 : i32, i32
  }
  func.func @transform_1(%arg0: i32, %arg1: i32) -> (i32, i32) {
    %c0_i32 = arith.constant 0 : i32
    %c0_i32_0 = arith.constant 0 : i32
    return %c0_i32, %arg1 : i32, i32
  }
  func.func @transform_2(%arg0: i32, %arg1: i32) -> (i32, i32) {
    %c0_i32 = arith.constant 0 : i32
    %c0_i32_0 = arith.constant 0 : i32
    return %c0_i32, %arg1 : i32, i32
  }
  func.func @transform_3(%arg0: i32, %arg1: i32) -> (i32, i32) {
    %c0_i32 = arith.constant 0 : i32
    return %arg0, %arg1 : i32, i32
  }
}

module attributes {stable_mosaic.version = 11 : i64} {
  func.func @_conv_kernel(%arg0: i32, %arg1: i32, %arg2: memref<16x768xbf16, #tpu.memory_space<vmem>>, %arg3: memref<768x128xbf16, #tpu.memory_space<vmem>>, %arg4: memref<1x128xf32, #tpu.memory_space<vmem>>, %arg5: memref<16x128xbf16, #tpu.memory_space<vmem>>) attributes {dimension_semantics = [#tpu.dimension_semantics<parallel>, #tpu.dimension_semantics<parallel>], iteration_bounds = array<i64: 1, 1>, scalar_prefetch = 0 : i64, scratch_operands = 0 : i64, tpu.core_type = #tpu.core_type<tc>, window_params = [{transform_indices = @transform_0, window_bounds = array<i64: 16, 768>}, {transform_indices = @transform_1, window_bounds = array<i64: 768, 128>}, {transform_indices = @transform_2, window_bounds = array<i64: 1, 128>}, {transform_indices = @transform_3, window_bounds = array<i64: 16, 128>}]} {
    %c0 = arith.constant 0 : index
    %c0_0 = arith.constant 0 : index
    %0 = vector.load %arg2[%c0, %c0_0] : memref<16x768xbf16, #tpu.memory_space<vmem>>, vector<16x768xbf16>
    %c0_1 = arith.constant 0 : index
    %c0_2 = arith.constant 0 : index
    %1 = vector.load %arg3[%c0_1, %c0_2] : memref<768x128xbf16, #tpu.memory_space<vmem>>, vector<768x128xbf16>
    %cst = arith.constant dense<0.000000e+00> : vector<16x128xf32>
    %2 = tpu.matmul %0, %1, %cst {dimension_numbers = #tpu.dot_dimension_numbers<[1], [0], [0], [1], [0, 0, 1, 1], [], []>} : vector<16x768xbf16>, vector<768x128xbf16>, vector<16x128xf32> -> vector<16x128xf32>
    %c0_3 = arith.constant 0 : index
    %c0_4 = arith.constant 0 : index
    %3 = vector.load %arg4[%c0_3, %c0_4] : memref<1x128xf32, #tpu.memory_space<vmem>>, vector<1x128xf32>
    %4 = vector.broadcast %3 : vector<1x128xf32> to vector<16x128xf32>
    %5 = arith.addf %2, %4 : vector<16x128xf32>
    %cst_5 = arith.constant 0.000000e+00 : f32
    %6 = vector.broadcast %cst_5 : f32 to vector<16x128xf32>
    %7 = arith.maximumf %5, %6 : vector<16x128xf32>
    %8 = arith.truncf %7 : vector<16x128xf32> to vector<16x128xbf16>
    %c0_6 = arith.constant 0 : index
    %c0_7 = arith.constant 0 : index
    %9 = vector.load %arg5[%c0_6, %c0_7] : memref<16x128xbf16, #tpu.memory_space<vmem>>, vector<16x128xbf16>
    tpu.vector_store %arg5[%c0_6, %c0_7], %8 {strides = array<i32>} : memref<16x128xbf16, #tpu.memory_space<vmem>>, vector<16x128xbf16>,
    return
  }
  func.func @transform_0(%arg0: i32, %arg1: i32) -> (i32, i32) {
    %c0_i32 = arith.constant 0 : i32
    %c0_i32_0 = arith.constant 0 : i32
    return %arg0, %c0_i32 : i32, i32
  }
  func.func @transform_1(%arg0: i32, %arg1: i32) -> (i32, i32) {
    %c0_i32 = arith.constant 0 : i32
    %c0_i32_0 = arith.constant 0 : i32
    return %c0_i32, %arg1 : i32, i32
  }
  func.func @transform_2(%arg0: i32, %arg1: i32) -> (i32, i32) {
    %c0_i32 = arith.constant 0 : i32
    %c0_i32_0 = arith.constant 0 : i32
    return %c0_i32, %arg1 : i32, i32
  }
  func.func @transform_3(%arg0: i32, %arg1: i32) -> (i32, i32) {
    %c0_i32 = arith.constant 0 : i32
    return %arg0, %arg1 : i32, i32
  }
}

module attributes {stable_mosaic.version = 11 : i64} {
  func.func @_conv_kernel(%arg0: i32, %arg1: i32, %arg2: memref<16x640xbf16, #tpu.memory_space<vmem>>, %arg3: memref<640x128xbf16, #tpu.memory_space<vmem>>, %arg4: memref<1x128xf32, #tpu.memory_space<vmem>>, %arg5: memref<16x128xbf16, #tpu.memory_space<vmem>>, %arg6: memref<16x128xbf16, #tpu.memory_space<vmem>>) attributes {dimension_semantics = [#tpu.dimension_semantics<parallel>, #tpu.dimension_semantics<parallel>], iteration_bounds = array<i64: 1, 1>, scalar_prefetch = 0 : i64, scratch_operands = 0 : i64, tpu.core_type = #tpu.core_type<tc>, window_params = [{transform_indices = @transform_0, window_bounds = array<i64: 16, 640>}, {transform_indices = @transform_1, window_bounds = array<i64: 640, 128>}, {transform_indices = @transform_2, window_bounds = array<i64: 1, 128>}, {transform_indices = @transform_3, window_bounds = array<i64: 16, 128>}, {transform_indices = @transform_4, window_bounds = array<i64: 16, 128>}]} {
    %c0 = arith.constant 0 : index
    %c0_0 = arith.constant 0 : index
    %0 = vector.load %arg2[%c0, %c0_0] : memref<16x640xbf16, #tpu.memory_space<vmem>>, vector<16x640xbf16>
    %c0_1 = arith.constant 0 : index
    %c0_2 = arith.constant 0 : index
    %1 = vector.load %arg3[%c0_1, %c0_2] : memref<640x128xbf16, #tpu.memory_space<vmem>>, vector<640x128xbf16>
    %cst = arith.constant dense<0.000000e+00> : vector<16x128xf32>
    %2 = tpu.matmul %0, %1, %cst {dimension_numbers = #tpu.dot_dimension_numbers<[1], [0], [0], [1], [0, 0, 1, 1], [], []>} : vector<16x640xbf16>, vector<640x128xbf16>, vector<16x128xf32> -> vector<16x128xf32>
    %c0_3 = arith.constant 0 : index
    %c0_4 = arith.constant 0 : index
    %3 = vector.load %arg4[%c0_3, %c0_4] : memref<1x128xf32, #tpu.memory_space<vmem>>, vector<1x128xf32>
    %4 = vector.broadcast %3 : vector<1x128xf32> to vector<16x128xf32>
    %5 = arith.addf %2, %4 : vector<16x128xf32>
    %c0_5 = arith.constant 0 : index
    %c0_6 = arith.constant 0 : index
    %6 = vector.load %arg5[%c0_5, %c0_6] : memref<16x128xbf16, #tpu.memory_space<vmem>>, vector<16x128xbf16>
    %7 = arith.extf %6 : vector<16x128xbf16> to vector<16x128xf32>
    %8 = arith.addf %5, %7 : vector<16x128xf32>
    %cst_7 = arith.constant 0.000000e+00 : f32
    %9 = vector.broadcast %cst_7 : f32 to vector<16x128xf32>
    %10 = arith.maximumf %8, %9 : vector<16x128xf32>
    %11 = arith.truncf %10 : vector<16x128xf32> to vector<16x128xbf16>
    %c0_8 = arith.constant 0 : index
    %c0_9 = arith.constant 0 : index
    %12 = vector.load %arg6[%c0_8, %c0_9] : memref<16x128xbf16, #tpu.memory_space<vmem>>, vector<16x128xbf16>
    tpu.vector_store %arg6[%c0_8, %c0_9], %11 {strides = array<i32>} : memref<16x128xbf16, #tpu.memory_space<vmem>>, vector<16x128xbf16>,
    return
  }
  func.func @transform_0(%arg0: i32, %arg1: i32) -> (i32, i32) {
    %c0_i32 = arith.constant 0 : i32
    %c0_i32_0 = arith.constant 0 : i32
    return %arg0, %c0_i32 : i32, i32
  }
  func.func @transform_1(%arg0: i32, %arg1: i32) -> (i32, i32) {
    %c0_i32 = arith.constant 0 : i32
    %c0_i32_0 = arith.constant 0 : i32
    return %c0_i32, %arg1 : i32, i32
  }
  func.func @transform_2(%arg0: i32, %arg1: i32) -> (i32, i32) {
    %c0_i32 = arith.constant 0 : i32
    %c0_i32_0 = arith.constant 0 : i32
    return %c0_i32, %arg1 : i32, i32
  }
  func.func @transform_3(%arg0: i32, %arg1: i32) -> (i32, i32) {
    %c0_i32 = arith.constant 0 : i32
    return %arg0, %arg1 : i32, i32
  }
  func.func @transform_4(%arg0: i32, %arg1: i32) -> (i32, i32) {
    %c0_i32 = arith.constant 0 : i32
    return %arg0, %arg1 : i32, i32
  }
}

module attributes {stable_mosaic.version = 11 : i64} {
  func.func @_conv_kernel(%arg0: i32, %arg1: i32, %arg2: memref<16x640xbf16, #tpu.memory_space<vmem>>, %arg3: memref<640x128xbf16, #tpu.memory_space<vmem>>, %arg4: memref<1x128xf32, #tpu.memory_space<vmem>>, %arg5: memref<16x128xbf16, #tpu.memory_space<vmem>>) attributes {dimension_semantics = [#tpu.dimension_semantics<parallel>, #tpu.dimension_semantics<parallel>], iteration_bounds = array<i64: 1, 1>, scalar_prefetch = 0 : i64, scratch_operands = 0 : i64, tpu.core_type = #tpu.core_type<tc>, window_params = [{transform_indices = @transform_0, window_bounds = array<i64: 16, 640>}, {transform_indices = @transform_1, window_bounds = array<i64: 640, 128>}, {transform_indices = @transform_2, window_bounds = array<i64: 1, 128>}, {transform_indices = @transform_3, window_bounds = array<i64: 16, 128>}]} {
    %c0 = arith.constant 0 : index
    %c0_0 = arith.constant 0 : index
    %0 = vector.load %arg2[%c0, %c0_0] : memref<16x640xbf16, #tpu.memory_space<vmem>>, vector<16x640xbf16>
    %c0_1 = arith.constant 0 : index
    %c0_2 = arith.constant 0 : index
    %1 = vector.load %arg3[%c0_1, %c0_2] : memref<640x128xbf16, #tpu.memory_space<vmem>>, vector<640x128xbf16>
    %cst = arith.constant dense<0.000000e+00> : vector<16x128xf32>
    %2 = tpu.matmul %0, %1, %cst {dimension_numbers = #tpu.dot_dimension_numbers<[1], [0], [0], [1], [0, 0, 1, 1], [], []>} : vector<16x640xbf16>, vector<640x128xbf16>, vector<16x128xf32> -> vector<16x128xf32>
    %c0_3 = arith.constant 0 : index
    %c0_4 = arith.constant 0 : index
    %3 = vector.load %arg4[%c0_3, %c0_4] : memref<1x128xf32, #tpu.memory_space<vmem>>, vector<1x128xf32>
    %4 = vector.broadcast %3 : vector<1x128xf32> to vector<16x128xf32>
    %5 = arith.addf %2, %4 : vector<16x128xf32>
    %cst_5 = arith.constant 0.000000e+00 : f32
    %6 = vector.broadcast %cst_5 : f32 to vector<16x128xf32>
    %7 = arith.maximumf %5, %6 : vector<16x128xf32>
    %8 = arith.truncf %7 : vector<16x128xf32> to vector<16x128xbf16>
    %c0_6 = arith.constant 0 : index
    %c0_7 = arith.constant 0 : index
    %9 = vector.load %arg5[%c0_6, %c0_7] : memref<16x128xbf16, #tpu.memory_space<vmem>>, vector<16x128xbf16>
    tpu.vector_store %arg5[%c0_6, %c0_7], %8 {strides = array<i32>} : memref<16x128xbf16, #tpu.memory_space<vmem>>, vector<16x128xbf16>,
    return
  }
  func.func @transform_0(%arg0: i32, %arg1: i32) -> (i32, i32) {
    %c0_i32 = arith.constant 0 : i32
    %c0_i32_0 = arith.constant 0 : i32
    return %arg0, %c0_i32 : i32, i32
  }
  func.func @transform_1(%arg0: i32, %arg1: i32) -> (i32, i32) {
    %c0_i32 = arith.constant 0 : i32
    %c0_i32_0 = arith.constant 0 : i32
    return %c0_i32, %arg1 : i32, i32
  }
  func.func @transform_2(%arg0: i32, %arg1: i32) -> (i32, i32) {
    %c0_i32 = arith.constant 0 : i32
    %c0_i32_0 = arith.constant 0 : i32
    return %c0_i32, %arg1 : i32, i32
  }
  func.func @transform_3(%arg0: i32, %arg1: i32) -> (i32, i32) {
    %c0_i32 = arith.constant 0 : i32
    return %arg0, %arg1 : i32, i32
  }
}

</mosaic_0001>

<llo_original>
// kernel: tpu_custom_call.1
$region0: #{tpu_custom_call.1}
  #allocation0 [shape = 'u32[]', space=smem, size = 0x4, offset = 0x4, fixed_abs, tag = 'smem constant byte address 0x4 - core index']
  #allocation1 [shape = 'u32[72,128]{1,0:T(1,128)}', space=vmem, size = 0x9000, scoped, tag = 'internal scratch']
  %s0 = inlined_call_operand.hbm [shape: f32[8,128], index: 0, kind: input, shape index: {}]
  %s1 = inlined_call_operand.hbm [shape: f32[8,128], index: 1, kind: output, shape index: {}]
  %s2 = sld [smem:[#allocation0]]
  $region18: #{tpu_custom_call.1} parent=0
    _
  %s4 = ssub.s32 1, %s2
  %s5 = scalar_select 0, %s4, %s2
  $region1: #{tpu_custom_call.1} parent=0
    #allocation2 [shape = 'u8[4096]{0}', space=vmem, size = 0x1000, scoped, tag = 'input window, operand 0, single buffered']
    #allocation3 [shape = 's32[1]{0}', space=sflag, size = 0x4, scoped, tag = 'scoped memory for tpu_custom_call.1']
    #allocation4 [shape = 's32[1]{0}', space=sflag, size = 0x4, scoped, tag = 'scoped memory for tpu_custom_call.1']
    #allocation5 [shape = 'u8[4096]{0}', space=vmem, size = 0x1000, scoped, tag = 'output window, operand 0, single buffered']
    %6 = vsyncpa [#allocation3], 0
    %7 = vsyncpa [#allocation4], 0
    // Predicated region
    $region2: #{tpu_custom_call.1} parent=1 // pred_check
      _
    $region3: #{tpu_custom_call.1} parent=1 // pred_check_branch
      %9 = sbr.rel (0) target = $region5
    $region4: #{tpu_custom_call.1} parent=1 // pred_region
      %11 = vsyncadd [#allocation3], 0
      %s13 = sshll.u32 %s0, 4
      %s14 = int_to_ptr.hbm [resolvable:$true] %s13
      %s15 = sshll.u32 [#allocation2], 4
      %s16 = int_to_ptr.vmem [resolvable:$true] %s15
      %18 = dma.hbm_to_vmem [thread:$0]  %s14, 128, %s16, [#allocation3]
    $region5: #{tpu_custom_call.1} parent=1 // pred_fallthru
      _
    // Predicated region
    $region6: #{tpu_custom_call.1} parent=1 // pred_check
      _
    $region7: #{tpu_custom_call.1} parent=1 // pred_check_branch
      %20 = sbr.rel (0) target = $region9
    $region8: #{tpu_custom_call.1} parent=1 // pred_region
      %22 = dma.done [#allocation3], 128
    $region9: #{tpu_custom_call.1} parent=1 // pred_fallthru
      _
    %v23 = vld [vmem:[#allocation2] sm:$0xff]
    %24 = vst [vmem:[#allocation5] sm:$0xff] %v23
    // Predicated region
    $region10: #{tpu_custom_call.1} parent=1 // pred_check
      _
    $region11: #{tpu_custom_call.1} parent=1 // pred_check_branch
      %26 = sbr.rel (0) target = $region13
    $region12: #{tpu_custom_call.1} parent=1 // pred_region
      %28 = vsyncadd [#allocation4], 0
      %s30 = sshll.u32 [#allocation5], 4
      %s31 = int_to_ptr.vmem [resolvable:$true] %s30
      %s32 = sshll.u32 %s1, 4
      %s33 = int_to_ptr.hbm [resolvable:$true] %s32
      %35 = dma.vmem_to_hbm [thread:$0]  %s31, 128, %s33, [#allocation4]
    $region13: #{tpu_custom_call.1} parent=1 // pred_fallthru
      _
    // Predicated region
    $region14: #{tpu_custom_call.1} parent=1 // pred_check
      _
    $region15: #{tpu_custom_call.1} parent=1 // pred_check_branch
      %37 = sbr.rel (0) target = $region17
    $region16: #{tpu_custom_call.1} parent=1 // pred_region
      %39 = dma.done [#allocation4], 128
    $region17: #{tpu_custom_call.1} parent=1 // pred_fallthru
      _
    %40 = vsyncpa [#allocation3], 1
    %41 = vsyncpa [#allocation4], 1

// kernel: resnet_forward.18
$region0: #{resnet_forward.18}
  #allocation0 [shape = 'u32[]', space=smem, size = 0x4, offset = 0x4, fixed_abs, tag = 'smem constant byte address 0x4 - core index']
  #allocation1 [shape = 'u32[72,128]{1,0:T(1,128)}', space=vmem, size = 0x9000, scoped, tag = 'internal scratch']
  %s0 = inlined_call_operand.vmem [shape: bf16[512,256], index: 0, kind: input, shape index: {}]
  %s1 = inlined_call_operand.vmem [shape: bf16[256,128], index: 1, kind: input, shape index: {}]
  %s2 = inlined_call_operand.vmem [shape: f32[1,128], index: 2, kind: input, shape index: {}]
  %s3 = inlined_call_operand.vmem [shape: bf16[512,128], index: 3, kind: output, shape index: {}]
  %s4 = sld [smem:[#allocation0]]
  $region22: #{resnet_forward.18} parent=0
    _
  %s6 = ssub.s32 1, %s4
  %s7 = scalar_select 0, %s6, %s4
  // Predicated region
  $region2: #{resnet_forward.18} parent=0 // pred_check
    _
  $region3: #{resnet_forward.18} parent=0 // pred_check_branch
    %9 = sbr.rel (0) target = $region5
  $region4: #{resnet_forward.18} parent=0 // pred_region
    _
  $region5: #{resnet_forward.18} parent=0 // pred_fallthru
    _
  // Predicated region
  $region6: #{resnet_forward.18} parent=0 // pred_check
    _
  $region7: #{resnet_forward.18} parent=0 // pred_check_branch
    %11 = sbr.rel (0) target = $region9
  $region8: #{resnet_forward.18} parent=0 // pred_region
    _
  $region9: #{resnet_forward.18} parent=0 // pred_fallthru
    _
  // Predicated region
  $region10: #{resnet_forward.18} parent=0 // pred_check
    _
  $region11: #{resnet_forward.18} parent=0 // pred_check_branch
    %13 = sbr.rel (0) target = $region13
  $region12: #{resnet_forward.18} parent=0 // pred_region
    _
  $region13: #{resnet_forward.18} parent=0 // pred_fallthru
    _
  %v14 = vld [vmem:[%s0] sm:$0xff]
  %v15 = vld [vmem:[%s0 + $0x8] sm:$0xff]
  %v16 = vld [vmem:[%s0 + $0x10] sm:$0xff]
  %v17 = vld [vmem:[%s0 + $0x18] sm:$0xff]
  %v18 = vld [vmem:[%s0 + $0x20] sm:$0xff]
  %v19 = vld [vmem:[%s0 + $0x28] sm:$0xff]
  %v20 = vld [vmem:[%s0 + $0x30] sm:$0xff]
  %v21 = vld [vmem:[%s0 + $0x38] sm:$0xff]
  %v22 = vld [vmem:[%s0 + $0x40] sm:$0xff]
  %v23 = vld [vmem:[%s0 + $0x48] sm:$0xff]
  %v24 = vld [vmem:[%s0 + $0x50] sm:$0xff]
  %v25 = vld [vmem:[%s0 + $0x58] sm:$0xff]
  %v26 = vld [vmem:[%s0 + $0x60] sm:$0xff]
  %v27 = vld [vmem:[%s0 + $0x68] sm:$0xff]
  %v28 = vld [vmem:[%s0 + $0x70] sm:$0xff]
  %v29 = vld [vmem:[%s0 + $0x78] sm:$0xff]
  %v30 = vld [vmem:[%s0 + $0x80] sm:$0xff]
  %v31 = vld [vmem:[%s0 + $0x88] sm:$0xff]
  %v32 = vld [vmem:[%s0 + $0x90] sm:$0xff]
  %v33 = vld [vmem:[%s0 + $0x98] sm:$0xff]
  %v34 = vld [vmem:[%s0 + $0xa0] sm:$0xff]
  %v35 = vld [vmem:[%s0 + $0xa8] sm:$0xff]
  %v36 = vld [vmem:[%s0 + $0xb0] sm:$0xff]
  %v37 = vld [vmem:[%s0 + $0xb8] sm:$0xff]
  %v38 = vld [vmem:[%s0 + $0xc0] sm:$0xff]
  %v39 = vld [vmem:[%s0 + $0xc8] sm:$0xff]
  %v40 = vld [vmem:[%s0 + $0xd0] sm:$0xff]
  %v41 = vld [vmem:[%s0 + $0xd8] sm:$0xff]
  %v42 = vld [vmem:[%s0 + $0xe0] sm:$0xff]
  %v43 = vld [vmem:[%s0 + $0xe8] sm:$0xff]
  %v44 = vld [vmem:[%s0 + $0xf0] sm:$0xff]
  %v45 = vld [vmem:[%s0 + $0xf8] sm:$0xff]
  %v46 = vld [vmem:[%s0 + $0x100] sm:$0xff]
  %v47 = vld [vmem:[%s0 + $0x108] sm:$0xff]
  %v48 = vld [vmem:[%s0 + $0x110] sm:$0xff]
  %v49 = vld [vmem:[%s0 + $0x118] sm:$0xff]
  %v50 = vld [vmem:[%s0 + $0x120] sm:$0xff]
  %v51 = vld [vmem:[%s0 + $0x128] sm:$0xff]
  %v52 = vld [vmem:[%s0 + $0x130] sm:$0xff]
  %v53 = vld [vmem:[%s0 + $0x138] sm:$0xff]
  %v54 = vld [vmem:[%s0 + $0x140] sm:$0xff]
  %v55 = vld [vmem:[%s0 + $0x148] sm:$0xff]
  %v56 = vld [vmem:[%s0 + $0x150] sm:$0xff]
  %v57 = vld [vmem:[%s0 + $0x158] sm:$0xff]
  %v58 = vld [vmem:[%s0 + $0x160] sm:$0xff]
  %v59 = vld [vmem:[%s0 + $0x168] sm:$0xff]
  %v60 = vld [vmem:[%s0 + $0x170] sm:$0xff]
  %v61 = vld [vmem:[%s0 + $0x178] sm:$0xff]
  %v62 = vld [vmem:[%s0 + $0x180] sm:$0xff]
  %v63 = vld [vmem:[%s0 + $0x188] sm:$0xff]
  %v64 = vld [vmem:[%s0 + $0x190] sm:$0xff]
  %v65 = vld [vmem:[%s0 + $0x198] sm:$0xff]
  %v66 = vld [vmem:[%s0 + $0x1a0] sm:$0xff]
  %v67 = vld [vmem:[%s0 + $0x1a8] sm:$0xff]
  %v68 = vld [vmem:[%s0 + $0x1b0] sm:$0xff]
  %v69 = vld [vmem:[%s0 + $0x1b8] sm:$0xff]
  %v70 = vld [vmem:[%s0 + $0x1c0] sm:$0xff]
  %v71 = vld [vmem:[%s0 + $0x1c8] sm:$0xff]
  %v72 = vld [vmem:[%s0 + $0x1d0] sm:$0xff]
  %v73 = vld [vmem:[%s0 + $0x1d8] sm:$0xff]
  %v74 = vld [vmem:[%s0 + $0x1e0] sm:$0xff]
  %v75 = vld [vmem:[%s0 + $0x1e8] sm:$0xff]
  %v76 = vld [vmem:[%s0 + $0x1f0] sm:$0xff]
  %v77 = vld [vmem:[%s0 + $0x1f8] sm:$0xff]
  %v78 = vld [vmem:[%s1] sm:$0xf]
  %v79 = vld [vmem:[%s1 + $0x4] sm:$0xf]
  %v80 = vld [vmem:[%s1 + $0x8] sm:$0xf]
  %v81 = vld [vmem:[%s1 + $0xc] sm:$0xf]
  %v82 = vld [vmem:[%s1 + $0x10] sm:$0xf]
  %v83 = vld [vmem:[%s1 + $0x14] sm:$0xf]
  %v84 = vld [vmem:[%s1 + $0x18] sm:$0xf]
  %v85 = vld [vmem:[%s1 + $0x1c] sm:$0xf]
  %v86 = vld [vmem:[%s1 + $0x20] sm:$0xf]
  %v87 = vld [vmem:[%s1 + $0x24] sm:$0xf]
  %v88 = vld [vmem:[%s1 + $0x28] sm:$0xf]
  %v89 = vld [vmem:[%s1 + $0x2c] sm:$0xf]
  %v90 = vld [vmem:[%s1 + $0x30] sm:$0xf]
  %v91 = vld [vmem:[%s1 + $0x34] sm:$0xf]
  %v92 = vld [vmem:[%s1 + $0x38] sm:$0xf]
  %v93 = vld [vmem:[%s1 + $0x3c] sm:$0xf]
  %v94 = vld [vmem:[%s1 + $0x40] sm:$0xf]
  %v95 = vld [vmem:[%s1 + $0x44] sm:$0xf]
  %v96 = vld [vmem:[%s1 + $0x48] sm:$0xf]
  %v97 = vld [vmem:[%s1 + $0x4c] sm:$0xf]
  %v98 = vld [vmem:[%s1 + $0x50] sm:$0xf]
  %v99 = vld [vmem:[%s1 + $0x54] sm:$0xf]
  %v100 = vld [vmem:[%s1 + $0x58] sm:$0xf]
  %v101 = vld [vmem:[%s1 + $0x5c] sm:$0xf]
  %v102 = vld [vmem:[%s1 + $0x60] sm:$0xf]
  %v103 = vld [vmem:[%s1 + $0x64] sm:$0xf]
  %v104 = vld [vmem:[%s1 + $0x68] sm:$0xf]
  %v105 = vld [vmem:[%s1 + $0x6c] sm:$0xf]
  %v106 = vld [vmem:[%s1 + $0x70] sm:$0xf]
  %v107 = vld [vmem:[%s1 + $0x74] sm:$0xf]
  %v108 = vld [vmem:[%s1 + $0x78] sm:$0xf]
  %v109 = vld [vmem:[%s1 + $0x7c] sm:$0xf]
  %v110 = vld [vmem:[%s2] sm:$0x1]
  %v112 = vperm.slane %v110, 0
  %v178 = vunpack.c.l.b16 %v14
  %v179 = vunpack.c.h.b16 %v14
  %v180 = vunpack.c.l.b16 %v15
  %v181 = vunpack.c.h.b16 %v15
  %v182 = vunpack.c.l.b16 %v16
  %v183 = vunpack.c.h.b16 %v16
  %v184 = vunpack.c.l.b16 %v17
  %v185 = vunpack.c.h.b16 %v17
  %v186 = vunpack.c.l.b16 %v18
  %v187 = vunpack.c.h.b16 %v18
  %v188 = vunpack.c.l.b16 %v19
  %v189 = vunpack.c.h.b16 %v19
  %v190 = vunpack.c.l.b16 %v20
  %v191 = vunpack.c.h.b16 %v20
  %v192 = vunpack.c.l.b16 %v21
  %v193 = vunpack.c.h.b16 %v21
  %v194 = vunpack.c.l.b16 %v22
  %v195 = vunpack.c.h.b16 %v22
  %v196 = vunpack.c.l.b16 %v23
  %v197 = vunpack.c.h.b16 %v23
  %v198 = vunpack.c.l.b16 %v24
  %v199 = vunpack.c.h.b16 %v24
  %v200 = vunpack.c.l.b16 %v25
  %v201 = vunpack.c.h.b16 %v25
  %v202 = vunpack.c.l.b16 %v26
  %v203 = vunpack.c.h.b16 %v26
  %v204 = vunpack.c.l.b16 %v27
  %v205 = vunpack.c.h.b16 %v27
  %v206 = vunpack.c.l.b16 %v28
  %v207 = vunpack.c.h.b16 %v28
  %v208 = vunpack.c.l.b16 %v29
  %v209 = vunpack.c.h.b16 %v29
  %v210 = vunpack.c.l.b16 %v30
  %v211 = vunpack.c.h.b16 %v30
  %v212 = vunpack.c.l.b16 %v31
  %v213 = vunpack.c.h.b16 %v31
  %v214 = vunpack.c.l.b16 %v32
  %v215 = vunpack.c.h.b16 %v32
  %v216 = vunpack.c.l.b16 %v33
  %v217 = vunpack.c.h.b16 %v33
  %v218 = vunpack.c.l.b16 %v34
  %v219 = vunpack.c.h.b16 %v34
  %v220 = vunpack.c.l.b16 %v35
  %v221 = vunpack.c.h.b16 %v35
  %v222 = vunpack.c.l.b16 %v36
  %v223 = vunpack.c.h.b16 %v36
  %v224 = vunpack.c.l.b16 %v37
  %v225 = vunpack.c.h.b16 %v37
  %v226 = vunpack.c.l.b16 %v38
  %v227 = vunpack.c.h.b16 %v38
  %v228 = vunpack.c.l.b16 %v39
  %v229 = vunpack.c.h.b16 %v39
  %v230 = vunpack.c.l.b16 %v40
  %v231 = vunpack.c.h.b16 %v40
  %v232 = vunpack.c.l.b16 %v41
  %v233 = vunpack.c.h.b16 %v41
  %v234 = vunpack.c.l.b16 %v42
  %v235 = vunpack.c.h.b16 %v42
  %v236 = vunpack.c.l.b16 %v43
  %v237 = vunpack.c.h.b16 %v43
  %v238 = vunpack.c.l.b16 %v44
  %v239 = vunpack.c.h.b16 %v44
  %v240 = vunpack.c.l.b16 %v45
  %v241 = vunpack.c.h.b16 %v45
  %v242 = vunpack.c.l.b16 %v46
  %v243 = vunpack.c.h.b16 %v46
  %v244 = vunpack.c.l.b16 %v47
  %v245 = vunpack.c.h.b16 %v47
  %v246 = vunpack.c.l.b16 %v48
  %v247 = vunpack.c.h.b16 %v48
  %v248 = vunpack.c.l.b16 %v49
  %v249 = vunpack.c.h.b16 %v49
  %v250 = vunpack.c.l.b16 %v50
  %v251 = vunpack.c.h.b16 %v50
  %v252 = vunpack.c.l.b16 %v51
  %v253 = vunpack.c.h.b16 %v51
  %v254 = vunpack.c.l.b16 %v52
  %v255 = vunpack.c.h.b16 %v52
  %v256 = vunpack.c.l.b16 %v53
  %v257 = vunpack.c.h.b16 %v53
  %v258 = vunpack.c.l.b16 %v54
  %v259 = vunpack.c.h.b16 %v54
  %v260 = vunpack.c.l.b16 %v55
  %v261 = vunpack.c.h.b16 %v55
  %v262 = vunpack.c.l.b16 %v56
  %v263 = vunpack.c.h.b16 %v56
  %v264 = vunpack.c.l.b16 %v57
  %v265 = vunpack.c.h.b16 %v57
  %v266 = vunpack.c.l.b16 %v58
  %v267 = vunpack.c.h.b16 %v58
  %v268 = vunpack.c.l.b16 %v59
  %v269 = vunpack.c.h.b16 %v59
  %v270 = vunpack.c.l.b16 %v60
  %v271 = vunpack.c.h.b16 %v60
  %v272 = vunpack.c.l.b16 %v61
  %v273 = vunpack.c.h.b16 %v61
  %v274 = vunpack.c.l.b16 %v62
  %v275 = vunpack.c.h.b16 %v62
  %v276 = vunpack.c.l.b16 %v63
  %v277 = vunpack.c.h.b16 %v63
  %v278 = vunpack.c.l.b16 %v64
  %v279 = vunpack.c.h.b16 %v64
  %v280 = vunpack.c.l.b16 %v65
  %v281 = vunpack.c.h.b16 %v65
  %v282 = vunpack.c.l.b16 %v66
  %v283 = vunpack.c.h.b16 %v66
  %v284 = vunpack.c.l.b16 %v67
  %v285 = vunpack.c.h.b16 %v67
  %v286 = vunpack.c.l.b16 %v68
  %v287 = vunpack.c.h.b16 %v68
  %v288 = vunpack.c.l.b16 %v69
  %v289 = vunpack.c.h.b16 %v69
  %v290 = vunpack.c.l.b16 %v70
  %v291 = vunpack.c.h.b16 %v70
  %v292 = vunpack.c.l.b16 %v71
  %v293 = vunpack.c.h.b16 %v71
  %v294 = vunpack.c.l.b16 %v72
  %v295 = vunpack.c.h.b16 %v72
  %v296 = vunpack.c.l.b16 %v73
  %v297 = vunpack.c.h.b16 %v73
  %v298 = vunpack.c.l.b16 %v74
  %v299 = vunpack.c.h.b16 %v74
  %v300 = vunpack.c.l.b16 %v75
  %v301 = vunpack.c.h.b16 %v75
  %v302 = vunpack.c.l.b16 %v76
  %v303 = vunpack.c.h.b16 %v76
  %v304 = vunpack.c.l.b16 %v77
  %v305 = vunpack.c.h.b16 %v77
  %v306 = vpack.c.b16 %v180, %v178
  %v307 = vpack.c.b16 %v181, %v179
  %v308 = vpack.c.b16 %v184, %v182
  %v309 = vpack.c.b16 %v185, %v183
  %v310 = vpack.c.b16 %v188, %v186
  %v311 = vpack.c.b16 %v189, %v187
  %v312 = vpack.c.b16 %v192, %v190
  %v313 = vpack.c.b16 %v193, %v191
  %v314 = vpack.c.b16 %v196, %v194
  %v315 = vpack.c.b16 %v197, %v195
  %v316 = vpack.c.b16 %v200, %v198
  %v317 = vpack.c.b16 %v201, %v199
  %v318 = vpack.c.b16 %v204, %v202
  %v319 = vpack.c.b16 %v205, %v203
  %v320 = vpack.c.b16 %v208, %v206
  %v321 = vpack.c.b16 %v209, %v207
  %v322 = vpack.c.b16 %v212, %v210
  %v323 = vpack.c.b16 %v213, %v211
  %v324 = vpack.c.b16 %v216, %v214
  %v325 = vpack.c.b16 %v217, %v215
  %v326 = vpack.c.b16 %v220, %v218
  %v327 = vpack.c.b16 %v221, %v219
  %v328 = vpack.c.b16 %v224, %v222
  %v329 = vpack.c.b16 %v225, %v223
  %v330 = vpack.c.b16 %v228, %v226
  %v331 = vpack.c.b16 %v229, %v227
  %v332 = vpack.c.b16 %v232, %v230
  %v333 = vpack.c.b16 %v233, %v231
  %v334 = vpack.c.b16 %v236, %v234
  %v335 = vpack.c.b16 %v237, %v235
  %v336 = vpack.c.b16 %v240, %v238
  %v337 = vpack.c.b16 %v241, %v239
  %v338 = vpack.c.b16 %v244, %v242
  %v339 = vpack.c.b16 %v245, %v243
  %v340 = vpack.c.b16 %v248, %v246
  %v341 = vpack.c.b16 %v249, %v247
  %v342 = vpack.c.b16 %v252, %v250
  %v343 = vpack.c.b16 %v253, %v251
  %v344 = vpack.c.b16 %v256, %v254
  %v345 = vpack.c.b16 %v257, %v255
  %v346 = vpack.c.b16 %v260, %v258
  %v347 = vpack.c.b16 %v261, %v259
  %v348 = vpack.c.b16 %v264, %v262
  %v349 = vpack.c.b16 %v265, %v263
  %v350 = vpack.c.b16 %v268, %v266
  %v351 = vpack.c.b16 %v269, %v267
  %v352 = vpack.c.b16 %v272, %v270
  %v353 = vpack.c.b16 %v273, %v271
  %v354 = vpack.c.b16 %v276, %v274
  %v355 = vpack.c.b16 %v277, %v275
  %v356 = vpack.c.b16 %v280, %v278
  %v357 = vpack.c.b16 %v281, %v279
  %v358 = vpack.c.b16 %v284, %v282
  %v359 = vpack.c.b16 %v285, %v283
  %v360 = vpack.c.b16 %v288, %v286
  %v361 = vpack.c.b16 %v289, %v287
  %v362 = vpack.c.b16 %v292, %v290
  %v363 = vpack.c.b16 %v293, %v291
  %v364 = vpack.c.b16 %v296, %v294
  %v365 = vpack.c.b16 %v297, %v295
  %v366 = vpack.c.b16 %v300, %v298
  %v367 = vpack.c.b16 %v301, %v299
  %v368 = vpack.c.b16 %v304, %v302
  %v369 = vpack.c.b16 %v305, %v303
  %v466 = vunpack.c.l.b16 %v78
  %v467 = vunpack.c.l.b16 %v79
  %v468 = vunpack.c.l.b16 %v80
  %v469 = vunpack.c.l.b16 %v81
  %v470 = vunpack.c.l.b16 %v82
  %v471 = vunpack.c.l.b16 %v83
  %v472 = vunpack.c.l.b16 %v84
  %v473 = vunpack.c.l.b16 %v85
  %v474 = vunpack.c.l.b16 %v86
  %v475 = vunpack.c.l.b16 %v87
  %v476 = vunpack.c.l.b16 %v88
  %v477 = vunpack.c.l.b16 %v89
  %v478 = vunpack.c.l.b16 %v90
  %v479 = vunpack.c.l.b16 %v91
  %v480 = vunpack.c.l.b16 %v92
  %v481 = vunpack.c.l.b16 %v93
  %v482 = vunpack.c.l.b16 %v94
  %v483 = vunpack.c.l.b16 %v95
  %v484 = vunpack.c.l.b16 %v96
  %v485 = vunpack.c.l.b16 %v97
  %v486 = vunpack.c.l.b16 %v98
  %v487 = vunpack.c.l.b16 %v99
  %v488 = vunpack.c.l.b16 %v100
  %v489 = vunpack.c.l.b16 %v101
  %v490 = vunpack.c.l.b16 %v102
  %v491 = vunpack.c.l.b16 %v103
  %v492 = vunpack.c.l.b16 %v104
  %v493 = vunpack.c.l.b16 %v105
  %v494 = vunpack.c.l.b16 %v106
  %v495 = vunpack.c.l.b16 %v107
  %v496 = vunpack.c.l.b16 %v108
  %v497 = vunpack.c.l.b16 %v109
  %v498 = vpack.c.b16 %v467, %v466
  %v499 = vpack.c.b16 %v469, %v468
  %v500 = vpack.c.b16 %v471, %v470
  %v501 = vpack.c.b16 %v473, %v472
  %v502 = vpack.c.b16 %v475, %v474
  %v503 = vpack.c.b16 %v477, %v476
  %v504 = vpack.c.b16 %v479, %v478
  %v505 = vpack.c.b16 %v481, %v480
  %v506 = vpack.c.b16 %v483, %v482
  %v507 = vpack.c.b16 %v485, %v484
  %v508 = vpack.c.b16 %v487, %v486
  %v509 = vpack.c.b16 %v489, %v488
  %v510 = vpack.c.b16 %v491, %v490
  %v511 = vpack.c.b16 %v493, %v492
  %v512 = vpack.c.b16 %v495, %v494
  %v513 = vpack.c.b16 %v497, %v496
  %530 = vmatpush.bf16.msra.mxu0 %v505
  %531 = vmatpush.bf16.msra.mxu0 %v504
  %532 = vmatpush.bf16.msra.mxu0 %v503
  %533 = vmatpush.bf16.msra.mxu0 %v502
  %534 = vmatpush.bf16.msra.mxu0 %v501
  %535 = vmatpush.bf16.msra.mxu0 %v500
  %536 = vmatpush.bf16.msra.mxu0 %v499
  %537 = vmatpush.bf16.msra.mxu0 %v498
  %538 = vmatmul.bf16.gmra.mxu0 %v306
  %v539 = vpop.f32.mrf.mxu0
  %v540 = vadd.f32 %v112, %v539
  %v541 = vpop.f32.mrf.mxu0
  %v542 = vadd.f32 %v112, %v541
  %543 = vmatmul.bf16.gmra.mxu0 %v308
  %v544 = vpop.f32.mrf.mxu0
  %v545 = vadd.f32 %v112, %v544
  %v546 = vpop.f32.mrf.mxu0
  %v547 = vadd.f32 %v112, %v546
  %548 = vmatmul.bf16.gmra.mxu0 %v310
  %v549 = vpop.f32.mrf.mxu0
  %v550 = vadd.f32 %v112, %v549
  %v551 = vpop.f32.mrf.mxu0
  %v552 = vadd.f32 %v112, %v551
  %553 = vmatmul.bf16.gmra.mxu0 %v312
  %v554 = vpop.f32.mrf.mxu0
  %v555 = vadd.f32 %v112, %v554
  %v556 = vpop.f32.mrf.mxu0
  %v557 = vadd.f32 %v112, %v556
  %558 = vmatmul.bf16.gmra.mxu0 %v314
  %v559 = vpop.f32.mrf.mxu0
  %v560 = vadd.f32 %v112, %v559
  %v561 = vpop.f32.mrf.mxu0
  %v562 = vadd.f32 %v112, %v561
  %563 = vmatmul.bf16.gmra.mxu0 %v316
  %v564 = vpop.f32.mrf.mxu0
  %v565 = vadd.f32 %v112, %v564
  %v566 = vpop.f32.mrf.mxu0
  %v567 = vadd.f32 %v112, %v566
  %568 = vmatmul.bf16.gmra.mxu0 %v318
  %v569 = vpop.f32.mrf.mxu0
  %v570 = vadd.f32 %v112, %v569
  %v571 = vpop.f32.mrf.mxu0
  %v572 = vadd.f32 %v112, %v571
  %573 = vmatmul.bf16.gmra.mxu0 %v320
  %v574 = vpop.f32.mrf.mxu0
  %v575 = vadd.f32 %v112, %v574
  %v576 = vpop.f32.mrf.mxu0
  %v577 = vadd.f32 %v112, %v576
  %578 = vmatmul.bf16.gmra.mxu0 %v322
  %v579 = vpop.f32.mrf.mxu0
  %v580 = vadd.f32 %v112, %v579
  %v581 = vpop.f32.mrf.mxu0
  %v582 = vadd.f32 %v112, %v581
  %583 = vmatmul.bf16.gmra.mxu0 %v324
  %v584 = vpop.f32.mrf.mxu0
  %v585 = vadd.f32 %v112, %v584
  %v586 = vpop.f32.mrf.mxu0
  %v587 = vadd.f32 %v112, %v586
  %588 = vmatmul.bf16.gmra.mxu0 %v326
  %v589 = vpop.f32.mrf.mxu0
  %v590 = vadd.f32 %v112, %v589
  %v591 = vpop.f32.mrf.mxu0
  %v592 = vadd.f32 %v112, %v591
  %593 = vmatmul.bf16.gmra.mxu0 %v328
  %v594 = vpop.f32.mrf.mxu0
  %v595 = vadd.f32 %v112, %v594
  %v596 = vpop.f32.mrf.mxu0
  %v597 = vadd.f32 %v112, %v596
  %598 = vmatmul.bf16.gmra.mxu0 %v330
  %v599 = vpop.f32.mrf.mxu0
  %v600 = vadd.f32 %v112, %v599
  %v601 = vpop.f32.mrf.mxu0
  %v602 = vadd.f32 %v112, %v601
  %603 = vmatmul.bf16.gmra.mxu0 %v332
  %v604 = vpop.f32.mrf.mxu0
  %v605 = vadd.f32 %v112, %v604
  %v606 = vpop.f32.mrf.mxu0
  %v607 = vadd.f32 %v112, %v606
  %608 = vmatmul.bf16.gmra.mxu0 %v334
  %v609 = vpop.f32.mrf.mxu0
  %v610 = vadd.f32 %v112, %v609
  %v611 = vpop.f32.mrf.mxu0
  %v612 = vadd.f32 %v112, %v611
  %613 = vmatmul.bf16.gmra.mxu0 %v336
  %v614 = vpop.f32.mrf.mxu0
  %v615 = vadd.f32 %v112, %v614
  %v616 = vpop.f32.mrf.mxu0
  %v617 = vadd.f32 %v112, %v616
  %618 = vmatmul.bf16.gmra.mxu0 %v338
  %v619 = vpop.f32.mrf.mxu0
  %v620 = vadd.f32 %v112, %v619
  %v621 = vpop.f32.mrf.mxu0
  %v622 = vadd.f32 %v112, %v621
  %623 = vmatmul.bf16.gmra.mxu0 %v340
  %v624 = vpop.f32.mrf.mxu0
  %v625 = vadd.f32 %v112, %v624
  %v626 = vpop.f32.mrf.mxu0
  %v627 = vadd.f32 %v112, %v626
  %628 = vmatmul.bf16.gmra.mxu0 %v342
  %v629 = vpop.f32.mrf.mxu0
  %v630 = vadd.f32 %v112, %v629
  %v631 = vpop.f32.mrf.mxu0
  %v632 = vadd.f32 %v112, %v631
  %633 = vmatmul.bf16.gmra.mxu0 %v344
  %v634 = vpop.f32.mrf.mxu0
  %v635 = vadd.f32 %v112, %v634
  %v636 = vpop.f32.mrf.mxu0
  %v637 = vadd.f32 %v112, %v636
  %638 = vmatmul.bf16.gmra.mxu0 %v346
  %v639 = vpop.f32.mrf.mxu0
  %v640 = vadd.f32 %v112, %v639
  %v641 = vpop.f32.mrf.mxu0
  %v642 = vadd.f32 %v112, %v641
  %643 = vmatmul.bf16.gmra.mxu0 %v348
  %v644 = vpop.f32.mrf.mxu0
  %v645 = vadd.f32 %v112, %v644
  %v646 = vpop.f32.mrf.mxu0
  %v647 = vadd.f32 %v112, %v646
  %648 = vmatmul.bf16.gmra.mxu0 %v350
  %v649 = vpop.f32.mrf.mxu0
  %v650 = vadd.f32 %v112, %v649
  %v651 = vpop.f32.mrf.mxu0
  %v652 = vadd.f32 %v112, %v651
  %653 = vmatmul.bf16.gmra.mxu0 %v352
  %v654 = vpop.f32.mrf.mxu0
  %v655 = vadd.f32 %v112, %v654
  %v656 = vpop.f32.mrf.mxu0
  %v657 = vadd.f32 %v112, %v656
  %658 = vmatmul.bf16.gmra.mxu0 %v354
  %v659 = vpop.f32.mrf.mxu0
  %v660 = vadd.f32 %v112, %v659
  %v661 = vpop.f32.mrf.mxu0
  %v662 = vadd.f32 %v112, %v661
  %663 = vmatmul.bf16.gmra.mxu0 %v356
  %v664 = vpop.f32.mrf.mxu0
  %v665 = vadd.f32 %v112, %v664
  %v666 = vpop.f32.mrf.mxu0
  %v667 = vadd.f32 %v112, %v666
  %668 = vmatmul.bf16.gmra.mxu0 %v358
  %v669 = vpop.f32.mrf.mxu0
  %v670 = vadd.f32 %v112, %v669
  %v671 = vpop.f32.mrf.mxu0
  %v672 = vadd.f32 %v112, %v671
  %673 = vmatmul.bf16.gmra.mxu0 %v360
  %v674 = vpop.f32.mrf.mxu0
  %v675 = vadd.f32 %v112, %v674
  %v676 = vpop.f32.mrf.mxu0
  %v677 = vadd.f32 %v112, %v676
  %678 = vmatmul.bf16.gmra.mxu0 %v362
  %v679 = vpop.f32.mrf.mxu0
  %v680 = vadd.f32 %v112, %v679
  %v681 = vpop.f32.mrf.mxu0
  %v682 = vadd.f32 %v112, %v681
  %683 = vmatmul.bf16.gmra.mxu0 %v364
  %v684 = vpop.f32.mrf.mxu0
  %v685 = vadd.f32 %v112, %v684
  %v686 = vpop.f32.mrf.mxu0
  %v687 = vadd.f32 %v112, %v686
  %688 = vmatmul.bf16.gmra.mxu0 %v366
  %v689 = vpop.f32.mrf.mxu0
  %v690 = vadd.f32 %v112, %v689
  %v691 = vpop.f32.mrf.mxu0
  %v692 = vadd.f32 %v112, %v691
  %693 = vmatmul.bf16.gmra.mxu0 %v368
  %v694 = vpop.f32.mrf.mxu0
  %v695 = vadd.f32 %v112, %v694
  %v696 = vpop.f32.mrf.mxu0
  %v697 = vadd.f32 %v112, %v696
  %698 = vdwg.mxu0
  %699 = vmatpush.bf16.msra.mxu0 %v513
  %700 = vmatpush.bf16.msra.mxu0 %v512
  %701 = vmatpush.bf16.msra.mxu0 %v511
  %702 = vmatpush.bf16.msra.mxu0 %v510
  %703 = vmatpush.bf16.msra.mxu0 %v509
  %704 = vmatpush.bf16.msra.mxu0 %v508
  %705 = vmatpush.bf16.msra.mxu0 %v507
  %706 = vmatpush.bf16.msra.mxu0 %v506
  %707 = vmatmul.bf16.gmra.mxu0 %v307
  %v708 = vpop.f32.mrf.mxu0
  %v709 = vadd.f32 %v540, %v708
  %v710 = vpop.f32.mrf.mxu0
  %v711 = vadd.f32 %v542, %v710
  %712 = vmatmul.bf16.gmra.mxu0 %v309
  %v713 = vpop.f32.mrf.mxu0
  %v714 = vadd.f32 %v545, %v713
  %v715 = vpop.f32.mrf.mxu0
  %v716 = vadd.f32 %v547, %v715
  %717 = vmatmul.bf16.gmra.mxu0 %v311
  %v718 = vpop.f32.mrf.mxu0
  %v719 = vadd.f32 %v550, %v718
  %v720 = vpop.f32.mrf.mxu0
  %v721 = vadd.f32 %v552, %v720
  %722 = vmatmul.bf16.gmra.mxu0 %v313
  %v723 = vpop.f32.mrf.mxu0
  %v724 = vadd.f32 %v555, %v723
  %v725 = vpop.f32.mrf.mxu0
  %v726 = vadd.f32 %v557, %v725
  %727 = vmatmul.bf16.gmra.mxu0 %v315
  %v728 = vpop.f32.mrf.mxu0
  %v729 = vadd.f32 %v560, %v728
  %v730 = vpop.f32.mrf.mxu0
  %v731 = vadd.f32 %v562, %v730
  %732 = vmatmul.bf16.gmra.mxu0 %v317
  %v733 = vpop.f32.mrf.mxu0
  %v734 = vadd.f32 %v565, %v733
  %v735 = vpop.f32.mrf.mxu0
  %v736 = vadd.f32 %v567, %v735
  %737 = vmatmul.bf16.gmra.mxu0 %v319
  %v738 = vpop.f32.mrf.mxu0
  %v739 = vadd.f32 %v570, %v738
  %v740 = vpop.f32.mrf.mxu0
  %v741 = vadd.f32 %v572, %v740
  %742 = vmatmul.bf16.gmra.mxu0 %v321
  %v743 = vpop.f32.mrf.mxu0
  %v744 = vadd.f32 %v575, %v743
  %v745 = vpop.f32.mrf.mxu0
  %v746 = vadd.f32 %v577, %v745
  %747 = vmatmul.bf16.gmra.mxu0 %v323
  %v748 = vpop.f32.mrf.mxu0
  %v749 = vadd.f32 %v580, %v748
  %v750 = vpop.f32.mrf.mxu0
  %v751 = vadd.f32 %v582, %v750
  %752 = vmatmul.bf16.gmra.mxu0 %v325
  %v753 = vpop.f32.mrf.mxu0
  %v754 = vadd.f32 %v585, %v753
  %v755 = vpop.f32.mrf.mxu0
  %v756 = vadd.f32 %v587, %v755
  %757 = vmatmul.bf16.gmra.mxu0 %v327
  %v758 = vpop.f32.mrf.mxu0
  %v759 = vadd.f32 %v590, %v758
  %v760 = vpop.f32.mrf.mxu0
  %v761 = vadd.f32 %v592, %v760
  %762 = vmatmul.bf16.gmra.mxu0 %v329
  %v763 = vpop.f32.mrf.mxu0
  %v764 = vadd.f32 %v595, %v763
  %v765 = vpop.f32.mrf.mxu0
  %v766 = vadd.f32 %v597, %v765
  %767 = vmatmul.bf16.gmra.mxu0 %v331
  %v768 = vpop.f32.mrf.mxu0
  %v769 = vadd.f32 %v600, %v768
  %v770 = vpop.f32.mrf.mxu0
  %v771 = vadd.f32 %v602, %v770
  %772 = vmatmul.bf16.gmra.mxu0 %v333
  %v773 = vpop.f32.mrf.mxu0
  %v774 = vadd.f32 %v605, %v773
  %v775 = vpop.f32.mrf.mxu0
  %v776 = vadd.f32 %v607, %v775
  %777 = vmatmul.bf16.gmra.mxu0 %v335
  %v778 = vpop.f32.mrf.mxu0
  %v779 = vadd.f32 %v610, %v778
  %v780 = vpop.f32.mrf.mxu0
  %v781 = vadd.f32 %v612, %v780
  %782 = vmatmul.bf16.gmra.mxu0 %v337
  %v783 = vpop.f32.mrf.mxu0
  %v784 = vadd.f32 %v615, %v783
  %v785 = vpop.f32.mrf.mxu0
  %v786 = vadd.f32 %v617, %v785
  %787 = vmatmul.bf16.gmra.mxu0 %v339
  %v788 = vpop.f32.mrf.mxu0
  %v789 = vadd.f32 %v620, %v788
  %v790 = vpop.f32.mrf.mxu0
  %v791 = vadd.f32 %v622, %v790
  %792 = vmatmul.bf16.gmra.mxu0 %v341
  %v793 = vpop.f32.mrf.mxu0
  %v794 = vadd.f32 %v625, %v793
  %v795 = vpop.f32.mrf.mxu0
  %v796 = vadd.f32 %v627, %v795
  %797 = vmatmul.bf16.gmra.mxu0 %v343
  %v798 = vpop.f32.mrf.mxu0
  %v799 = vadd.f32 %v630, %v798
  %v800 = vpop.f32.mrf.mxu0
  %v801 = vadd.f32 %v632, %v800
  %802 = vmatmul.bf16.gmra.mxu0 %v345
  %v803 = vpop.f32.mrf.mxu0
  %v804 = vadd.f32 %v635, %v803
  %v805 = vpop.f32.mrf.mxu0
  %v806 = vadd.f32 %v637, %v805
  %807 = vmatmul.bf16.gmra.mxu0 %v347
  %v808 = vpop.f32.mrf.mxu0
  %v809 = vadd.f32 %v640, %v808
  %v810 = vpop.f32.mrf.mxu0
  %v811 = vadd.f32 %v642, %v810
  %812 = vmatmul.bf16.gmra.mxu0 %v349
  %v813 = vpop.f32.mrf.mxu0
  %v814 = vadd.f32 %v645, %v813
  %v815 = vpop.f32.mrf.mxu0
  %v816 = vadd.f32 %v647, %v815
  %817 = vmatmul.bf16.gmra.mxu0 %v351
  %v818 = vpop.f32.mrf.mxu0
  %v819 = vadd.f32 %v650, %v818
  %v820 = vpop.f32.mrf.mxu0
  %v821 = vadd.f32 %v652, %v820
  %822 = vmatmul.bf16.gmra.mxu0 %v353
  %v823 = vpop.f32.mrf.mxu0
  %v824 = vadd.f32 %v655, %v823
  %v825 = vpop.f32.mrf.mxu0
  %v826 = vadd.f32 %v657, %v825
  %827 = vmatmul.bf16.gmra.mxu0 %v355
  %v828 = vpop.f32.mrf.mxu0
  %v829 = vadd.f32 %v660, %v828
  %v830 = vpop.f32.mrf.mxu0
  %v831 = vadd.f32 %v662, %v830
  %832 = vmatmul.bf16.gmra.mxu0 %v357
  %v833 = vpop.f32.mrf.mxu0
  %v834 = vadd.f32 %v665, %v833
  %v835 = vpop.f32.mrf.mxu0
  %v836 = vadd.f32 %v667, %v835
  %837 = vmatmul.bf16.gmra.mxu0 %v359
  %v838 = vpop.f32.mrf.mxu0
  %v839 = vadd.f32 %v670, %v838
  %v840 = vpop.f32.mrf.mxu0
  %v841 = vadd.f32 %v672, %v840
  %842 = vmatmul.bf16.gmra.mxu0 %v361
  %v843 = vpop.f32.mrf.mxu0
  %v844 = vadd.f32 %v675, %v843
  %v845 = vpop.f32.mrf.mxu0
  %v846 = vadd.f32 %v677, %v845
  %847 = vmatmul.bf16.gmra.mxu0 %v363
  %v848 = vpop.f32.mrf.mxu0
  %v849 = vadd.f32 %v680, %v848
  %v850 = vpop.f32.mrf.mxu0
  %v851 = vadd.f32 %v682, %v850
  %852 = vmatmul.bf16.gmra.mxu0 %v365
  %v853 = vpop.f32.mrf.mxu0
  %v854 = vadd.f32 %v685, %v853
  %v855 = vpop.f32.mrf.mxu0
  %v856 = vadd.f32 %v687, %v855
  %857 = vmatmul.bf16.gmra.mxu0 %v367
  %v858 = vpop.f32.mrf.mxu0
  %v859 = vadd.f32 %v690, %v858
  %v860 = vpop.f32.mrf.mxu0
  %v861 = vadd.f32 %v692, %v860
  %862 = vmatmul.bf16.gmra.mxu0 %v369
  %v863 = vpop.f32.mrf.mxu0
  %v864 = vadd.f32 %v695, %v863
  %v865 = vpop.f32.mrf.mxu0
  %v866 = vadd.f32 %v697, %v865
  %867 = vdwg.mxu0
  %v868 = vmax.f32 %v709, 0.0
  %v869 = vmax.f32 %v711, 0.0
  %v870 = vmax.f32 %v714, 0.0
  %v871 = vmax.f32 %v716, 0.0
  %v872 = vmax.f32 %v719, 0.0
  %v873 = vmax.f32 %v721, 0.0
  %v874 = vmax.f32 %v724, 0.0
  %v875 = vmax.f32 %v726, 0.0
  %v876 = vmax.f32 %v729, 0.0
  %v877 = vmax.f32 %v731, 0.0
  %v878 = vmax.f32 %v734, 0.0
  %v879 = vmax.f32 %v736, 0.0
  %v880 = vmax.f32 %v739, 0.0
  %v881 = vmax.f32 %v741, 0.0
  %v882 = vmax.f32 %v744, 0.0
  %v883 = vmax.f32 %v746, 0.0
  %v884 = vmax.f32 %v749, 0.0
  %v885 = vmax.f32 %v751, 0.0
  %v886 = vmax.f32 %v754, 0.0
  %v887 = vmax.f32 %v756, 0.0
  %v888 = vmax.f32 %v759, 0.0
  %v889 = vmax.f32 %v761, 0.0
  %v890 = vmax.f32 %v764, 0.0
  %v891 = vmax.f32 %v766, 0.0
  %v892 = vmax.f32 %v769, 0.0
  %v893 = vmax.f32 %v771, 0.0
  %v894 = vmax.f32 %v774, 0.0
  %v895 = vmax.f32 %v776, 0.0
  %v896 = vmax.f32 %v779, 0.0
  %v897 = vmax.f32 %v781, 0.0
  %v898 = vmax.f32 %v784, 0.0
  %v899 = vmax.f32 %v786, 0.0
  %v900 = vmax.f32 %v789, 0.0
  %v901 = vmax.f32 %v791, 0.0
  %v902 = vmax.f32 %v794, 0.0
  %v903 = vmax.f32 %v796, 0.0
  %v904 = vmax.f32 %v799, 0.0
  %v905 = vmax.f32 %v801, 0.0
  %v906 = vmax.f32 %v804, 0.0
  %v907 = vmax.f32 %v806, 0.0
  %v908 = vmax.f32 %v809, 0.0
  %v909 = vmax.f32 %v811, 0.0
  %v910 = vmax.f32 %v814, 0.0
  %v911 = vmax.f32 %v816, 0.0
  %v912 = vmax.f32 %v819, 0.0
  %v913 = vmax.f32 %v821, 0.0
  %v914 = vmax.f32 %v824, 0.0
  %v915 = vmax.f32 %v826, 0.0
  %v916 = vmax.f32 %v829, 0.0
  %v917 = vmax.f32 %v831, 0.0
  %v918 = vmax.f32 %v834, 0.0
  %v919 = vmax.f32 %v836, 0.0
  %v920 = vmax.f32 %v839, 0.0
  %v921 = vmax.f32 %v841, 0.0
  %v922 = vmax.f32 %v844, 0.0
  %v923 = vmax.f32 %v846, 0.0
  %v924 = vmax.f32 %v849, 0.0
  %v925 = vmax.f32 %v851, 0.0
  %v926 = vmax.f32 %v854, 0.0
  %v927 = vmax.f32 %v856, 0.0
  %v928 = vmax.f32 %v859, 0.0
  %v929 = vmax.f32 %v861, 0.0
  %v930 = vmax.f32 %v864, 0.0
  %v931 = vmax.f32 %v866, 0.0
  %v932 = vpack.c.bf16 %v868, %v868
  %v933 = vpack.c.bf16 %v869, %v869
  %v934 = vpack.c.bf16 %v870, %v870
  %v935 = vpack.c.bf16 %v871, %v871
  %v936 = vpack.c.bf16 %v872, %v872
  %v937 = vpack.c.bf16 %v873, %v873
  %v938 = vpack.c.bf16 %v874, %v874
  %v939 = vpack.c.bf16 %v875, %v875
  %v940 = vpack.c.bf16 %v876, %v876
  %v941 = vpack.c.bf16 %v877, %v877
  %v942 = vpack.c.bf16 %v878, %v878
  %v943 = vpack.c.bf16 %v879, %v879
  %v944 = vpack.c.bf16 %v880, %v880
  %v945 = vpack.c.bf16 %v881, %v881
  %v946 = vpack.c.bf16 %v882, %v882
  %v947 = vpack.c.bf16 %v883, %v883
  %v948 = vpack.c.bf16 %v884, %v884
  %v949 = vpack.c.bf16 %v885, %v885
  %v950 = vpack.c.bf16 %v886, %v886
  %v951 = vpack.c.bf16 %v887, %v887
  %v952 = vpack.c.bf16 %v888, %v888
  %v953 = vpack.c.bf16 %v889, %v889
  %v954 = vpack.c.bf16 %v890, %v890
  %v955 = vpack.c.bf16 %v891, %v891
  %v956 = vpack.c.bf16 %v892, %v892
  %v957 = vpack.c.bf16 %v893, %v893
  %v958 = vpack.c.bf16 %v894, %v894
  %v959 = vpack.c.bf16 %v895, %v895
  %v960 = vpack.c.bf16 %v896, %v896
  %v961 = vpack.c.bf16 %v897, %v897
  %v962 = vpack.c.bf16 %v898, %v898
  %v963 = vpack.c.bf16 %v899, %v899
  %v964 = vpack.c.bf16 %v900, %v900
  %v965 = vpack.c.bf16 %v901, %v901
  %v966 = vpack.c.bf16 %v902, %v902
  %v967 = vpack.c.bf16 %v903, %v903
  %v968 = vpack.c.bf16 %v904, %v904
  %v969 = vpack.c.bf16 %v905, %v905
  %v970 = vpack.c.bf16 %v906, %v906
  %v971 = vpack.c.bf16 %v907, %v907
  %v972 = vpack.c.bf16 %v908, %v908
  %v973 = vpack.c.bf16 %v909, %v909
  %v974 = vpack.c.bf16 %v910, %v910
  %v975 = vpack.c.bf16 %v911, %v911
  %v976 = vpack.c.bf16 %v912, %v912
  %v977 = vpack.c.bf16 %v913, %v913
  %v978 = vpack.c.bf16 %v914, %v914
  %v979 = vpack.c.bf16 %v915, %v915
  %v980 = vpack.c.bf16 %v916, %v916
  %v981 = vpack.c.bf16 %v917, %v917
  %v982 = vpack.c.bf16 %v918, %v918
  %v983 = vpack.c.bf16 %v919, %v919
  %v984 = vpack.c.bf16 %v920, %v920
  %v985 = vpack.c.bf16 %v921, %v921
  %v986 = vpack.c.bf16 %v922, %v922
  %v987 = vpack.c.bf16 %v923, %v923
  %v988 = vpack.c.bf16 %v924, %v924
  %v989 = vpack.c.bf16 %v925, %v925
  %v990 = vpack.c.bf16 %v926, %v926
  %v991 = vpack.c.bf16 %v927, %v927
  %v992 = vpack.c.bf16 %v928, %v928
  %v993 = vpack.c.bf16 %v929, %v929
  %v994 = vpack.c.bf16 %v930, %v930
  %v995 = vpack.c.bf16 %v931, %v931
  %996 = vst [vmem:[%s3] sm:$0xf] %v932
  %997 = vst [vmem:[%s3 + $0x4] sm:$0xf] %v933
  %998 = vst [vmem:[%s3 + $0x8] sm:$0xf] %v934
  %999 = vst [vmem:[%s3 + $0xc] sm:$0xf] %v935
  %1000 = vst [vmem:[%s3 + $0x10] sm:$0xf] %v936
  %1001 = vst [vmem:[%s3 + $0x14] sm:$0xf] %v937
  %1002 = vst [vmem:[%s3 + $0x18] sm:$0xf] %v938
  %1003 = vst [vmem:[%s3 + $0x1c] sm:$0xf] %v939
  %1004 = vst [vmem:[%s3 + $0x20] sm:$0xf] %v940
  %1005 = vst [vmem:[%s3 + $0x24] sm:$0xf] %v941
  %1006 = vst [vmem:[%s3 + $0x28] sm:$0xf] %v942
  %1007 = vst [vmem:[%s3 + $0x2c] sm:$0xf] %v943
  %1008 = vst [vmem:[%s3 + $0x30] sm:$0xf] %v944
  %1009 = vst [vmem:[%s3 + $0x34] sm:$0xf] %v945
  %1010 = vst [vmem:[%s3 + $0x38] sm:$0xf] %v946
  %1011 = vst [vmem:[%s3 + $0x3c] sm:$0xf] %v947
  %1012 = vst [vmem:[%s3 + $0x40] sm:$0xf] %v948
  %1013 = vst [vmem:[%s3 + $0x44] sm:$0xf] %v949
  %1014 = vst [vmem:[%s3 + $0x48] sm:$0xf] %v950
  %1015 = vst [vmem:[%s3 + $0x4c] sm:$0xf] %v951
  %1016 = vst [vmem:[%s3 + $0x50] sm:$0xf] %v952
  %1017 = vst [vmem:[%s3 + $0x54] sm:$0xf] %v953
  %1018 = vst [vmem:[%s3 + $0x58] sm:$0xf] %v954
  %1019 = vst [vmem:[%s3 + $0x5c] sm:$0xf] %v955
  %1020 = vst [vmem:[%s3 + $0x60] sm:$0xf] %v956
  %1021 = vst [vmem:[%s3 + $0x64] sm:$0xf] %v957
  %1022 = vst [vmem:[%s3 + $0x68] sm:$0xf] %v958
  %1023 = vst [vmem:[%s3 + $0x6c] sm:$0xf] %v959
  %1024 = vst [vmem:[%s3 + $0x70] sm:$0xf] %v960
  %1025 = vst [vmem:[%s3 + $0x74] sm:$0xf] %v961
  %1026 = vst [vmem:[%s3 + $0x78] sm:$0xf] %v962
  %1027 = vst [vmem:[%s3 + $0x7c] sm:$0xf] %v963
  %1028 = vst [vmem:[%s3 + $0x80] sm:$0xf] %v964
  %1029 = vst [vmem:[%s3 + $0x84] sm:$0xf] %v965
  %1030 = vst [vmem:[%s3 + $0x88] sm:$0xf] %v966
  %1031 = vst [vmem:[%s3 + $0x8c] sm:$0xf] %v967
  %1032 = vst [vmem:[%s3 + $0x90] sm:$0xf] %v968
  %1033 = vst [vmem:[%s3 + $0x94] sm:$0xf] %v969
  %1034 = vst [vmem:[%s3 + $0x98] sm:$0xf] %v970
  %1035 = vst [vmem:[%s3 + $0x9c] sm:$0xf] %v971
  %1036 = vst [vmem:[%s3 + $0xa0] sm:$0xf] %v972
  %1037 = vst [vmem:[%s3 + $0xa4] sm:$0xf] %v973
  %1038 = vst [vmem:[%s3 + $0xa8] sm:$0xf] %v974
  %1039 = vst [vmem:[%s3 + $0xac] sm:$0xf] %v975
  %1040 = vst [vmem:[%s3 + $0xb0] sm:$0xf] %v976
  %1041 = vst [vmem:[%s3 + $0xb4] sm:$0xf] %v977
  %1042 = vst [vmem:[%s3 + $0xb8] sm:$0xf] %v978
  %1043 = vst [vmem:[%s3 + $0xbc] sm:$0xf] %v979
  %1044 = vst [vmem:[%s3 + $0xc0] sm:$0xf] %v980
  %1045 = vst [vmem:[%s3 + $0xc4] sm:$0xf] %v981
  %1046 = vst [vmem:[%s3 + $0xc8] sm:$0xf] %v982
  %1047 = vst [vmem:[%s3 + $0xcc] sm:$0xf] %v983
  %1048 = vst [vmem:[%s3 + $0xd0] sm:$0xf] %v984
  %1049 = vst [vmem:[%s3 + $0xd4] sm:$0xf] %v985
  %1050 = vst [vmem:[%s3 + $0xd8] sm:$0xf] %v986
  %1051 = vst [vmem:[%s3 + $0xdc] sm:$0xf] %v987
  %1052 = vst [vmem:[%s3 + $0xe0] sm:$0xf] %v988
  %1053 = vst [vmem:[%s3 + $0xe4] sm:$0xf] %v989
  %1054 = vst [vmem:[%s3 + $0xe8] sm:$0xf] %v990
  %1055 = vst [vmem:[%s3 + $0xec] sm:$0xf] %v991
  %1056 = vst [vmem:[%s3 + $0xf0] sm:$0xf] %v992
  %1057 = vst [vmem:[%s3 + $0xf4] sm:$0xf] %v993
  %1058 = vst [vmem:[%s3 + $0xf8] sm:$0xf] %v994
  %1059 = vst [vmem:[%s3 + $0xfc] sm:$0xf] %v995
  // Predicated region
  $region14: #{resnet_forward.18} parent=0 // pred_check
    _
  $region15: #{resnet_forward.18} parent=0 // pred_check_branch
    %1061 = sbr.rel (0) target = $region17
  $region16: #{resnet_forward.18} parent=0 // pred_region
    _
  $region17: #{resnet_forward.18} parent=0 // pred_fallthru
    _
  // Predicated region
  $region18: #{resnet_forward.18} parent=0 // pred_check
    _
  $region19: #{resnet_forward.18} parent=0 // pred_check_branch
    %1063 = sbr.rel (0) target = $region21
  $region20: #{resnet_forward.18} parent=0 // pred_region
    _
  $region21: #{resnet_forward.18} parent=0 // pred_fallthru
    _

// kernel: resnet_forward.19
$region0: #{resnet_forward.19}
  #allocation0 [shape = 'u32[]', space=smem, size = 0x4, offset = 0x4, fixed_abs, tag = 'smem constant byte address 0x4 - core index']
  #allocation1 [shape = 'u32[72,128]{1,0:T(1,128)}', space=vmem, size = 0x9000, scoped, tag = 'internal scratch']
  %s0 = inlined_call_operand.vmem [shape: bf16[9,128,128], index: 0, kind: input, shape index: {}]
  %s1 = inlined_call_operand.vmem [shape: bf16[128,128], index: 1, kind: output, shape index: {}]
  %s2 = sld [smem:[#allocation0]]
  $region14: #{resnet_forward.19} parent=0
    _
  %s4 = ssub.s32 1, %s2
  %s5 = scalar_select 0, %s4, %s2
  // Predicated region
  $region2: #{resnet_forward.19} parent=0 // pred_check
    _
  $region3: #{resnet_forward.19} parent=0 // pred_check_branch
    %7 = sbr.rel (0) target = $region5
  $region4: #{resnet_forward.19} parent=0 // pred_region
    _
  $region5: #{resnet_forward.19} parent=0 // pred_fallthru
    _
  %v8 = vld [vmem:[%s0] sm:$0xf]
  %v9 = vld [vmem:[%s0 + $0x4] sm:$0xf]
  %v10 = vld [vmem:[%s0 + $0x8] sm:$0xf]
  %v11 = vld [vmem:[%s0 + $0xc] sm:$0xf]
  %v12 = vld [vmem:[%s0 + $0x10] sm:$0xf]
  %v13 = vld [vmem:[%s0 + $0x14] sm:$0xf]
  %v14 = vld [vmem:[%s0 + $0x18] sm:$0xf]
  %v15 = vld [vmem:[%s0 + $0x1c] sm:$0xf]
  %v16 = vld [vmem:[%s0 + $0x20] sm:$0xf]
  %v17 = vld [vmem:[%s0 + $0x24] sm:$0xf]
  %v18 = vld [vmem:[%s0 + $0x28] sm:$0xf]
  %v19 = vld [vmem:[%s0 + $0x2c] sm:$0xf]
  %v20 = vld [vmem:[%s0 + $0x30] sm:$0xf]
  %v21 = vld [vmem:[%s0 + $0x34] sm:$0xf]
  %v22 = vld [vmem:[%s0 + $0x38] sm:$0xf]
  %v23 = vld [vmem:[%s0 + $0x3c] sm:$0xf]
  %s24 = scalar_lea.vmem %s0, 64
  %v25 = vld [vmem:[%s24] sm:$0xf]
  %v26 = vld [vmem:[%s24 + $0x4] sm:$0xf]
  %v27 = vld [vmem:[%s24 + $0x8] sm:$0xf]
  %v28 = vld [vmem:[%s24 + $0xc] sm:$0xf]
  %v29 = vld [vmem:[%s24 + $0x10] sm:$0xf]
  %v30 = vld [vmem:[%s24 + $0x14] sm:$0xf]
  %v31 = vld [vmem:[%s24 + $0x18] sm:$0xf]
  %v32 = vld [vmem:[%s24 + $0x1c] sm:$0xf]
  %v33 = vld [vmem:[%s24 + $0x20] sm:$0xf]
  %v34 = vld [vmem:[%s24 + $0x24] sm:$0xf]
  %v35 = vld [vmem:[%s24 + $0x28] sm:$0xf]
  %v36 = vld [vmem:[%s24 + $0x2c] sm:$0xf]
  %v37 = vld [vmem:[%s24 + $0x30] sm:$0xf]
  %v38 = vld [vmem:[%s24 + $0x34] sm:$0xf]
  %v39 = vld [vmem:[%s24 + $0x38] sm:$0xf]
  %v40 = vld [vmem:[%s24 + $0x3c] sm:$0xf]
  %v41 = vunpack.c.l.bf16 %v8
  %v42 = vunpack.c.l.bf16 %v9
  %v43 = vunpack.c.l.bf16 %v10
  %v44 = vunpack.c.l.bf16 %v11
  %v45 = vunpack.c.l.bf16 %v12
  %v46 = vunpack.c.l.bf16 %v13
  %v47 = vunpack.c.l.bf16 %v14
  %v48 = vunpack.c.l.bf16 %v15
  %v49 = vunpack.c.l.bf16 %v16
  %v50 = vunpack.c.l.bf16 %v17
  %v51 = vunpack.c.l.bf16 %v18
  %v52 = vunpack.c.l.bf16 %v19
  %v53 = vunpack.c.l.bf16 %v20
  %v54 = vunpack.c.l.bf16 %v21
  %v55 = vunpack.c.l.bf16 %v22
  %v56 = vunpack.c.l.bf16 %v23
  %v57 = vunpack.c.l.bf16 %v25
  %v58 = vunpack.c.l.bf16 %v26
  %v59 = vunpack.c.l.bf16 %v27
  %v60 = vunpack.c.l.bf16 %v28
  %v61 = vunpack.c.l.bf16 %v29
  %v62 = vunpack.c.l.bf16 %v30
  %v63 = vunpack.c.l.bf16 %v31
  %v64 = vunpack.c.l.bf16 %v32
  %v65 = vunpack.c.l.bf16 %v33
  %v66 = vunpack.c.l.bf16 %v34
  %v67 = vunpack.c.l.bf16 %v35
  %v68 = vunpack.c.l.bf16 %v36
  %v69 = vunpack.c.l.bf16 %v37
  %v70 = vunpack.c.l.bf16 %v38
  %v71 = vunpack.c.l.bf16 %v39
  %v72 = vunpack.c.l.bf16 %v40
  %v73 = vmax.f32 %v41, %v57
  %v74 = vmax.f32 %v42, %v58
  %v75 = vmax.f32 %v43, %v59
  %v76 = vmax.f32 %v44, %v60
  %v77 = vmax.f32 %v45, %v61
  %v78 = vmax.f32 %v46, %v62
  %v79 = vmax.f32 %v47, %v63
  %v80 = vmax.f32 %v48, %v64
  %v81 = vmax.f32 %v49, %v65
  %v82 = vmax.f32 %v50, %v66
  %v83 = vmax.f32 %v51, %v67
  %v84 = vmax.f32 %v52, %v68
  %v85 = vmax.f32 %v53, %v69
  %v86 = vmax.f32 %v54, %v70
  %v87 = vmax.f32 %v55, %v71
  %v88 = vmax.f32 %v56, %v72
  %v89 = vpack.c.bf16 %v73, %v73
  %v90 = vpack.c.bf16 %v74, %v74
  %v91 = vpack.c.bf16 %v75, %v75
  %v92 = vpack.c.bf16 %v76, %v76
  %v93 = vpack.c.bf16 %v77, %v77
  %v94 = vpack.c.bf16 %v78, %v78
  %v95 = vpack.c.bf16 %v79, %v79
  %v96 = vpack.c.bf16 %v80, %v80
  %v97 = vpack.c.bf16 %v81, %v81
  %v98 = vpack.c.bf16 %v82, %v82
  %v99 = vpack.c.bf16 %v83, %v83
  %v100 = vpack.c.bf16 %v84, %v84
  %v101 = vpack.c.bf16 %v85, %v85
  %v102 = vpack.c.bf16 %v86, %v86
  %v103 = vpack.c.bf16 %v87, %v87
  %v104 = vpack.c.bf16 %v88, %v88
  %s105 = scalar_lea.vmem %s0, 128
  %v106 = vld [vmem:[%s105] sm:$0xf]
  %v107 = vld [vmem:[%s105 + $0x4] sm:$0xf]
  %v108 = vld [vmem:[%s105 + $0x8] sm:$0xf]
  %v109 = vld [vmem:[%s105 + $0xc] sm:$0xf]
  %v110 = vld [vmem:[%s105 + $0x10] sm:$0xf]
  %v111 = vld [vmem:[%s105 + $0x14] sm:$0xf]
  %v112 = vld [vmem:[%s105 + $0x18] sm:$0xf]
  %v113 = vld [vmem:[%s105 + $0x1c] sm:$0xf]
  %v114 = vld [vmem:[%s105 + $0x20] sm:$0xf]
  %v115 = vld [vmem:[%s105 + $0x24] sm:$0xf]
  %v116 = vld [vmem:[%s105 + $0x28] sm:$0xf]
  %v117 = vld [vmem:[%s105 + $0x2c] sm:$0xf]
  %v118 = vld [vmem:[%s105 + $0x30] sm:$0xf]
  %v119 = vld [vmem:[%s105 + $0x34] sm:$0xf]
  %v120 = vld [vmem:[%s105 + $0x38] sm:$0xf]
  %v121 = vld [vmem:[%s105 + $0x3c] sm:$0xf]
  %v122 = vunpack.c.l.bf16 %v89
  %v123 = vunpack.c.l.bf16 %v90
  %v124 = vunpack.c.l.bf16 %v91
  %v125 = vunpack.c.l.bf16 %v92
  %v126 = vunpack.c.l.bf16 %v93
  %v127 = vunpack.c.l.bf16 %v94
  %v128 = vunpack.c.l.bf16 %v95
  %v129 = vunpack.c.l.bf16 %v96
  %v130 = vunpack.c.l.bf16 %v97
  %v131 = vunpack.c.l.bf16 %v98
  %v132 = vunpack.c.l.bf16 %v99
  %v133 = vunpack.c.l.bf16 %v100
  %v134 = vunpack.c.l.bf16 %v101
  %v135 = vunpack.c.l.bf16 %v102
  %v136 = vunpack.c.l.bf16 %v103
  %v137 = vunpack.c.l.bf16 %v104
  %v138 = vunpack.c.l.bf16 %v106
  %v139 = vunpack.c.l.bf16 %v107
  %v140 = vunpack.c.l.bf16 %v108
  %v141 = vunpack.c.l.bf16 %v109
  %v142 = vunpack.c.l.bf16 %v110
  %v143 = vunpack.c.l.bf16 %v111
  %v144 = vunpack.c.l.bf16 %v112
  %v145 = vunpack.c.l.bf16 %v113
  %v146 = vunpack.c.l.bf16 %v114
  %v147 = vunpack.c.l.bf16 %v115
  %v148 = vunpack.c.l.bf16 %v116
  %v149 = vunpack.c.l.bf16 %v117
  %v150 = vunpack.c.l.bf16 %v118
  %v151 = vunpack.c.l.bf16 %v119
  %v152 = vunpack.c.l.bf16 %v120
  %v153 = vunpack.c.l.bf16 %v121
  %v154 = vmax.f32 %v122, %v138
  %v155 = vmax.f32 %v123, %v139
  %v156 = vmax.f32 %v124, %v140
  %v157 = vmax.f32 %v125, %v141
  %v158 = vmax.f32 %v126, %v142
  %v159 = vmax.f32 %v127, %v143
  %v160 = vmax.f32 %v128, %v144
  %v161 = vmax.f32 %v129, %v145
  %v162 = vmax.f32 %v130, %v146
  %v163 = vmax.f32 %v131, %v147
  %v164 = vmax.f32 %v132, %v148
  %v165 = vmax.f32 %v133, %v149
  %v166 = vmax.f32 %v134, %v150
  %v167 = vmax.f32 %v135, %v151
  %v168 = vmax.f32 %v136, %v152
  %v169 = vmax.f32 %v137, %v153
  %v170 = vpack.c.bf16 %v154, %v154
  %v171 = vpack.c.bf16 %v155, %v155
  %v172 = vpack.c.bf16 %v156, %v156
  %v173 = vpack.c.bf16 %v157, %v157
  %v174 = vpack.c.bf16 %v158, %v158
  %v175 = vpack.c.bf16 %v159, %v159
  %v176 = vpack.c.bf16 %v160, %v160
  %v177 = vpack.c.bf16 %v161, %v161
  %v178 = vpack.c.bf16 %v162, %v162
  %v179 = vpack.c.bf16 %v163, %v163
  %v180 = vpack.c.bf16 %v164, %v164
  %v181 = vpack.c.bf16 %v165, %v165
  %v182 = vpack.c.bf16 %v166, %v166
  %v183 = vpack.c.bf16 %v167, %v167
  %v184 = vpack.c.bf16 %v168, %v168
  %v185 = vpack.c.bf16 %v169, %v169
  %s186 = scalar_lea.vmem %s0, 192
  %v187 = vld [vmem:[%s186] sm:$0xf]
  %v188 = vld [vmem:[%s186 + $0x4] sm:$0xf]
  %v189 = vld [vmem:[%s186 + $0x8] sm:$0xf]
  %v190 = vld [vmem:[%s186 + $0xc] sm:$0xf]
  %v191 = vld [vmem:[%s186 + $0x10] sm:$0xf]
  %v192 = vld [vmem:[%s186 + $0x14] sm:$0xf]
  %v193 = vld [vmem:[%s186 + $0x18] sm:$0xf]
  %v194 = vld [vmem:[%s186 + $0x1c] sm:$0xf]
  %v195 = vld [vmem:[%s186 + $0x20] sm:$0xf]
  %v196 = vld [vmem:[%s186 + $0x24] sm:$0xf]
  %v197 = vld [vmem:[%s186 + $0x28] sm:$0xf]
  %v198 = vld [vmem:[%s186 + $0x2c] sm:$0xf]
  %v199 = vld [vmem:[%s186 + $0x30] sm:$0xf]
  %v200 = vld [vmem:[%s186 + $0x34] sm:$0xf]
  %v201 = vld [vmem:[%s186 + $0x38] sm:$0xf]
  %v202 = vld [vmem:[%s186 + $0x3c] sm:$0xf]
  %v203 = vunpack.c.l.bf16 %v170
  %v204 = vunpack.c.l.bf16 %v171
  %v205 = vunpack.c.l.bf16 %v172
  %v206 = vunpack.c.l.bf16 %v173
  %v207 = vunpack.c.l.bf16 %v174
  %v208 = vunpack.c.l.bf16 %v175
  %v209 = vunpack.c.l.bf16 %v176
  %v210 = vunpack.c.l.bf16 %v177
  %v211 = vunpack.c.l.bf16 %v178
  %v212 = vunpack.c.l.bf16 %v179
  %v213 = vunpack.c.l.bf16 %v180
  %v214 = vunpack.c.l.bf16 %v181
  %v215 = vunpack.c.l.bf16 %v182
  %v216 = vunpack.c.l.bf16 %v183
  %v217 = vunpack.c.l.bf16 %v184
  %v218 = vunpack.c.l.bf16 %v185
  %v219 = vunpack.c.l.bf16 %v187
  %v220 = vunpack.c.l.bf16 %v188
  %v221 = vunpack.c.l.bf16 %v189
  %v222 = vunpack.c.l.bf16 %v190
  %v223 = vunpack.c.l.bf16 %v191
  %v224 = vunpack.c.l.bf16 %v192
  %v225 = vunpack.c.l.bf16 %v193
  %v226 = vunpack.c.l.bf16 %v194
  %v227 = vunpack.c.l.bf16 %v195
  %v228 = vunpack.c.l.bf16 %v196
  %v229 = vunpack.c.l.bf16 %v197
  %v230 = vunpack.c.l.bf16 %v198
  %v231 = vunpack.c.l.bf16 %v199
  %v232 = vunpack.c.l.bf16 %v200
  %v233 = vunpack.c.l.bf16 %v201
  %v234 = vunpack.c.l.bf16 %v202
  %v235 = vmax.f32 %v203, %v219
  %v236 = vmax.f32 %v204, %v220
  %v237 = vmax.f32 %v205, %v221
  %v238 = vmax.f32 %v206, %v222
  %v239 = vmax.f32 %v207, %v223
  %v240 = vmax.f32 %v208, %v224
  %v241 = vmax.f32 %v209, %v225
  %v242 = vmax.f32 %v210, %v226
  %v243 = vmax.f32 %v211, %v227
  %v244 = vmax.f32 %v212, %v228
  %v245 = vmax.f32 %v213, %v229
  %v246 = vmax.f32 %v214, %v230
  %v247 = vmax.f32 %v215, %v231
  %v248 = vmax.f32 %v216, %v232
  %v249 = vmax.f32 %v217, %v233
  %v250 = vmax.f32 %v218, %v234
  %v251 = vpack.c.bf16 %v235, %v235
  %v252 = vpack.c.bf16 %v236, %v236
  %v253 = vpack.c.bf16 %v237, %v237
  %v254 = vpack.c.bf16 %v238, %v238
  %v255 = vpack.c.bf16 %v239, %v239
  %v256 = vpack.c.bf16 %v240, %v240
  %v257 = vpack.c.bf16 %v241, %v241
  %v258 = vpack.c.bf16 %v242, %v242
  %v259 = vpack.c.bf16 %v243, %v243
  %v260 = vpack.c.bf16 %v244, %v244
  %v261 = vpack.c.bf16 %v245, %v245
  %v262 = vpack.c.bf16 %v246, %v246
  %v263 = vpack.c.bf16 %v247, %v247
  %v264 = vpack.c.bf16 %v248, %v248
  %v265 = vpack.c.bf16 %v249, %v249
  %v266 = vpack.c.bf16 %v250, %v250
  %s267 = scalar_lea.vmem %s0, 256
  %v268 = vld [vmem:[%s267] sm:$0xf]
  %v269 = vld [vmem:[%s267 + $0x4] sm:$0xf]
  %v270 = vld [vmem:[%s267 + $0x8] sm:$0xf]
  %v271 = vld [vmem:[%s267 + $0xc] sm:$0xf]
  %v272 = vld [vmem:[%s267 + $0x10] sm:$0xf]
  %v273 = vld [vmem:[%s267 + $0x14] sm:$0xf]
  %v274 = vld [vmem:[%s267 + $0x18] sm:$0xf]
  %v275 = vld [vmem:[%s267 + $0x1c] sm:$0xf]
  %v276 = vld [vmem:[%s267 + $0x20] sm:$0xf]
  %v277 = vld [vmem:[%s267 + $0x24] sm:$0xf]
  %v278 = vld [vmem:[%s267 + $0x28] sm:$0xf]
  %v279 = vld [vmem:[%s267 + $0x2c] sm:$0xf]
  %v280 = vld [vmem:[%s267 + $0x30] sm:$0xf]
  %v281 = vld [vmem:[%s267 + $0x34] sm:$0xf]
  %v282 = vld [vmem:[%s267 + $0x38] sm:$0xf]
  %v283 = vld [vmem:[%s267 + $0x3c] sm:$0xf]
  %v284 = vunpack.c.l.bf16 %v251
  %v285 = vunpack.c.l.bf16 %v252
  %v286 = vunpack.c.l.bf16 %v253
  %v287 = vunpack.c.l.bf16 %v254
  %v288 = vunpack.c.l.bf16 %v255
  %v289 = vunpack.c.l.bf16 %v256
  %v290 = vunpack.c.l.bf16 %v257
  %v291 = vunpack.c.l.bf16 %v258
  %v292 = vunpack.c.l.bf16 %v259
  %v293 = vunpack.c.l.bf16 %v260
  %v294 = vunpack.c.l.bf16 %v261
  %v295 = vunpack.c.l.bf16 %v262
  %v296 = vunpack.c.l.bf16 %v263
  %v297 = vunpack.c.l.bf16 %v264
  %v298 = vunpack.c.l.bf16 %v265
  %v299 = vunpack.c.l.bf16 %v266
  %v300 = vunpack.c.l.bf16 %v268
  %v301 = vunpack.c.l.bf16 %v269
  %v302 = vunpack.c.l.bf16 %v270
  %v303 = vunpack.c.l.bf16 %v271
  %v304 = vunpack.c.l.bf16 %v272
  %v305 = vunpack.c.l.bf16 %v273
  %v306 = vunpack.c.l.bf16 %v274
  %v307 = vunpack.c.l.bf16 %v275
  %v308 = vunpack.c.l.bf16 %v276
  %v309 = vunpack.c.l.bf16 %v277
  %v310 = vunpack.c.l.bf16 %v278
  %v311 = vunpack.c.l.bf16 %v279
  %v312 = vunpack.c.l.bf16 %v280
  %v313 = vunpack.c.l.bf16 %v281
  %v314 = vunpack.c.l.bf16 %v282
  %v315 = vunpack.c.l.bf16 %v283
  %v316 = vmax.f32 %v284, %v300
  %v317 = vmax.f32 %v285, %v301
  %v318 = vmax.f32 %v286, %v302
  %v319 = vmax.f32 %v287, %v303
  %v320 = vmax.f32 %v288, %v304
  %v321 = vmax.f32 %v289, %v305
  %v322 = vmax.f32 %v290, %v306
  %v323 = vmax.f32 %v291, %v307
  %v324 = vmax.f32 %v292, %v308
  %v325 = vmax.f32 %v293, %v309
  %v326 = vmax.f32 %v294, %v310
  %v327 = vmax.f32 %v295, %v311
  %v328 = vmax.f32 %v296, %v312
  %v329 = vmax.f32 %v297, %v313
  %v330 = vmax.f32 %v298, %v314
  %v331 = vmax.f32 %v299, %v315
  %v332 = vpack.c.bf16 %v316, %v316
  %v333 = vpack.c.bf16 %v317, %v317
  %v334 = vpack.c.bf16 %v318, %v318
  %v335 = vpack.c.bf16 %v319, %v319
  %v336 = vpack.c.bf16 %v320, %v320
  %v337 = vpack.c.bf16 %v321, %v321
  %v338 = vpack.c.bf16 %v322, %v322
  %v339 = vpack.c.bf16 %v323, %v323
  %v340 = vpack.c.bf16 %v324, %v324
  %v341 = vpack.c.bf16 %v325, %v325
  %v342 = vpack.c.bf16 %v326, %v326
  %v343 = vpack.c.bf16 %v327, %v327
  %v344 = vpack.c.bf16 %v328, %v328
  %v345 = vpack.c.bf16 %v329, %v329
  %v346 = vpack.c.bf16 %v330, %v330
  %v347 = vpack.c.bf16 %v331, %v331
  %s348 = scalar_lea.vmem %s0, 320
  %v349 = vld [vmem:[%s348] sm:$0xf]
  %v350 = vld [vmem:[%s348 + $0x4] sm:$0xf]
  %v351 = vld [vmem:[%s348 + $0x8] sm:$0xf]
  %v352 = vld [vmem:[%s348 + $0xc] sm:$0xf]
  %v353 = vld [vmem:[%s348 + $0x10] sm:$0xf]
  %v354 = vld [vmem:[%s348 + $0x14] sm:$0xf]
  %v355 = vld [vmem:[%s348 + $0x18] sm:$0xf]
  %v356 = vld [vmem:[%s348 + $0x1c] sm:$0xf]
  %v357 = vld [vmem:[%s348 + $0x20] sm:$0xf]
  %v358 = vld [vmem:[%s348 + $0x24] sm:$0xf]
  %v359 = vld [vmem:[%s348 + $0x28] sm:$0xf]
  %v360 = vld [vmem:[%s348 + $0x2c] sm:$0xf]
  %v361 = vld [vmem:[%s348 + $0x30] sm:$0xf]
  %v362 = vld [vmem:[%s348 + $0x34] sm:$0xf]
  %v363 = vld [vmem:[%s348 + $0x38] sm:$0xf]
  %v364 = vld [vmem:[%s348 + $0x3c] sm:$0xf]
  %v365 = vunpack.c.l.bf16 %v332
  %v366 = vunpack.c.l.bf16 %v333
  %v367 = vunpack.c.l.bf16 %v334
  %v368 = vunpack.c.l.bf16 %v335
  %v369 = vunpack.c.l.bf16 %v336
  %v370 = vunpack.c.l.bf16 %v337
  %v371 = vunpack.c.l.bf16 %v338
  %v372 = vunpack.c.l.bf16 %v339
  %v373 = vunpack.c.l.bf16 %v340
  %v374 = vunpack.c.l.bf16 %v341
  %v375 = vunpack.c.l.bf16 %v342
  %v376 = vunpack.c.l.bf16 %v343
  %v377 = vunpack.c.l.bf16 %v344
  %v378 = vunpack.c.l.bf16 %v345
  %v379 = vunpack.c.l.bf16 %v346
  %v380 = vunpack.c.l.bf16 %v347
  %v381 = vunpack.c.l.bf16 %v349
  %v382 = vunpack.c.l.bf16 %v350
  %v383 = vunpack.c.l.bf16 %v351
  %v384 = vunpack.c.l.bf16 %v352
  %v385 = vunpack.c.l.bf16 %v353
  %v386 = vunpack.c.l.bf16 %v354
  %v387 = vunpack.c.l.bf16 %v355
  %v388 = vunpack.c.l.bf16 %v356
  %v389 = vunpack.c.l.bf16 %v357
  %v390 = vunpack.c.l.bf16 %v358
  %v391 = vunpack.c.l.bf16 %v359
  %v392 = vunpack.c.l.bf16 %v360
  %v393 = vunpack.c.l.bf16 %v361
  %v394 = vunpack.c.l.bf16 %v362
  %v395 = vunpack.c.l.bf16 %v363
  %v396 = vunpack.c.l.bf16 %v364
  %v397 = vmax.f32 %v365, %v381
  %v398 = vmax.f32 %v366, %v382
  %v399 = vmax.f32 %v367, %v383
  %v400 = vmax.f32 %v368, %v384
  %v401 = vmax.f32 %v369, %v385
  %v402 = vmax.f32 %v370, %v386
  %v403 = vmax.f32 %v371, %v387
  %v404 = vmax.f32 %v372, %v388
  %v405 = vmax.f32 %v373, %v389
  %v406 = vmax.f32 %v374, %v390
  %v407 = vmax.f32 %v375, %v391
  %v408 = vmax.f32 %v376, %v392
  %v409 = vmax.f32 %v377, %v393
  %v410 = vmax.f32 %v378, %v394
  %v411 = vmax.f32 %v379, %v395
  %v412 = vmax.f32 %v380, %v396
  %v413 = vpack.c.bf16 %v397, %v397
  %v414 = vpack.c.bf16 %v398, %v398
  %v415 = vpack.c.bf16 %v399, %v399
  %v416 = vpack.c.bf16 %v400, %v400
  %v417 = vpack.c.bf16 %v401, %v401
  %v418 = vpack.c.bf16 %v402, %v402
  %v419 = vpack.c.bf16 %v403, %v403
  %v420 = vpack.c.bf16 %v404, %v404
  %v421 = vpack.c.bf16 %v405, %v405
  %v422 = vpack.c.bf16 %v406, %v406
  %v423 = vpack.c.bf16 %v407, %v407
  %v424 = vpack.c.bf16 %v408, %v408
  %v425 = vpack.c.bf16 %v409, %v409
  %v426 = vpack.c.bf16 %v410, %v410
  %v427 = vpack.c.bf16 %v411, %v411
  %v428 = vpack.c.bf16 %v412, %v412
  %s429 = scalar_lea.vmem %s0, 384
  %v430 = vld [vmem:[%s429] sm:$0xf]
  %v431 = vld [vmem:[%s429 + $0x4] sm:$0xf]
  %v432 = vld [vmem:[%s429 + $0x8] sm:$0xf]
  %v433 = vld [vmem:[%s429 + $0xc] sm:$0xf]
  %v434 = vld [vmem:[%s429 + $0x10] sm:$0xf]
  %v435 = vld [vmem:[%s429 + $0x14] sm:$0xf]
  %v436 = vld [vmem:[%s429 + $0x18] sm:$0xf]
  %v437 = vld [vmem:[%s429 + $0x1c] sm:$0xf]
  %v438 = vld [vmem:[%s429 + $0x20] sm:$0xf]
  %v439 = vld [vmem:[%s429 + $0x24] sm:$0xf]
  %v440 = vld [vmem:[%s429 + $0x28] sm:$0xf]
  %v441 = vld [vmem:[%s429 + $0x2c] sm:$0xf]
  %v442 = vld [vmem:[%s429 + $0x30] sm:$0xf]
  %v443 = vld [vmem:[%s429 + $0x34] sm:$0xf]
  %v444 = vld [vmem:[%s429 + $0x38] sm:$0xf]
  %v445 = vld [vmem:[%s429 + $0x3c] sm:$0xf]
  %v446 = vunpack.c.l.bf16 %v413
  %v447 = vunpack.c.l.bf16 %v414
  %v448 = vunpack.c.l.bf16 %v415
  %v449 = vunpack.c.l.bf16 %v416
  %v450 = vunpack.c.l.bf16 %v417
  %v451 = vunpack.c.l.bf16 %v418
  %v452 = vunpack.c.l.bf16 %v419
  %v453 = vunpack.c.l.bf16 %v420
  %v454 = vunpack.c.l.bf16 %v421
  %v455 = vunpack.c.l.bf16 %v422
  %v456 = vunpack.c.l.bf16 %v423
  %v457 = vunpack.c.l.bf16 %v424
  %v458 = vunpack.c.l.bf16 %v425
  %v459 = vunpack.c.l.bf16 %v426
  %v460 = vunpack.c.l.bf16 %v427
  %v461 = vunpack.c.l.bf16 %v428
  %v462 = vunpack.c.l.bf16 %v430
  %v463 = vunpack.c.l.bf16 %v431
  %v464 = vunpack.c.l.bf16 %v432
  %v465 = vunpack.c.l.bf16 %v433
  %v466 = vunpack.c.l.bf16 %v434
  %v467 = vunpack.c.l.bf16 %v435
  %v468 = vunpack.c.l.bf16 %v436
  %v469 = vunpack.c.l.bf16 %v437
  %v470 = vunpack.c.l.bf16 %v438
  %v471 = vunpack.c.l.bf16 %v439
  %v472 = vunpack.c.l.bf16 %v440
  %v473 = vunpack.c.l.bf16 %v441
  %v474 = vunpack.c.l.bf16 %v442
  %v475 = vunpack.c.l.bf16 %v443
  %v476 = vunpack.c.l.bf16 %v444
  %v477 = vunpack.c.l.bf16 %v445
  %v478 = vmax.f32 %v446, %v462
  %v479 = vmax.f32 %v447, %v463
  %v480 = vmax.f32 %v448, %v464
  %v481 = vmax.f32 %v449, %v465
  %v482 = vmax.f32 %v450, %v466
  %v483 = vmax.f32 %v451, %v467
  %v484 = vmax.f32 %v452, %v468
  %v485 = vmax.f32 %v453, %v469
  %v486 = vmax.f32 %v454, %v470
  %v487 = vmax.f32 %v455, %v471
  %v488 = vmax.f32 %v456, %v472
  %v489 = vmax.f32 %v457, %v473
  %v490 = vmax.f32 %v458, %v474
  %v491 = vmax.f32 %v459, %v475
  %v492 = vmax.f32 %v460, %v476
  %v493 = vmax.f32 %v461, %v477
  %v494 = vpack.c.bf16 %v478, %v478
  %v495 = vpack.c.bf16 %v479, %v479
  %v496 = vpack.c.bf16 %v480, %v480
  %v497 = vpack.c.bf16 %v481, %v481
  %v498 = vpack.c.bf16 %v482, %v482
  %v499 = vpack.c.bf16 %v483, %v483
  %v500 = vpack.c.bf16 %v484, %v484
  %v501 = vpack.c.bf16 %v485, %v485
  %v502 = vpack.c.bf16 %v486, %v486
  %v503 = vpack.c.bf16 %v487, %v487
  %v504 = vpack.c.bf16 %v488, %v488
  %v505 = vpack.c.bf16 %v489, %v489
  %v506 = vpack.c.bf16 %v490, %v490
  %v507 = vpack.c.bf16 %v491, %v491
  %v508 = vpack.c.bf16 %v492, %v492
  %v509 = vpack.c.bf16 %v493, %v493
  %s510 = scalar_lea.vmem %s0, 448
  %v511 = vld [vmem:[%s510] sm:$0xf]
  %v512 = vld [vmem:[%s510 + $0x4] sm:$0xf]
  %v513 = vld [vmem:[%s510 + $0x8] sm:$0xf]
  %v514 = vld [vmem:[%s510 + $0xc] sm:$0xf]
  %v515 = vld [vmem:[%s510 + $0x10] sm:$0xf]
  %v516 = vld [vmem:[%s510 + $0x14] sm:$0xf]
  %v517 = vld [vmem:[%s510 + $0x18] sm:$0xf]
  %v518 = vld [vmem:[%s510 + $0x1c] sm:$0xf]
  %v519 = vld [vmem:[%s510 + $0x20] sm:$0xf]
  %v520 = vld [vmem:[%s510 + $0x24] sm:$0xf]
  %v521 = vld [vmem:[%s510 + $0x28] sm:$0xf]
  %v522 = vld [vmem:[%s510 + $0x2c] sm:$0xf]
  %v523 = vld [vmem:[%s510 + $0x30] sm:$0xf]
  %v524 = vld [vmem:[%s510 + $0x34] sm:$0xf]
  %v525 = vld [vmem:[%s510 + $0x38] sm:$0xf]
  %v526 = vld [vmem:[%s510 + $0x3c] sm:$0xf]
  %v527 = vunpack.c.l.bf16 %v494
  %v528 = vunpack.c.l.bf16 %v495
  %v529 = vunpack.c.l.bf16 %v496
  %v530 = vunpack.c.l.bf16 %v497
  %v531 = vunpack.c.l.bf16 %v498
  %v532 = vunpack.c.l.bf16 %v499
  %v533 = vunpack.c.l.bf16 %v500
  %v534 = vunpack.c.l.bf16 %v501
  %v535 = vunpack.c.l.bf16 %v502
  %v536 = vunpack.c.l.bf16 %v503
  %v537 = vunpack.c.l.bf16 %v504
  %v538 = vunpack.c.l.bf16 %v505
  %v539 = vunpack.c.l.bf16 %v506
  %v540 = vunpack.c.l.bf16 %v507
  %v541 = vunpack.c.l.bf16 %v508
  %v542 = vunpack.c.l.bf16 %v509
  %v543 = vunpack.c.l.bf16 %v511
  %v544 = vunpack.c.l.bf16 %v512
  %v545 = vunpack.c.l.bf16 %v513
  %v546 = vunpack.c.l.bf16 %v514
  %v547 = vunpack.c.l.bf16 %v515
  %v548 = vunpack.c.l.bf16 %v516
  %v549 = vunpack.c.l.bf16 %v517
  %v550 = vunpack.c.l.bf16 %v518
  %v551 = vunpack.c.l.bf16 %v519
  %v552 = vunpack.c.l.bf16 %v520
  %v553 = vunpack.c.l.bf16 %v521
  %v554 = vunpack.c.l.bf16 %v522
  %v555 = vunpack.c.l.bf16 %v523
  %v556 = vunpack.c.l.bf16 %v524
  %v557 = vunpack.c.l.bf16 %v525
  %v558 = vunpack.c.l.bf16 %v526
  %v559 = vmax.f32 %v527, %v543
  %v560 = vmax.f32 %v528, %v544
  %v561 = vmax.f32 %v529, %v545
  %v562 = vmax.f32 %v530, %v546
  %v563 = vmax.f32 %v531, %v547
  %v564 = vmax.f32 %v532, %v548
  %v565 = vmax.f32 %v533, %v549
  %v566 = vmax.f32 %v534, %v550
  %v567 = vmax.f32 %v535, %v551
  %v568 = vmax.f32 %v536, %v552
  %v569 = vmax.f32 %v537, %v553
  %v570 = vmax.f32 %v538, %v554
  %v571 = vmax.f32 %v539, %v555
  %v572 = vmax.f32 %v540, %v556
  %v573 = vmax.f32 %v541, %v557
  %v574 = vmax.f32 %v542, %v558
  %v575 = vpack.c.bf16 %v559, %v559
  %v576 = vpack.c.bf16 %v560, %v560
  %v577 = vpack.c.bf16 %v561, %v561
  %v578 = vpack.c.bf16 %v562, %v562
  %v579 = vpack.c.bf16 %v563, %v563
  %v580 = vpack.c.bf16 %v564, %v564
  %v581 = vpack.c.bf16 %v565, %v565
  %v582 = vpack.c.bf16 %v566, %v566
  %v583 = vpack.c.bf16 %v567, %v567
  %v584 = vpack.c.bf16 %v568, %v568
  %v585 = vpack.c.bf16 %v569, %v569
  %v586 = vpack.c.bf16 %v570, %v570
  %v587 = vpack.c.bf16 %v571, %v571
  %v588 = vpack.c.bf16 %v572, %v572
  %v589 = vpack.c.bf16 %v573, %v573
  %v590 = vpack.c.bf16 %v574, %v574
  %s591 = scalar_lea.vmem %s0, 512
  %v592 = vld [vmem:[%s591] sm:$0xf]
  %v593 = vld [vmem:[%s591 + $0x4] sm:$0xf]
  %v594 = vld [vmem:[%s591 + $0x8] sm:$0xf]
  %v595 = vld [vmem:[%s591 + $0xc] sm:$0xf]
  %v596 = vld [vmem:[%s591 + $0x10] sm:$0xf]
  %v597 = vld [vmem:[%s591 + $0x14] sm:$0xf]
  %v598 = vld [vmem:[%s591 + $0x18] sm:$0xf]
  %v599 = vld [vmem:[%s591 + $0x1c] sm:$0xf]
  %v600 = vld [vmem:[%s591 + $0x20] sm:$0xf]
  %v601 = vld [vmem:[%s591 + $0x24] sm:$0xf]
  %v602 = vld [vmem:[%s591 + $0x28] sm:$0xf]
  %v603 = vld [vmem:[%s591 + $0x2c] sm:$0xf]
  %v604 = vld [vmem:[%s591 + $0x30] sm:$0xf]
  %v605 = vld [vmem:[%s591 + $0x34] sm:$0xf]
  %v606 = vld [vmem:[%s591 + $0x38] sm:$0xf]
  %v607 = vld [vmem:[%s591 + $0x3c] sm:$0xf]
  %v608 = vunpack.c.l.bf16 %v575
  %v609 = vunpack.c.l.bf16 %v576
  %v610 = vunpack.c.l.bf16 %v577
  %v611 = vunpack.c.l.bf16 %v578
  %v612 = vunpack.c.l.bf16 %v579
  %v613 = vunpack.c.l.bf16 %v580
  %v614 = vunpack.c.l.bf16 %v581
  %v615 = vunpack.c.l.bf16 %v582
  %v616 = vunpack.c.l.bf16 %v583
  %v617 = vunpack.c.l.bf16 %v584
  %v618 = vunpack.c.l.bf16 %v585
  %v619 = vunpack.c.l.bf16 %v586
  %v620 = vunpack.c.l.bf16 %v587
  %v621 = vunpack.c.l.bf16 %v588
  %v622 = vunpack.c.l.bf16 %v589
  %v623 = vunpack.c.l.bf16 %v590
  %v624 = vunpack.c.l.bf16 %v592
  %v625 = vunpack.c.l.bf16 %v593
  %v626 = vunpack.c.l.bf16 %v594
  %v627 = vunpack.c.l.bf16 %v595
  %v628 = vunpack.c.l.bf16 %v596
  %v629 = vunpack.c.l.bf16 %v597
  %v630 = vunpack.c.l.bf16 %v598
  %v631 = vunpack.c.l.bf16 %v599
  %v632 = vunpack.c.l.bf16 %v600
  %v633 = vunpack.c.l.bf16 %v601
  %v634 = vunpack.c.l.bf16 %v602
  %v635 = vunpack.c.l.bf16 %v603
  %v636 = vunpack.c.l.bf16 %v604
  %v637 = vunpack.c.l.bf16 %v605
  %v638 = vunpack.c.l.bf16 %v606
  %v639 = vunpack.c.l.bf16 %v607
  %v640 = vmax.f32 %v608, %v624
  %v641 = vmax.f32 %v609, %v625
  %v642 = vmax.f32 %v610, %v626
  %v643 = vmax.f32 %v611, %v627
  %v644 = vmax.f32 %v612, %v628
  %v645 = vmax.f32 %v613, %v629
  %v646 = vmax.f32 %v614, %v630
  %v647 = vmax.f32 %v615, %v631
  %v648 = vmax.f32 %v616, %v632
  %v649 = vmax.f32 %v617, %v633
  %v650 = vmax.f32 %v618, %v634
  %v651 = vmax.f32 %v619, %v635
  %v652 = vmax.f32 %v620, %v636
  %v653 = vmax.f32 %v621, %v637
  %v654 = vmax.f32 %v622, %v638
  %v655 = vmax.f32 %v623, %v639
  %v656 = vpack.c.bf16 %v640, %v640
  %v657 = vpack.c.bf16 %v641, %v641
  %v658 = vpack.c.bf16 %v642, %v642
  %v659 = vpack.c.bf16 %v643, %v643
  %v660 = vpack.c.bf16 %v644, %v644
  %v661 = vpack.c.bf16 %v645, %v645
  %v662 = vpack.c.bf16 %v646, %v646
  %v663 = vpack.c.bf16 %v647, %v647
  %v664 = vpack.c.bf16 %v648, %v648
  %v665 = vpack.c.bf16 %v649, %v649
  %v666 = vpack.c.bf16 %v650, %v650
  %v667 = vpack.c.bf16 %v651, %v651
  %v668 = vpack.c.bf16 %v652, %v652
  %v669 = vpack.c.bf16 %v653, %v653
  %v670 = vpack.c.bf16 %v654, %v654
  %v671 = vpack.c.bf16 %v655, %v655
  %672 = vst [vmem:[%s1] sm:$0xf] %v656
  %673 = vst [vmem:[%s1 + $0x4] sm:$0xf] %v657
  %674 = vst [vmem:[%s1 + $0x8] sm:$0xf] %v658
  %675 = vst [vmem:[%s1 + $0xc] sm:$0xf] %v659
  %676 = vst [vmem:[%s1 + $0x10] sm:$0xf] %v660
  %677 = vst [vmem:[%s1 + $0x14] sm:$0xf] %v661
  %678 = vst [vmem:[%s1 + $0x18] sm:$0xf] %v662
  %679 = vst [vmem:[%s1 + $0x1c] sm:$0xf] %v663
  %680 = vst [vmem:[%s1 + $0x20] sm:$0xf] %v664
  %681 = vst [vmem:[%s1 + $0x24] sm:$0xf] %v665
  %682 = vst [vmem:[%s1 + $0x28] sm:$0xf] %v666
  %683 = vst [vmem:[%s1 + $0x2c] sm:$0xf] %v667
  %684 = vst [vmem:[%s1 + $0x30] sm:$0xf] %v668
  %685 = vst [vmem:[%s1 + $0x34] sm:$0xf] %v669
  %686 = vst [vmem:[%s1 + $0x38] sm:$0xf] %v670
  %687 = vst [vmem:[%s1 + $0x3c] sm:$0xf] %v671
  // Predicated region
  $region6: #{resnet_forward.19} parent=0 // pred_check
    _
  $region7: #{resnet_forward.19} parent=0 // pred_check_branch
    %689 = sbr.rel (0) target = $region9
  $region8: #{resnet_forward.19} parent=0 // pred_region
    _
  $region9: #{resnet_forward.19} parent=0 // pred_fallthru
    _
  // Predicated region
  $region10: #{resnet_forward.19} parent=0 // pred_check
    _
  $region11: #{resnet_forward.19} parent=0 // pred_check_branch
    %691 = sbr.rel (0) target = $region13
  $region12: #{resnet_forward.19} parent=0 // pred_region
    _
  $region13: #{resnet_forward.19} parent=0 // pred_fallthru
    _

// kernel: resnet_forward.21
$region0: #{resnet_forward.21}
  #allocation0 [shape = 'u32[]', space=smem, size = 0x4, offset = 0x4, fixed_abs, tag = 'smem constant byte address 0x4 - core index']
  #allocation1 [shape = 'u32[72,128]{1,0:T(1,128)}', space=vmem, size = 0x9000, scoped, tag = 'internal scratch']
  %s0 = inlined_call_operand.vmem [shape: bf16[128,128], index: 0, kind: input, shape index: {}]
  %s1 = inlined_call_operand.vmem [shape: bf16[128,128], index: 1, kind: input, shape index: {}]
  %s2 = inlined_call_operand.vmem [shape: f32[1,128], index: 2, kind: input, shape index: {}]
  %s3 = inlined_call_operand.vmem [shape: bf16[128,128], index: 3, kind: input, shape index: {}, may-alias: {3,4}]
  %s4 = inlined_call_operand.vmem [shape: bf16[128,128], index: 4, kind: output, shape index: {}, may-alias: {3,4}]
  %s5 = sld [smem:[#allocation0]]
  $region26: #{resnet_forward.21} parent=0
    _
  %s7 = ssub.s32 1, %s5
  %s8 = scalar_select 0, %s7, %s5
  // Predicated region
  $region2: #{resnet_forward.21} parent=0 // pred_check
    _
  $region3: #{resnet_forward.21} parent=0 // pred_check_branch
    %10 = sbr.rel (0) target = $region5
  $region4: #{resnet_forward.21} parent=0 // pred_region
    _
  $region5: #{resnet_forward.21} parent=0 // pred_fallthru
    _
  // Predicated region
  $region6: #{resnet_forward.21} parent=0 // pred_check
    _
  $region7: #{resnet_forward.21} parent=0 // pred_check_branch
    %12 = sbr.rel (0) target = $region9
  $region8: #{resnet_forward.21} parent=0 // pred_region
    _
  $region9: #{resnet_forward.21} parent=0 // pred_fallthru
    _
  // Predicated region
  $region10: #{resnet_forward.21} parent=0 // pred_check
    _
  $region11: #{resnet_forward.21} parent=0 // pred_check_branch
    %14 = sbr.rel (0) target = $region13
  $region12: #{resnet_forward.21} parent=0 // pred_region
    _
  $region13: #{resnet_forward.21} parent=0 // pred_fallthru
    _
  // Predicated region
  $region14: #{resnet_forward.21} parent=0 // pred_check
    _
  $region15: #{resnet_forward.21} parent=0 // pred_check_branch
    %16 = sbr.rel (0) target = $region17
  $region16: #{resnet_forward.21} parent=0 // pred_region
    _
  $region17: #{resnet_forward.21} parent=0 // pred_fallthru
    _
  %v17 = vld [vmem:[%s0] sm:$0xf]
  %v18 = vld [vmem:[%s0 + $0x4] sm:$0xf]
  %v19 = vld [vmem:[%s0 + $0x8] sm:$0xf]
  %v20 = vld [vmem:[%s0 + $0xc] sm:$0xf]
  %v21 = vld [vmem:[%s0 + $0x10] sm:$0xf]
  %v22 = vld [vmem:[%s0 + $0x14] sm:$0xf]
  %v23 = vld [vmem:[%s0 + $0x18] sm:$0xf]
  %v24 = vld [vmem:[%s0 + $0x1c] sm:$0xf]
  %v25 = vld [vmem:[%s0 + $0x20] sm:$0xf]
  %v26 = vld [vmem:[%s0 + $0x24] sm:$0xf]
  %v27 = vld [vmem:[%s0 + $0x28] sm:$0xf]
  %v28 = vld [vmem:[%s0 + $0x2c] sm:$0xf]
  %v29 = vld [vmem:[%s0 + $0x30] sm:$0xf]
  %v30 = vld [vmem:[%s0 + $0x34] sm:$0xf]
  %v31 = vld [vmem:[%s0 + $0x38] sm:$0xf]
  %v32 = vld [vmem:[%s0 + $0x3c] sm:$0xf]
  %v33 = vld [vmem:[%s1] sm:$0xf]
  %v34 = vld [vmem:[%s1 + $0x4] sm:$0xf]
  %v35 = vld [vmem:[%s1 + $0x8] sm:$0xf]
  %v36 = vld [vmem:[%s1 + $0xc] sm:$0xf]
  %v37 = vld [vmem:[%s1 + $0x10] sm:$0xf]
  %v38 = vld [vmem:[%s1 + $0x14] sm:$0xf]
  %v39 = vld [vmem:[%s1 + $0x18] sm:$0xf]
  %v40 = vld [vmem:[%s1 + $0x1c] sm:$0xf]
  %v41 = vld [vmem:[%s1 + $0x20] sm:$0xf]
  %v42 = vld [vmem:[%s1 + $0x24] sm:$0xf]
  %v43 = vld [vmem:[%s1 + $0x28] sm:$0xf]
  %v44 = vld [vmem:[%s1 + $0x2c] sm:$0xf]
  %v45 = vld [vmem:[%s1 + $0x30] sm:$0xf]
  %v46 = vld [vmem:[%s1 + $0x34] sm:$0xf]
  %v47 = vld [vmem:[%s1 + $0x38] sm:$0xf]
  %v48 = vld [vmem:[%s1 + $0x3c] sm:$0xf]
  %v49 = vld [vmem:[%s2] sm:$0x1]
  %v51 = vperm.slane %v49, 0
  %v69 = vunpack.c.l.b16 %v17
  %v70 = vunpack.c.l.b16 %v18
  %v71 = vunpack.c.l.b16 %v19
  %v72 = vunpack.c.l.b16 %v20
  %v73 = vunpack.c.l.b16 %v21
  %v74 = vunpack.c.l.b16 %v22
  %v75 = vunpack.c.l.b16 %v23
  %v76 = vunpack.c.l.b16 %v24
  %v77 = vunpack.c.l.b16 %v25
  %v78 = vunpack.c.l.b16 %v26
  %v79 = vunpack.c.l.b16 %v27
  %v80 = vunpack.c.l.b16 %v28
  %v81 = vunpack.c.l.b16 %v29
  %v82 = vunpack.c.l.b16 %v30
  %v83 = vunpack.c.l.b16 %v31
  %v84 = vunpack.c.l.b16 %v32
  %v85 = vpack.c.b16 %v70, %v69
  %v86 = vpack.c.b16 %v72, %v71
  %v87 = vpack.c.b16 %v74, %v73
  %v88 = vpack.c.b16 %v76, %v75
  %v89 = vpack.c.b16 %v78, %v77
  %v90 = vpack.c.b16 %v80, %v79
  %v91 = vpack.c.b16 %v82, %v81
  %v92 = vpack.c.b16 %v84, %v83
  %v117 = vunpack.c.l.b16 %v33
  %v118 = vunpack.c.l.b16 %v34
  %v119 = vunpack.c.l.b16 %v35
  %v120 = vunpack.c.l.b16 %v36
  %v121 = vunpack.c.l.b16 %v37
  %v122 = vunpack.c.l.b16 %v38
  %v123 = vunpack.c.l.b16 %v39
  %v124 = vunpack.c.l.b16 %v40
  %v125 = vunpack.c.l.b16 %v41
  %v126 = vunpack.c.l.b16 %v42
  %v127 = vunpack.c.l.b16 %v43
  %v128 = vunpack.c.l.b16 %v44
  %v129 = vunpack.c.l.b16 %v45
  %v130 = vunpack.c.l.b16 %v46
  %v131 = vunpack.c.l.b16 %v47
  %v132 = vunpack.c.l.b16 %v48
  %v133 = vpack.c.b16 %v118, %v117
  %v134 = vpack.c.b16 %v120, %v119
  %v135 = vpack.c.b16 %v122, %v121
  %v136 = vpack.c.b16 %v124, %v123
  %v137 = vpack.c.b16 %v126, %v125
  %v138 = vpack.c.b16 %v128, %v127
  %v139 = vpack.c.b16 %v130, %v129
  %v140 = vpack.c.b16 %v132, %v131
  %149 = vmatpush.bf16.msra.mxu0 %v140
  %150 = vmatpush.bf16.msra.mxu0 %v139
  %151 = vmatpush.bf16.msra.mxu0 %v138
  %152 = vmatpush.bf16.msra.mxu0 %v137
  %153 = vmatpush.bf16.msra.mxu0 %v136
  %154 = vmatpush.bf16.msra.mxu0 %v135
  %155 = vmatpush.bf16.msra.mxu0 %v134
  %156 = vmatpush.bf16.msra.mxu0 %v133
  %157 = vmatmul.bf16.gmra.mxu0 %v85
  %v158 = vpop.f32.mrf.mxu0
  %v159 = vadd.f32 %v51, %v158
  %v160 = vpop.f32.mrf.mxu0
  %v161 = vadd.f32 %v51, %v160
  %162 = vmatmul.bf16.gmra.mxu0 %v86
  %v163 = vpop.f32.mrf.mxu0
  %v164 = vadd.f32 %v51, %v163
  %v165 = vpop.f32.mrf.mxu0
  %v166 = vadd.f32 %v51, %v165
  %167 = vmatmul.bf16.gmra.mxu0 %v87
  %v168 = vpop.f32.mrf.mxu0
  %v169 = vadd.f32 %v51, %v168
  %v170 = vpop.f32.mrf.mxu0
  %v171 = vadd.f32 %v51, %v170
  %172 = vmatmul.bf16.gmra.mxu0 %v88
  %v173 = vpop.f32.mrf.mxu0
  %v174 = vadd.f32 %v51, %v173
  %v175 = vpop.f32.mrf.mxu0
  %v176 = vadd.f32 %v51, %v175
  %177 = vmatmul.bf16.gmra.mxu0 %v89
  %v178 = vpop.f32.mrf.mxu0
  %v179 = vadd.f32 %v51, %v178
  %v180 = vpop.f32.mrf.mxu0
  %v181 = vadd.f32 %v51, %v180
  %182 = vmatmul.bf16.gmra.mxu0 %v90
  %v183 = vpop.f32.mrf.mxu0
  %v184 = vadd.f32 %v51, %v183
  %v185 = vpop.f32.mrf.mxu0
  %v186 = vadd.f32 %v51, %v185
  %187 = vmatmul.bf16.gmra.mxu0 %v91
  %v188 = vpop.f32.mrf.mxu0
  %v189 = vadd.f32 %v51, %v188
  %v190 = vpop.f32.mrf.mxu0
  %v191 = vadd.f32 %v51, %v190
  %192 = vmatmul.bf16.gmra.mxu0 %v92
  %v193 = vpop.f32.mrf.mxu0
  %v194 = vadd.f32 %v51, %v193
  %v195 = vpop.f32.mrf.mxu0
  %v196 = vadd.f32 %v51, %v195
  %197 = vdwg.mxu0
  %v198 = vld [vmem:[%s3] sm:$0xf]
  %v199 = vld [vmem:[%s3 + $0x4] sm:$0xf]
  %v200 = vld [vmem:[%s3 + $0x8] sm:$0xf]
  %v201 = vld [vmem:[%s3 + $0xc] sm:$0xf]
  %v202 = vld [vmem:[%s3 + $0x10] sm:$0xf]
  %v203 = vld [vmem:[%s3 + $0x14] sm:$0xf]
  %v204 = vld [vmem:[%s3 + $0x18] sm:$0xf]
  %v205 = vld [vmem:[%s3 + $0x1c] sm:$0xf]
  %v206 = vld [vmem:[%s3 + $0x20] sm:$0xf]
  %v207 = vld [vmem:[%s3 + $0x24] sm:$0xf]
  %v208 = vld [vmem:[%s3 + $0x28] sm:$0xf]
  %v209 = vld [vmem:[%s3 + $0x2c] sm:$0xf]
  %v210 = vld [vmem:[%s3 + $0x30] sm:$0xf]
  %v211 = vld [vmem:[%s3 + $0x34] sm:$0xf]
  %v212 = vld [vmem:[%s3 + $0x38] sm:$0xf]
  %v213 = vld [vmem:[%s3 + $0x3c] sm:$0xf]
  %v214 = vunpack.c.l.bf16 %v198
  %v215 = vunpack.c.l.bf16 %v199
  %v216 = vunpack.c.l.bf16 %v200
  %v217 = vunpack.c.l.bf16 %v201
  %v218 = vunpack.c.l.bf16 %v202
  %v219 = vunpack.c.l.bf16 %v203
  %v220 = vunpack.c.l.bf16 %v204
  %v221 = vunpack.c.l.bf16 %v205
  %v222 = vunpack.c.l.bf16 %v206
  %v223 = vunpack.c.l.bf16 %v207
  %v224 = vunpack.c.l.bf16 %v208
  %v225 = vunpack.c.l.bf16 %v209
  %v226 = vunpack.c.l.bf16 %v210
  %v227 = vunpack.c.l.bf16 %v211
  %v228 = vunpack.c.l.bf16 %v212
  %v229 = vunpack.c.l.bf16 %v213
  %v230 = vadd.f32 %v159, %v214
  %v231 = vadd.f32 %v161, %v215
  %v232 = vadd.f32 %v164, %v216
  %v233 = vadd.f32 %v166, %v217
  %v234 = vadd.f32 %v169, %v218
  %v235 = vadd.f32 %v171, %v219
  %v236 = vadd.f32 %v174, %v220
  %v237 = vadd.f32 %v176, %v221
  %v238 = vadd.f32 %v179, %v222
  %v239 = vadd.f32 %v181, %v223
  %v240 = vadd.f32 %v184, %v224
  %v241 = vadd.f32 %v186, %v225
  %v242 = vadd.f32 %v189, %v226
  %v243 = vadd.f32 %v191, %v227
  %v244 = vadd.f32 %v194, %v228
  %v245 = vadd.f32 %v196, %v229
  %v246 = vmax.f32 %v230, 0.0
  %v247 = vmax.f32 %v231, 0.0
  %v248 = vmax.f32 %v232, 0.0
  %v249 = vmax.f32 %v233, 0.0
  %v250 = vmax.f32 %v234, 0.0
  %v251 = vmax.f32 %v235, 0.0
  %v252 = vmax.f32 %v236, 0.0
  %v253 = vmax.f32 %v237, 0.0
  %v254 = vmax.f32 %v238, 0.0
  %v255 = vmax.f32 %v239, 0.0
  %v256 = vmax.f32 %v240, 0.0
  %v257 = vmax.f32 %v241, 0.0
  %v258 = vmax.f32 %v242, 0.0
  %v259 = vmax.f32 %v243, 0.0
  %v260 = vmax.f32 %v244, 0.0
  %v261 = vmax.f32 %v245, 0.0
  %v262 = vpack.c.bf16 %v246, %v246
  %v263 = vpack.c.bf16 %v247, %v247
  %v264 = vpack.c.bf16 %v248, %v248
  %v265 = vpack.c.bf16 %v249, %v249
  %v266 = vpack.c.bf16 %v250, %v250
  %v267 = vpack.c.bf16 %v251, %v251
  %v268 = vpack.c.bf16 %v252, %v252
  %v269 = vpack.c.bf16 %v253, %v253
  %v270 = vpack.c.bf16 %v254, %v254
  %v271 = vpack.c.bf16 %v255, %v255
  %v272 = vpack.c.bf16 %v256, %v256
  %v273 = vpack.c.bf16 %v257, %v257
  %v274 = vpack.c.bf16 %v258, %v258
  %v275 = vpack.c.bf16 %v259, %v259
  %v276 = vpack.c.bf16 %v260, %v260
  %v277 = vpack.c.bf16 %v261, %v261
  %278 = vst [vmem:[%s4] sm:$0xf] %v262
  %279 = vst [vmem:[%s4 + $0x4] sm:$0xf] %v263
  %280 = vst [vmem:[%s4 + $0x8] sm:$0xf] %v264
  %281 = vst [vmem:[%s4 + $0xc] sm:$0xf] %v265
  %282 = vst [vmem:[%s4 + $0x10] sm:$0xf] %v266
  %283 = vst [vmem:[%s4 + $0x14] sm:$0xf] %v267
  %284 = vst [vmem:[%s4 + $0x18] sm:$0xf] %v268
  %285 = vst [vmem:[%s4 + $0x1c] sm:$0xf] %v269
  %286 = vst [vmem:[%s4 + $0x20] sm:$0xf] %v270
  %287 = vst [vmem:[%s4 + $0x24] sm:$0xf] %v271
  %288 = vst [vmem:[%s4 + $0x28] sm:$0xf] %v272
  %289 = vst [vmem:[%s4 + $0x2c] sm:$0xf] %v273
  %290 = vst [vmem:[%s4 + $0x30] sm:$0xf] %v274
  %291 = vst [vmem:[%s4 + $0x34] sm:$0xf] %v275
  %292 = vst [vmem:[%s4 + $0x38] sm:$0xf] %v276
  %293 = vst [vmem:[%s4 + $0x3c] sm:$0xf] %v277
  // Predicated region
  $region18: #{resnet_forward.21} parent=0 // pred_check
    _
  $region19: #{resnet_forward.21} parent=0 // pred_check_branch
    %295 = sbr.rel (0) target = $region21
  $region20: #{resnet_forward.21} parent=0 // pred_region
    _
  $region21: #{resnet_forward.21} parent=0 // pred_fallthru
    _
  // Predicated region
  $region22: #{resnet_forward.21} parent=0 // pred_check
    _
  $region23: #{resnet_forward.21} parent=0 // pred_check_branch
    %297 = sbr.rel (0) target = $region25
  $region24: #{resnet_forward.21} parent=0 // pred_region
    _
  $region25: #{resnet_forward.21} parent=0 // pred_fallthru
    _

// kernel: resnet_forward.20
$region0: #{resnet_forward.20}
  #allocation0 [shape = 'u32[]', space=smem, size = 0x4, offset = 0x4, fixed_abs, tag = 'smem constant byte address 0x4 - core index']
  #allocation1 [shape = 'u32[72,128]{1,0:T(1,128)}', space=vmem, size = 0x9000, scoped, tag = 'internal scratch']
  %s0 = inlined_call_operand.vmem [shape: bf16[128,128], index: 0, kind: input, shape index: {}]
  %s1 = inlined_call_operand.vmem [shape: bf16[128,128], index: 1, kind: input, shape index: {}]
  %s2 = inlined_call_operand.vmem [shape: f32[1,128], index: 2, kind: input, shape index: {}]
  %s3 = inlined_call_operand.vmem [shape: bf16[128,128], index: 3, kind: output, shape index: {}]
  %s4 = sld [smem:[#allocation0]]
  $region22: #{resnet_forward.20} parent=0
    _
  %s6 = ssub.s32 1, %s4
  %s7 = scalar_select 0, %s6, %s4
  // Predicated region
  $region2: #{resnet_forward.20} parent=0 // pred_check
    _
  $region3: #{resnet_forward.20} parent=0 // pred_check_branch
    %9 = sbr.rel (0) target = $region5
  $region4: #{resnet_forward.20} parent=0 // pred_region
    _
  $region5: #{resnet_forward.20} parent=0 // pred_fallthru
    _
  // Predicated region
  $region6: #{resnet_forward.20} parent=0 // pred_check
    _
  $region7: #{resnet_forward.20} parent=0 // pred_check_branch
    %11 = sbr.rel (0) target = $region9
  $region8: #{resnet_forward.20} parent=0 // pred_region
    _
  $region9: #{resnet_forward.20} parent=0 // pred_fallthru
    _
  // Predicated region
  $region10: #{resnet_forward.20} parent=0 // pred_check
    _
  $region11: #{resnet_forward.20} parent=0 // pred_check_branch
    %13 = sbr.rel (0) target = $region13
  $region12: #{resnet_forward.20} parent=0 // pred_region
    _
  $region13: #{resnet_forward.20} parent=0 // pred_fallthru
    _
  %v14 = vld [vmem:[%s0] sm:$0xf]
  %v15 = vld [vmem:[%s0 + $0x4] sm:$0xf]
  %v16 = vld [vmem:[%s0 + $0x8] sm:$0xf]
  %v17 = vld [vmem:[%s0 + $0xc] sm:$0xf]
  %v18 = vld [vmem:[%s0 + $0x10] sm:$0xf]
  %v19 = vld [vmem:[%s0 + $0x14] sm:$0xf]
  %v20 = vld [vmem:[%s0 + $0x18] sm:$0xf]
  %v21 = vld [vmem:[%s0 + $0x1c] sm:$0xf]
  %v22 = vld [vmem:[%s0 + $0x20] sm:$0xf]
  %v23 = vld [vmem:[%s0 + $0x24] sm:$0xf]
  %v24 = vld [vmem:[%s0 + $0x28] sm:$0xf]
  %v25 = vld [vmem:[%s0 + $0x2c] sm:$0xf]
  %v26 = vld [vmem:[%s0 + $0x30] sm:$0xf]
  %v27 = vld [vmem:[%s0 + $0x34] sm:$0xf]
  %v28 = vld [vmem:[%s0 + $0x38] sm:$0xf]
  %v29 = vld [vmem:[%s0 + $0x3c] sm:$0xf]
  %v30 = vld [vmem:[%s1] sm:$0xf]
  %v31 = vld [vmem:[%s1 + $0x4] sm:$0xf]
  %v32 = vld [vmem:[%s1 + $0x8] sm:$0xf]
  %v33 = vld [vmem:[%s1 + $0xc] sm:$0xf]
  %v34 = vld [vmem:[%s1 + $0x10] sm:$0xf]
  %v35 = vld [vmem:[%s1 + $0x14] sm:$0xf]
  %v36 = vld [vmem:[%s1 + $0x18] sm:$0xf]
  %v37 = vld [vmem:[%s1 + $0x1c] sm:$0xf]
  %v38 = vld [vmem:[%s1 + $0x20] sm:$0xf]
  %v39 = vld [vmem:[%s1 + $0x24] sm:$0xf]
  %v40 = vld [vmem:[%s1 + $0x28] sm:$0xf]
  %v41 = vld [vmem:[%s1 + $0x2c] sm:$0xf]
  %v42 = vld [vmem:[%s1 + $0x30] sm:$0xf]
  %v43 = vld [vmem:[%s1 + $0x34] sm:$0xf]
  %v44 = vld [vmem:[%s1 + $0x38] sm:$0xf]
  %v45 = vld [vmem:[%s1 + $0x3c] sm:$0xf]
  %v46 = vld [vmem:[%s2] sm:$0x1]
  %v48 = vperm.slane %v46, 0
  %v66 = vunpack.c.l.b16 %v14
  %v67 = vunpack.c.l.b16 %v15
  %v68 = vunpack.c.l.b16 %v16
  %v69 = vunpack.c.l.b16 %v17
  %v70 = vunpack.c.l.b16 %v18
  %v71 = vunpack.c.l.b16 %v19
  %v72 = vunpack.c.l.b16 %v20
  %v73 = vunpack.c.l.b16 %v21
  %v74 = vunpack.c.l.b16 %v22
  %v75 = vunpack.c.l.b16 %v23
  %v76 = vunpack.c.l.b16 %v24
  %v77 = vunpack.c.l.b16 %v25
  %v78 = vunpack.c.l.b16 %v26
  %v79 = vunpack.c.l.b16 %v27
  %v80 = vunpack.c.l.b16 %v28
  %v81 = vunpack.c.l.b16 %v29
  %v82 = vpack.c.b16 %v67, %v66
  %v83 = vpack.c.b16 %v69, %v68
  %v84 = vpack.c.b16 %v71, %v70
  %v85 = vpack.c.b16 %v73, %v72
  %v86 = vpack.c.b16 %v75, %v74
  %v87 = vpack.c.b16 %v77, %v76
  %v88 = vpack.c.b16 %v79, %v78
  %v89 = vpack.c.b16 %v81, %v80
  %v114 = vunpack.c.l.b16 %v30
  %v115 = vunpack.c.l.b16 %v31
  %v116 = vunpack.c.l.b16 %v32
  %v117 = vunpack.c.l.b16 %v33
  %v118 = vunpack.c.l.b16 %v34
  %v119 = vunpack.c.l.b16 %v35
  %v120 = vunpack.c.l.b16 %v36
  %v121 = vunpack.c.l.b16 %v37
  %v122 = vunpack.c.l.b16 %v38
  %v123 = vunpack.c.l.b16 %v39
  %v124 = vunpack.c.l.b16 %v40
  %v125 = vunpack.c.l.b16 %v41
  %v126 = vunpack.c.l.b16 %v42
  %v127 = vunpack.c.l.b16 %v43
  %v128 = vunpack.c.l.b16 %v44
  %v129 = vunpack.c.l.b16 %v45
  %v130 = vpack.c.b16 %v115, %v114
  %v131 = vpack.c.b16 %v117, %v116
  %v132 = vpack.c.b16 %v119, %v118
  %v133 = vpack.c.b16 %v121, %v120
  %v134 = vpack.c.b16 %v123, %v122
  %v135 = vpack.c.b16 %v125, %v124
  %v136 = vpack.c.b16 %v127, %v126
  %v137 = vpack.c.b16 %v129, %v128
  %146 = vmatpush.bf16.msra.mxu0 %v137
  %147 = vmatpush.bf16.msra.mxu0 %v136
  %148 = vmatpush.bf16.msra.mxu0 %v135
  %149 = vmatpush.bf16.msra.mxu0 %v134
  %150 = vmatpush.bf16.msra.mxu0 %v133
  %151 = vmatpush.bf16.msra.mxu0 %v132
  %152 = vmatpush.bf16.msra.mxu0 %v131
  %153 = vmatpush.bf16.msra.mxu0 %v130
  %154 = vmatmul.bf16.gmra.mxu0 %v82
  %v155 = vpop.f32.mrf.mxu0
  %v156 = vadd.f32 %v48, %v155
  %v157 = vpop.f32.mrf.mxu0
  %v158 = vadd.f32 %v48, %v157
  %159 = vmatmul.bf16.gmra.mxu0 %v83
  %v160 = vpop.f32.mrf.mxu0
  %v161 = vadd.f32 %v48, %v160
  %v162 = vpop.f32.mrf.mxu0
  %v163 = vadd.f32 %v48, %v162
  %164 = vmatmul.bf16.gmra.mxu0 %v84
  %v165 = vpop.f32.mrf.mxu0
  %v166 = vadd.f32 %v48, %v165
  %v167 = vpop.f32.mrf.mxu0
  %v168 = vadd.f32 %v48, %v167
  %169 = vmatmul.bf16.gmra.mxu0 %v85
  %v170 = vpop.f32.mrf.mxu0
  %v171 = vadd.f32 %v48, %v170
  %v172 = vpop.f32.mrf.mxu0
  %v173 = vadd.f32 %v48, %v172
  %174 = vmatmul.bf16.gmra.mxu0 %v86
  %v175 = vpop.f32.mrf.mxu0
  %v176 = vadd.f32 %v48, %v175
  %v177 = vpop.f32.mrf.mxu0
  %v178 = vadd.f32 %v48, %v177
  %179 = vmatmul.bf16.gmra.mxu0 %v87
  %v180 = vpop.f32.mrf.mxu0
  %v181 = vadd.f32 %v48, %v180
  %v182 = vpop.f32.mrf.mxu0
  %v183 = vadd.f32 %v48, %v182
  %184 = vmatmul.bf16.gmra.mxu0 %v88
  %v185 = vpop.f32.mrf.mxu0
  %v186 = vadd.f32 %v48, %v185
  %v187 = vpop.f32.mrf.mxu0
  %v188 = vadd.f32 %v48, %v187
  %189 = vmatmul.bf16.gmra.mxu0 %v89
  %v190 = vpop.f32.mrf.mxu0
  %v191 = vadd.f32 %v48, %v190
  %v192 = vpop.f32.mrf.mxu0
  %v193 = vadd.f32 %v48, %v192
  %194 = vdwg.mxu0
  %v195 = vmax.f32 %v156, 0.0
  %v196 = vmax.f32 %v158, 0.0
  %v197 = vmax.f32 %v161, 0.0
  %v198 = vmax.f32 %v163, 0.0
  %v199 = vmax.f32 %v166, 0.0
  %v200 = vmax.f32 %v168, 0.0
  %v201 = vmax.f32 %v171, 0.0
  %v202 = vmax.f32 %v173, 0.0
  %v203 = vmax.f32 %v176, 0.0
  %v204 = vmax.f32 %v178, 0.0
  %v205 = vmax.f32 %v181, 0.0
  %v206 = vmax.f32 %v183, 0.0
  %v207 = vmax.f32 %v186, 0.0
  %v208 = vmax.f32 %v188, 0.0
  %v209 = vmax.f32 %v191, 0.0
  %v210 = vmax.f32 %v193, 0.0
  %v211 = vpack.c.bf16 %v195, %v195
  %v212 = vpack.c.bf16 %v196, %v196
  %v213 = vpack.c.bf16 %v197, %v197
  %v214 = vpack.c.bf16 %v198, %v198
  %v215 = vpack.c.bf16 %v199, %v199
  %v216 = vpack.c.bf16 %v200, %v200
  %v217 = vpack.c.bf16 %v201, %v201
  %v218 = vpack.c.bf16 %v202, %v202
  %v219 = vpack.c.bf16 %v203, %v203
  %v220 = vpack.c.bf16 %v204, %v204
  %v221 = vpack.c.bf16 %v205, %v205
  %v222 = vpack.c.bf16 %v206, %v206
  %v223 = vpack.c.bf16 %v207, %v207
  %v224 = vpack.c.bf16 %v208, %v208
  %v225 = vpack.c.bf16 %v209, %v209
  %v226 = vpack.c.bf16 %v210, %v210
  %227 = vst [vmem:[%s3] sm:$0xf] %v211
  %228 = vst [vmem:[%s3 + $0x4] sm:$0xf] %v212
  %229 = vst [vmem:[%s3 + $0x8] sm:$0xf] %v213
  %230 = vst [vmem:[%s3 + $0xc] sm:$0xf] %v214
  %231 = vst [vmem:[%s3 + $0x10] sm:$0xf] %v215
  %232 = vst [vmem:[%s3 + $0x14] sm:$0xf] %v216
  %233 = vst [vmem:[%s3 + $0x18] sm:$0xf] %v217
  %234 = vst [vmem:[%s3 + $0x1c] sm:$0xf] %v218
  %235 = vst [vmem:[%s3 + $0x20] sm:$0xf] %v219
  %236 = vst [vmem:[%s3 + $0x24] sm:$0xf] %v220
  %237 = vst [vmem:[%s3 + $0x28] sm:$0xf] %v221
  %238 = vst [vmem:[%s3 + $0x2c] sm:$0xf] %v222
  %239 = vst [vmem:[%s3 + $0x30] sm:$0xf] %v223
  %240 = vst [vmem:[%s3 + $0x34] sm:$0xf] %v224
  %241 = vst [vmem:[%s3 + $0x38] sm:$0xf] %v225
  %242 = vst [vmem:[%s3 + $0x3c] sm:$0xf] %v226
  // Predicated region
  $region14: #{resnet_forward.20} parent=0 // pred_check
    _
  $region15: #{resnet_forward.20} parent=0 // pred_check_branch
    %244 = sbr.rel (0) target = $region17
  $region16: #{resnet_forward.20} parent=0 // pred_region
    _
  $region17: #{resnet_forward.20} parent=0 // pred_fallthru
    _
  // Predicated region
  $region18: #{resnet_forward.20} parent=0 // pred_check
    _
  $region19: #{resnet_forward.20} parent=0 // pred_check_branch
    %246 = sbr.rel (0) target = $region21
  $region20: #{resnet_forward.20} parent=0 // pred_region
    _
  $region21: #{resnet_forward.20} parent=0 // pred_fallthru
    _

// kernel: resnet_forward.24
$region0: #{resnet_forward.24}
  #allocation0 [shape = 'u32[]', space=smem, size = 0x4, offset = 0x4, fixed_abs, tag = 'smem constant byte address 0x4 - core index']
  #allocation1 [shape = 'u32[72,128]{1,0:T(1,128)}', space=vmem, size = 0x9000, scoped, tag = 'internal scratch']
  %s0 = inlined_call_operand.vmem [shape: bf16[32,128], index: 0, kind: input, shape index: {}]
  %s1 = inlined_call_operand.vmem [shape: bf16[128,128], index: 1, kind: input, shape index: {}]
  %s2 = inlined_call_operand.vmem [shape: f32[1,128], index: 2, kind: input, shape index: {}]
  %s3 = inlined_call_operand.vmem [shape: bf16[32,128], index: 3, kind: output, shape index: {}]
  %s4 = sld [smem:[#allocation0]]
  $region22: #{resnet_forward.24} parent=0
    _
  %s6 = ssub.s32 1, %s4
  %s7 = scalar_select 0, %s6, %s4
  // Predicated region
  $region2: #{resnet_forward.24} parent=0 // pred_check
    _
  $region3: #{resnet_forward.24} parent=0 // pred_check_branch
    %9 = sbr.rel (0) target = $region5
  $region4: #{resnet_forward.24} parent=0 // pred_region
    _
  $region5: #{resnet_forward.24} parent=0 // pred_fallthru
    _
  // Predicated region
  $region6: #{resnet_forward.24} parent=0 // pred_check
    _
  $region7: #{resnet_forward.24} parent=0 // pred_check_branch
    %11 = sbr.rel (0) target = $region9
  $region8: #{resnet_forward.24} parent=0 // pred_region
    _
  $region9: #{resnet_forward.24} parent=0 // pred_fallthru
    _
  // Predicated region
  $region10: #{resnet_forward.24} parent=0 // pred_check
    _
  $region11: #{resnet_forward.24} parent=0 // pred_check_branch
    %13 = sbr.rel (0) target = $region13
  $region12: #{resnet_forward.24} parent=0 // pred_region
    _
  $region13: #{resnet_forward.24} parent=0 // pred_fallthru
    _
  %v14 = vld [vmem:[%s0] sm:$0xf]
  %v15 = vld [vmem:[%s0 + $0x4] sm:$0xf]
  %v16 = vld [vmem:[%s0 + $0x8] sm:$0xf]
  %v17 = vld [vmem:[%s0 + $0xc] sm:$0xf]
  %v18 = vld [vmem:[%s1] sm:$0xf]
  %v19 = vld [vmem:[%s1 + $0x4] sm:$0xf]
  %v20 = vld [vmem:[%s1 + $0x8] sm:$0xf]
  %v21 = vld [vmem:[%s1 + $0xc] sm:$0xf]
  %v22 = vld [vmem:[%s1 + $0x10] sm:$0xf]
  %v23 = vld [vmem:[%s1 + $0x14] sm:$0xf]
  %v24 = vld [vmem:[%s1 + $0x18] sm:$0xf]
  %v25 = vld [vmem:[%s1 + $0x1c] sm:$0xf]
  %v26 = vld [vmem:[%s1 + $0x20] sm:$0xf]
  %v27 = vld [vmem:[%s1 + $0x24] sm:$0xf]
  %v28 = vld [vmem:[%s1 + $0x28] sm:$0xf]
  %v29 = vld [vmem:[%s1 + $0x2c] sm:$0xf]
  %v30 = vld [vmem:[%s1 + $0x30] sm:$0xf]
  %v31 = vld [vmem:[%s1 + $0x34] sm:$0xf]
  %v32 = vld [vmem:[%s1 + $0x38] sm:$0xf]
  %v33 = vld [vmem:[%s1 + $0x3c] sm:$0xf]
  %v34 = vld [vmem:[%s2] sm:$0x1]
  %v36 = vperm.slane %v34, 0
  %v42 = vunpack.c.l.b16 %v14
  %v43 = vunpack.c.l.b16 %v15
  %v44 = vunpack.c.l.b16 %v16
  %v45 = vunpack.c.l.b16 %v17
  %v46 = vpack.c.b16 %v43, %v42
  %v47 = vpack.c.b16 %v45, %v44
  %v66 = vunpack.c.l.b16 %v18
  %v67 = vunpack.c.l.b16 %v19
  %v68 = vunpack.c.l.b16 %v20
  %v69 = vunpack.c.l.b16 %v21
  %v70 = vunpack.c.l.b16 %v22
  %v71 = vunpack.c.l.b16 %v23
  %v72 = vunpack.c.l.b16 %v24
  %v73 = vunpack.c.l.b16 %v25
  %v74 = vunpack.c.l.b16 %v26
  %v75 = vunpack.c.l.b16 %v27
  %v76 = vunpack.c.l.b16 %v28
  %v77 = vunpack.c.l.b16 %v29
  %v78 = vunpack.c.l.b16 %v30
  %v79 = vunpack.c.l.b16 %v31
  %v80 = vunpack.c.l.b16 %v32
  %v81 = vunpack.c.l.b16 %v33
  %v82 = vpack.c.b16 %v67, %v66
  %v83 = vpack.c.b16 %v69, %v68
  %v84 = vpack.c.b16 %v71, %v70
  %v85 = vpack.c.b16 %v73, %v72
  %v86 = vpack.c.b16 %v75, %v74
  %v87 = vpack.c.b16 %v77, %v76
  %v88 = vpack.c.b16 %v79, %v78
  %v89 = vpack.c.b16 %v81, %v80
  %98 = vmatpush.bf16.msra.mxu0 %v89
  %99 = vmatpush.bf16.msra.mxu0 %v88
  %100 = vmatpush.bf16.msra.mxu0 %v87
  %101 = vmatpush.bf16.msra.mxu0 %v86
  %102 = vmatpush.bf16.msra.mxu0 %v85
  %103 = vmatpush.bf16.msra.mxu0 %v84
  %104 = vmatpush.bf16.msra.mxu0 %v83
  %105 = vmatpush.bf16.msra.mxu0 %v82
  %106 = vmatmul.bf16.gmra.mxu0 %v46
  %v107 = vpop.f32.mrf.mxu0
  %v108 = vadd.f32 %v36, %v107
  %v109 = vpop.f32.mrf.mxu0
  %v110 = vadd.f32 %v36, %v109
  %111 = vmatmul.bf16.gmra.mxu0 %v47
  %v112 = vpop.f32.mrf.mxu0
  %v113 = vadd.f32 %v36, %v112
  %v114 = vpop.f32.mrf.mxu0
  %v115 = vadd.f32 %v36, %v114
  %116 = vdwg.mxu0
  %v117 = vmax.f32 %v108, 0.0
  %v118 = vmax.f32 %v110, 0.0
  %v119 = vmax.f32 %v113, 0.0
  %v120 = vmax.f32 %v115, 0.0
  %v121 = vpack.c.bf16 %v117, %v117
  %v122 = vpack.c.bf16 %v118, %v118
  %v123 = vpack.c.bf16 %v119, %v119
  %v124 = vpack.c.bf16 %v120, %v120
  %125 = vst [vmem:[%s3] sm:$0xf] %v121
  %126 = vst [vmem:[%s3 + $0x4] sm:$0xf] %v122
  %127 = vst [vmem:[%s3 + $0x8] sm:$0xf] %v123
  %128 = vst [vmem:[%s3 + $0xc] sm:$0xf] %v124
  // Predicated region
  $region14: #{resnet_forward.24} parent=0 // pred_check
    _
  $region15: #{resnet_forward.24} parent=0 // pred_check_branch
    %130 = sbr.rel (0) target = $region17
  $region16: #{resnet_forward.24} parent=0 // pred_region
    _
  $region17: #{resnet_forward.24} parent=0 // pred_fallthru
    _
  // Predicated region
  $region18: #{resnet_forward.24} parent=0 // pred_check
    _
  $region19: #{resnet_forward.24} parent=0 // pred_check_branch
    %132 = sbr.rel (0) target = $region21
  $region20: #{resnet_forward.24} parent=0 // pred_region
    _
  $region21: #{resnet_forward.24} parent=0 // pred_fallthru
    _

// kernel: resnet_forward.25
$region0: #{resnet_forward.25}
  #allocation0 [shape = 'u32[]', space=smem, size = 0x4, offset = 0x4, fixed_abs, tag = 'smem constant byte address 0x4 - core index']
  #allocation1 [shape = 'u32[72,128]{1,0:T(1,128)}', space=vmem, size = 0x9000, scoped, tag = 'internal scratch']
  %s0 = inlined_call_operand.vmem [shape: bf16[32,384], index: 0, kind: input, shape index: {}]
  %s1 = inlined_call_operand.vmem [shape: bf16[384,128], index: 1, kind: input, shape index: {}]
  %s2 = inlined_call_operand.vmem [shape: f32[1,128], index: 2, kind: input, shape index: {}]
  %s3 = inlined_call_operand.vmem [shape: bf16[32,128], index: 3, kind: output, shape index: {}]
  %s4 = sld [smem:[#allocation0]]
  $region22: #{resnet_forward.25} parent=0
    _
  %s6 = ssub.s32 1, %s4
  %s7 = scalar_select 0, %s6, %s4
  // Predicated region
  $region2: #{resnet_forward.25} parent=0 // pred_check
    _
  $region3: #{resnet_forward.25} parent=0 // pred_check_branch
    %9 = sbr.rel (0) target = $region5
  $region4: #{resnet_forward.25} parent=0 // pred_region
    _
  $region5: #{resnet_forward.25} parent=0 // pred_fallthru
    _
  // Predicated region
  $region6: #{resnet_forward.25} parent=0 // pred_check
    _
  $region7: #{resnet_forward.25} parent=0 // pred_check_branch
    %11 = sbr.rel (0) target = $region9
  $region8: #{resnet_forward.25} parent=0 // pred_region
    _
  $region9: #{resnet_forward.25} parent=0 // pred_fallthru
    _
  // Predicated region
  $region10: #{resnet_forward.25} parent=0 // pred_check
    _
  $region11: #{resnet_forward.25} parent=0 // pred_check_branch
    %13 = sbr.rel (0) target = $region13
  $region12: #{resnet_forward.25} parent=0 // pred_region
    _
  $region13: #{resnet_forward.25} parent=0 // pred_fallthru
    _
  %v14 = vld [vmem:[%s0] sm:$0xff]
  %v15 = vld [vmem:[%s0 + $0x8] sm:$0xf]
  %v16 = vld [vmem:[%s0 + $0xc] sm:$0xff]
  %v17 = vld [vmem:[%s0 + $0x14] sm:$0xf]
  %v18 = vld [vmem:[%s0 + $0x18] sm:$0xff]
  %v19 = vld [vmem:[%s0 + $0x20] sm:$0xf]
  %v20 = vld [vmem:[%s0 + $0x24] sm:$0xff]
  %v21 = vld [vmem:[%s0 + $0x2c] sm:$0xf]
  %v22 = vld [vmem:[%s1] sm:$0xf]
  %v23 = vld [vmem:[%s1 + $0x4] sm:$0xf]
  %v24 = vld [vmem:[%s1 + $0x8] sm:$0xf]
  %v25 = vld [vmem:[%s1 + $0xc] sm:$0xf]
  %v26 = vld [vmem:[%s1 + $0x10] sm:$0xf]
  %v27 = vld [vmem:[%s1 + $0x14] sm:$0xf]
  %v28 = vld [vmem:[%s1 + $0x18] sm:$0xf]
  %v29 = vld [vmem:[%s1 + $0x1c] sm:$0xf]
  %v30 = vld [vmem:[%s1 + $0x20] sm:$0xf]
  %v31 = vld [vmem:[%s1 + $0x24] sm:$0xf]
  %v32 = vld [vmem:[%s1 + $0x28] sm:$0xf]
  %v33 = vld [vmem:[%s1 + $0x2c] sm:$0xf]
  %v34 = vld [vmem:[%s1 + $0x30] sm:$0xf]
  %v35 = vld [vmem:[%s1 + $0x34] sm:$0xf]
  %v36 = vld [vmem:[%s1 + $0x38] sm:$0xf]
  %v37 = vld [vmem:[%s1 + $0x3c] sm:$0xf]
  %v38 = vld [vmem:[%s1 + $0x40] sm:$0xf]
  %v39 = vld [vmem:[%s1 + $0x44] sm:$0xf]
  %v40 = vld [vmem:[%s1 + $0x48] sm:$0xf]
  %v41 = vld [vmem:[%s1 + $0x4c] sm:$0xf]
  %v42 = vld [vmem:[%s1 + $0x50] sm:$0xf]
  %v43 = vld [vmem:[%s1 + $0x54] sm:$0xf]
  %v44 = vld [vmem:[%s1 + $0x58] sm:$0xf]
  %v45 = vld [vmem:[%s1 + $0x5c] sm:$0xf]
  %v46 = vld [vmem:[%s1 + $0x60] sm:$0xf]
  %v47 = vld [vmem:[%s1 + $0x64] sm:$0xf]
  %v48 = vld [vmem:[%s1 + $0x68] sm:$0xf]
  %v49 = vld [vmem:[%s1 + $0x6c] sm:$0xf]
  %v50 = vld [vmem:[%s1 + $0x70] sm:$0xf]
  %v51 = vld [vmem:[%s1 + $0x74] sm:$0xf]
  %v52 = vld [vmem:[%s1 + $0x78] sm:$0xf]
  %v53 = vld [vmem:[%s1 + $0x7c] sm:$0xf]
  %v54 = vld [vmem:[%s1 + $0x80] sm:$0xf]
  %v55 = vld [vmem:[%s1 + $0x84] sm:$0xf]
  %v56 = vld [vmem:[%s1 + $0x88] sm:$0xf]
  %v57 = vld [vmem:[%s1 + $0x8c] sm:$0xf]
  %v58 = vld [vmem:[%s1 + $0x90] sm:$0xf]
  %v59 = vld [vmem:[%s1 + $0x94] sm:$0xf]
  %v60 = vld [vmem:[%s1 + $0x98] sm:$0xf]
  %v61 = vld [vmem:[%s1 + $0x9c] sm:$0xf]
  %v62 = vld [vmem:[%s1 + $0xa0] sm:$0xf]
  %v63 = vld [vmem:[%s1 + $0xa4] sm:$0xf]
  %v64 = vld [vmem:[%s1 + $0xa8] sm:$0xf]
  %v65 = vld [vmem:[%s1 + $0xac] sm:$0xf]
  %v66 = vld [vmem:[%s1 + $0xb0] sm:$0xf]
  %v67 = vld [vmem:[%s1 + $0xb4] sm:$0xf]
  %v68 = vld [vmem:[%s1 + $0xb8] sm:$0xf]
  %v69 = vld [vmem:[%s1 + $0xbc] sm:$0xf]
  %v70 = vld [vmem:[%s2] sm:$0x1]
  %v72 = vperm.slane %v70, 0
  %v82 = vunpack.c.l.b16 %v14
  %v83 = vunpack.c.h.b16 %v14
  %v84 = vunpack.c.l.b16 %v15
  %v85 = vunpack.c.l.b16 %v16
  %v86 = vunpack.c.h.b16 %v16
  %v87 = vunpack.c.l.b16 %v17
  %v88 = vunpack.c.l.b16 %v18
  %v89 = vunpack.c.h.b16 %v18
  %v90 = vunpack.c.l.b16 %v19
  %v91 = vunpack.c.l.b16 %v20
  %v92 = vunpack.c.h.b16 %v20
  %v93 = vunpack.c.l.b16 %v21
  %v94 = vpack.c.b16 %v85, %v82
  %v95 = vpack.c.b16 %v86, %v83
  %v96 = vpack.c.b16 %v87, %v84
  %v97 = vpack.c.b16 %v91, %v88
  %v98 = vpack.c.b16 %v92, %v89
  %v99 = vpack.c.b16 %v93, %v90
  %v154 = vunpack.c.l.b16 %v22
  %v155 = vunpack.c.l.b16 %v23
  %v156 = vunpack.c.l.b16 %v24
  %v157 = vunpack.c.l.b16 %v25
  %v158 = vunpack.c.l.b16 %v26
  %v159 = vunpack.c.l.b16 %v27
  %v160 = vunpack.c.l.b16 %v28
  %v161 = vunpack.c.l.b16 %v29
  %v162 = vunpack.c.l.b16 %v30
  %v163 = vunpack.c.l.b16 %v31
  %v164 = vunpack.c.l.b16 %v32
  %v165 = vunpack.c.l.b16 %v33
  %v166 = vunpack.c.l.b16 %v34
  %v167 = vunpack.c.l.b16 %v35
  %v168 = vunpack.c.l.b16 %v36
  %v169 = vunpack.c.l.b16 %v37
  %v170 = vunpack.c.l.b16 %v38
  %v171 = vunpack.c.l.b16 %v39
  %v172 = vunpack.c.l.b16 %v40
  %v173 = vunpack.c.l.b16 %v41
  %v174 = vunpack.c.l.b16 %v42
  %v175 = vunpack.c.l.b16 %v43
  %v176 = vunpack.c.l.b16 %v44
  %v177 = vunpack.c.l.b16 %v45
  %v178 = vunpack.c.l.b16 %v46
  %v179 = vunpack.c.l.b16 %v47
  %v180 = vunpack.c.l.b16 %v48
  %v181 = vunpack.c.l.b16 %v49
  %v182 = vunpack.c.l.b16 %v50
  %v183 = vunpack.c.l.b16 %v51
  %v184 = vunpack.c.l.b16 %v52
  %v185 = vunpack.c.l.b16 %v53
  %v186 = vunpack.c.l.b16 %v54
  %v187 = vunpack.c.l.b16 %v55
  %v188 = vunpack.c.l.b16 %v56
  %v189 = vunpack.c.l.b16 %v57
  %v190 = vunpack.c.l.b16 %v58
  %v191 = vunpack.c.l.b16 %v59
  %v192 = vunpack.c.l.b16 %v60
  %v193 = vunpack.c.l.b16 %v61
  %v194 = vunpack.c.l.b16 %v62
  %v195 = vunpack.c.l.b16 %v63
  %v196 = vunpack.c.l.b16 %v64
  %v197 = vunpack.c.l.b16 %v65
  %v198 = vunpack.c.l.b16 %v66
  %v199 = vunpack.c.l.b16 %v67
  %v200 = vunpack.c.l.b16 %v68
  %v201 = vunpack.c.l.b16 %v69
  %v202 = vpack.c.b16 %v155, %v154
  %v203 = vpack.c.b16 %v157, %v156
  %v204 = vpack.c.b16 %v159, %v158
  %v205 = vpack.c.b16 %v161, %v160
  %v206 = vpack.c.b16 %v163, %v162
  %v207 = vpack.c.b16 %v165, %v164
  %v208 = vpack.c.b16 %v167, %v166
  %v209 = vpack.c.b16 %v169, %v168
  %v210 = vpack.c.b16 %v171, %v170
  %v211 = vpack.c.b16 %v173, %v172
  %v212 = vpack.c.b16 %v175, %v174
  %v213 = vpack.c.b16 %v177, %v176
  %v214 = vpack.c.b16 %v179, %v178
  %v215 = vpack.c.b16 %v181, %v180
  %v216 = vpack.c.b16 %v183, %v182
  %v217 = vpack.c.b16 %v185, %v184
  %v218 = vpack.c.b16 %v187, %v186
  %v219 = vpack.c.b16 %v189, %v188
  %v220 = vpack.c.b16 %v191, %v190
  %v221 = vpack.c.b16 %v193, %v192
  %v222 = vpack.c.b16 %v195, %v194
  %v223 = vpack.c.b16 %v197, %v196
  %v224 = vpack.c.b16 %v199, %v198
  %v225 = vpack.c.b16 %v201, %v200
  %250 = vmatpush.bf16.msra.mxu0 %v209
  %251 = vmatpush.bf16.msra.mxu0 %v208
  %252 = vmatpush.bf16.msra.mxu0 %v207
  %253 = vmatpush.bf16.msra.mxu0 %v206
  %254 = vmatpush.bf16.msra.mxu0 %v205
  %255 = vmatpush.bf16.msra.mxu0 %v204
  %256 = vmatpush.bf16.msra.mxu0 %v203
  %257 = vmatpush.bf16.msra.mxu0 %v202
  %258 = vmatmul.bf16.gmra.mxu0 %v94
  %v259 = vpop.f32.mrf.mxu0
  %v260 = vadd.f32 %v72, %v259
  %v261 = vpop.f32.mrf.mxu0
  %v262 = vadd.f32 %v72, %v261
  %263 = vmatmul.bf16.gmra.mxu0 %v97
  %v264 = vpop.f32.mrf.mxu0
  %v265 = vadd.f32 %v72, %v264
  %v266 = vpop.f32.mrf.mxu0
  %v267 = vadd.f32 %v72, %v266
  %268 = vdwg.mxu0
  %269 = vmatpush.bf16.msra.mxu0 %v217
  %270 = vmatpush.bf16.msra.mxu0 %v216
  %271 = vmatpush.bf16.msra.mxu0 %v215
  %272 = vmatpush.bf16.msra.mxu0 %v214
  %273 = vmatpush.bf16.msra.mxu0 %v213
  %274 = vmatpush.bf16.msra.mxu0 %v212
  %275 = vmatpush.bf16.msra.mxu0 %v211
  %276 = vmatpush.bf16.msra.mxu0 %v210
  %277 = vmatmul.bf16.gmra.mxu0 %v95
  %v278 = vpop.f32.mrf.mxu0
  %v279 = vadd.f32 %v260, %v278
  %v280 = vpop.f32.mrf.mxu0
  %v281 = vadd.f32 %v262, %v280
  %282 = vmatmul.bf16.gmra.mxu0 %v98
  %v283 = vpop.f32.mrf.mxu0
  %v284 = vadd.f32 %v265, %v283
  %v285 = vpop.f32.mrf.mxu0
  %v286 = vadd.f32 %v267, %v285
  %287 = vdwg.mxu0
  %288 = vmatpush.bf16.msra.mxu0 %v225
  %289 = vmatpush.bf16.msra.mxu0 %v224
  %290 = vmatpush.bf16.msra.mxu0 %v223
  %291 = vmatpush.bf16.msra.mxu0 %v222
  %292 = vmatpush.bf16.msra.mxu0 %v221
  %293 = vmatpush.bf16.msra.mxu0 %v220
  %294 = vmatpush.bf16.msra.mxu0 %v219
  %295 = vmatpush.bf16.msra.mxu0 %v218
  %296 = vmatmul.bf16.gmra.mxu0 %v96
  %v297 = vpop.f32.mrf.mxu0
  %v298 = vadd.f32 %v279, %v297
  %v299 = vpop.f32.mrf.mxu0
  %v300 = vadd.f32 %v281, %v299
  %301 = vmatmul.bf16.gmra.mxu0 %v99
  %v302 = vpop.f32.mrf.mxu0
  %v303 = vadd.f32 %v284, %v302
  %v304 = vpop.f32.mrf.mxu0
  %v305 = vadd.f32 %v286, %v304
  %306 = vdwg.mxu0
  %v307 = vmax.f32 %v298, 0.0
  %v308 = vmax.f32 %v300, 0.0
  %v309 = vmax.f32 %v303, 0.0
  %v310 = vmax.f32 %v305, 0.0
  %v311 = vpack.c.bf16 %v307, %v307
  %v312 = vpack.c.bf16 %v308, %v308
  %v313 = vpack.c.bf16 %v309, %v309
  %v314 = vpack.c.bf16 %v310, %v310
  %315 = vst [vmem:[%s3] sm:$0xf] %v311
  %316 = vst [vmem:[%s3 + $0x4] sm:$0xf] %v312
  %317 = vst [vmem:[%s3 + $0x8] sm:$0xf] %v313
  %318 = vst [vmem:[%s3 + $0xc] sm:$0xf] %v314
  // Predicated region
  $region14: #{resnet_forward.25} parent=0 // pred_check
    _
  $region15: #{resnet_forward.25} parent=0 // pred_check_branch
    %320 = sbr.rel (0) target = $region17
  $region16: #{resnet_forward.25} parent=0 // pred_region
    _
  $region17: #{resnet_forward.25} parent=0 // pred_fallthru
    _
  // Predicated region
  $region18: #{resnet_forward.25} parent=0 // pred_check
    _
  $region19: #{resnet_forward.25} parent=0 // pred_check_branch
    %322 = sbr.rel (0) target = $region21
  $region20: #{resnet_forward.25} parent=0 // pred_region
    _
  $region21: #{resnet_forward.25} parent=0 // pred_fallthru
    _

// kernel: resnet_forward.26
$region0: #{resnet_forward.26}
  #allocation0 [shape = 'u32[]', space=smem, size = 0x4, offset = 0x4, fixed_abs, tag = 'smem constant byte address 0x4 - core index']
  #allocation1 [shape = 'u32[72,128]{1,0:T(1,128)}', space=vmem, size = 0x9000, scoped, tag = 'internal scratch']
  %s0 = inlined_call_operand.vmem [shape: bf16[32,256], index: 0, kind: input, shape index: {}]
  %s1 = inlined_call_operand.vmem [shape: bf16[256,128], index: 1, kind: input, shape index: {}]
  %s2 = inlined_call_operand.vmem [shape: f32[1,128], index: 2, kind: input, shape index: {}]
  %s3 = inlined_call_operand.vmem [shape: bf16[32,128], index: 3, kind: output, shape index: {}]
  %s4 = sld [smem:[#allocation0]]
  $region22: #{resnet_forward.26} parent=0
    _
  %s6 = ssub.s32 1, %s4
  %s7 = scalar_select 0, %s6, %s4
  // Predicated region
  $region2: #{resnet_forward.26} parent=0 // pred_check
    _
  $region3: #{resnet_forward.26} parent=0 // pred_check_branch
    %9 = sbr.rel (0) target = $region5
  $region4: #{resnet_forward.26} parent=0 // pred_region
    _
  $region5: #{resnet_forward.26} parent=0 // pred_fallthru
    _
  // Predicated region
  $region6: #{resnet_forward.26} parent=0 // pred_check
    _
  $region7: #{resnet_forward.26} parent=0 // pred_check_branch
    %11 = sbr.rel (0) target = $region9
  $region8: #{resnet_forward.26} parent=0 // pred_region
    _
  $region9: #{resnet_forward.26} parent=0 // pred_fallthru
    _
  // Predicated region
  $region10: #{resnet_forward.26} parent=0 // pred_check
    _
  $region11: #{resnet_forward.26} parent=0 // pred_check_branch
    %13 = sbr.rel (0) target = $region13
  $region12: #{resnet_forward.26} parent=0 // pred_region
    _
  $region13: #{resnet_forward.26} parent=0 // pred_fallthru
    _
  %v14 = vld [vmem:[%s0] sm:$0xff]
  %v15 = vld [vmem:[%s0 + $0x8] sm:$0xff]
  %v16 = vld [vmem:[%s0 + $0x10] sm:$0xff]
  %v17 = vld [vmem:[%s0 + $0x18] sm:$0xff]
  %v18 = vld [vmem:[%s1] sm:$0xf]
  %v19 = vld [vmem:[%s1 + $0x4] sm:$0xf]
  %v20 = vld [vmem:[%s1 + $0x8] sm:$0xf]
  %v21 = vld [vmem:[%s1 + $0xc] sm:$0xf]
  %v22 = vld [vmem:[%s1 + $0x10] sm:$0xf]
  %v23 = vld [vmem:[%s1 + $0x14] sm:$0xf]
  %v24 = vld [vmem:[%s1 + $0x18] sm:$0xf]
  %v25 = vld [vmem:[%s1 + $0x1c] sm:$0xf]
  %v26 = vld [vmem:[%s1 + $0x20] sm:$0xf]
  %v27 = vld [vmem:[%s1 + $0x24] sm:$0xf]
  %v28 = vld [vmem:[%s1 + $0x28] sm:$0xf]
  %v29 = vld [vmem:[%s1 + $0x2c] sm:$0xf]
  %v30 = vld [vmem:[%s1 + $0x30] sm:$0xf]
  %v31 = vld [vmem:[%s1 + $0x34] sm:$0xf]
  %v32 = vld [vmem:[%s1 + $0x38] sm:$0xf]
  %v33 = vld [vmem:[%s1 + $0x3c] sm:$0xf]
  %v34 = vld [vmem:[%s1 + $0x40] sm:$0xf]
  %v35 = vld [vmem:[%s1 + $0x44] sm:$0xf]
  %v36 = vld [vmem:[%s1 + $0x48] sm:$0xf]
  %v37 = vld [vmem:[%s1 + $0x4c] sm:$0xf]
  %v38 = vld [vmem:[%s1 + $0x50] sm:$0xf]
  %v39 = vld [vmem:[%s1 + $0x54] sm:$0xf]
  %v40 = vld [vmem:[%s1 + $0x58] sm:$0xf]
  %v41 = vld [vmem:[%s1 + $0x5c] sm:$0xf]
  %v42 = vld [vmem:[%s1 + $0x60] sm:$0xf]
  %v43 = vld [vmem:[%s1 + $0x64] sm:$0xf]
  %v44 = vld [vmem:[%s1 + $0x68] sm:$0xf]
  %v45 = vld [vmem:[%s1 + $0x6c] sm:$0xf]
  %v46 = vld [vmem:[%s1 + $0x70] sm:$0xf]
  %v47 = vld [vmem:[%s1 + $0x74] sm:$0xf]
  %v48 = vld [vmem:[%s1 + $0x78] sm:$0xf]
  %v49 = vld [vmem:[%s1 + $0x7c] sm:$0xf]
  %v50 = vld [vmem:[%s2] sm:$0x1]
  %v52 = vperm.slane %v50, 0
  %v58 = vunpack.c.l.b16 %v14
  %v59 = vunpack.c.h.b16 %v14
  %v60 = vunpack.c.l.b16 %v15
  %v61 = vunpack.c.h.b16 %v15
  %v62 = vunpack.c.l.b16 %v16
  %v63 = vunpack.c.h.b16 %v16
  %v64 = vunpack.c.l.b16 %v17
  %v65 = vunpack.c.h.b16 %v17
  %v66 = vpack.c.b16 %v60, %v58
  %v67 = vpack.c.b16 %v61, %v59
  %v68 = vpack.c.b16 %v64, %v62
  %v69 = vpack.c.b16 %v65, %v63
  %v106 = vunpack.c.l.b16 %v18
  %v107 = vunpack.c.l.b16 %v19
  %v108 = vunpack.c.l.b16 %v20
  %v109 = vunpack.c.l.b16 %v21
  %v110 = vunpack.c.l.b16 %v22
  %v111 = vunpack.c.l.b16 %v23
  %v112 = vunpack.c.l.b16 %v24
  %v113 = vunpack.c.l.b16 %v25
  %v114 = vunpack.c.l.b16 %v26
  %v115 = vunpack.c.l.b16 %v27
  %v116 = vunpack.c.l.b16 %v28
  %v117 = vunpack.c.l.b16 %v29
  %v118 = vunpack.c.l.b16 %v30
  %v119 = vunpack.c.l.b16 %v31
  %v120 = vunpack.c.l.b16 %v32
  %v121 = vunpack.c.l.b16 %v33
  %v122 = vunpack.c.l.b16 %v34
  %v123 = vunpack.c.l.b16 %v35
  %v124 = vunpack.c.l.b16 %v36
  %v125 = vunpack.c.l.b16 %v37
  %v126 = vunpack.c.l.b16 %v38
  %v127 = vunpack.c.l.b16 %v39
  %v128 = vunpack.c.l.b16 %v40
  %v129 = vunpack.c.l.b16 %v41
  %v130 = vunpack.c.l.b16 %v42
  %v131 = vunpack.c.l.b16 %v43
  %v132 = vunpack.c.l.b16 %v44
  %v133 = vunpack.c.l.b16 %v45
  %v134 = vunpack.c.l.b16 %v46
  %v135 = vunpack.c.l.b16 %v47
  %v136 = vunpack.c.l.b16 %v48
  %v137 = vunpack.c.l.b16 %v49
  %v138 = vpack.c.b16 %v107, %v106
  %v139 = vpack.c.b16 %v109, %v108
  %v140 = vpack.c.b16 %v111, %v110
  %v141 = vpack.c.b16 %v113, %v112
  %v142 = vpack.c.b16 %v115, %v114
  %v143 = vpack.c.b16 %v117, %v116
  %v144 = vpack.c.b16 %v119, %v118
  %v145 = vpack.c.b16 %v121, %v120
  %v146 = vpack.c.b16 %v123, %v122
  %v147 = vpack.c.b16 %v125, %v124
  %v148 = vpack.c.b16 %v127, %v126
  %v149 = vpack.c.b16 %v129, %v128
  %v150 = vpack.c.b16 %v131, %v130
  %v151 = vpack.c.b16 %v133, %v132
  %v152 = vpack.c.b16 %v135, %v134
  %v153 = vpack.c.b16 %v137, %v136
  %170 = vmatpush.bf16.msra.mxu0 %v145
  %171 = vmatpush.bf16.msra.mxu0 %v144
  %172 = vmatpush.bf16.msra.mxu0 %v143
  %173 = vmatpush.bf16.msra.mxu0 %v142
  %174 = vmatpush.bf16.msra.mxu0 %v141
  %175 = vmatpush.bf16.msra.mxu0 %v140
  %176 = vmatpush.bf16.msra.mxu0 %v139
  %177 = vmatpush.bf16.msra.mxu0 %v138
  %178 = vmatmul.bf16.gmra.mxu0 %v66
  %v179 = vpop.f32.mrf.mxu0
  %v180 = vadd.f32 %v52, %v179
  %v181 = vpop.f32.mrf.mxu0
  %v182 = vadd.f32 %v52, %v181
  %183 = vmatmul.bf16.gmra.mxu0 %v68
  %v184 = vpop.f32.mrf.mxu0
  %v185 = vadd.f32 %v52, %v184
  %v186 = vpop.f32.mrf.mxu0
  %v187 = vadd.f32 %v52, %v186
  %188 = vdwg.mxu0
  %189 = vmatpush.bf16.msra.mxu0 %v153
  %190 = vmatpush.bf16.msra.mxu0 %v152
  %191 = vmatpush.bf16.msra.mxu0 %v151
  %192 = vmatpush.bf16.msra.mxu0 %v150
  %193 = vmatpush.bf16.msra.mxu0 %v149
  %194 = vmatpush.bf16.msra.mxu0 %v148
  %195 = vmatpush.bf16.msra.mxu0 %v147
  %196 = vmatpush.bf16.msra.mxu0 %v146
  %197 = vmatmul.bf16.gmra.mxu0 %v67
  %v198 = vpop.f32.mrf.mxu0
  %v199 = vadd.f32 %v180, %v198
  %v200 = vpop.f32.mrf.mxu0
  %v201 = vadd.f32 %v182, %v200
  %202 = vmatmul.bf16.gmra.mxu0 %v69
  %v203 = vpop.f32.mrf.mxu0
  %v204 = vadd.f32 %v185, %v203
  %v205 = vpop.f32.mrf.mxu0
  %v206 = vadd.f32 %v187, %v205
  %207 = vdwg.mxu0
  %v208 = vmax.f32 %v199, 0.0
  %v209 = vmax.f32 %v201, 0.0
  %v210 = vmax.f32 %v204, 0.0
  %v211 = vmax.f32 %v206, 0.0
  %v212 = vpack.c.bf16 %v208, %v208
  %v213 = vpack.c.bf16 %v209, %v209
  %v214 = vpack.c.bf16 %v210, %v210
  %v215 = vpack.c.bf16 %v211, %v211
  %216 = vst [vmem:[%s3] sm:$0xf] %v212
  %217 = vst [vmem:[%s3 + $0x4] sm:$0xf] %v213
  %218 = vst [vmem:[%s3 + $0x8] sm:$0xf] %v214
  %219 = vst [vmem:[%s3 + $0xc] sm:$0xf] %v215
  // Predicated region
  $region14: #{resnet_forward.26} parent=0 // pred_check
    _
  $region15: #{resnet_forward.26} parent=0 // pred_check_branch
    %221 = sbr.rel (0) target = $region17
  $region16: #{resnet_forward.26} parent=0 // pred_region
    _
  $region17: #{resnet_forward.26} parent=0 // pred_fallthru
    _
  // Predicated region
  $region18: #{resnet_forward.26} parent=0 // pred_check
    _
  $region19: #{resnet_forward.26} parent=0 // pred_check_branch
    %223 = sbr.rel (0) target = $region21
  $region20: #{resnet_forward.26} parent=0 // pred_region
    _
  $region21: #{resnet_forward.26} parent=0 // pred_fallthru
    _

// kernel: resnet_forward.27
$region0: #{resnet_forward.27}
  #allocation0 [shape = 'u32[]', space=smem, size = 0x4, offset = 0x4, fixed_abs, tag = 'smem constant byte address 0x4 - core index']
  #allocation1 [shape = 'u32[72,128]{1,0:T(1,128)}', space=vmem, size = 0x9000, scoped, tag = 'internal scratch']
  %s0 = inlined_call_operand.vmem [shape: bf16[32,256], index: 0, kind: input, shape index: {}]
  %s1 = inlined_call_operand.vmem [shape: bf16[256,128], index: 1, kind: input, shape index: {}]
  %s2 = inlined_call_operand.vmem [shape: f32[1,128], index: 2, kind: input, shape index: {}]
  %s3 = inlined_call_operand.vmem [shape: bf16[32,128], index: 3, kind: input, shape index: {}, may-alias: {3,4}]
  %s4 = inlined_call_operand.vmem [shape: bf16[32,128], index: 4, kind: output, shape index: {}, may-alias: {3,4}]
  %s5 = sld [smem:[#allocation0]]
  $region26: #{resnet_forward.27} parent=0
    _
  %s7 = ssub.s32 1, %s5
  %s8 = scalar_select 0, %s7, %s5
  // Predicated region
  $region2: #{resnet_forward.27} parent=0 // pred_check
    _
  $region3: #{resnet_forward.27} parent=0 // pred_check_branch
    %10 = sbr.rel (0) target = $region5
  $region4: #{resnet_forward.27} parent=0 // pred_region
    _
  $region5: #{resnet_forward.27} parent=0 // pred_fallthru
    _
  // Predicated region
  $region6: #{resnet_forward.27} parent=0 // pred_check
    _
  $region7: #{resnet_forward.27} parent=0 // pred_check_branch
    %12 = sbr.rel (0) target = $region9
  $region8: #{resnet_forward.27} parent=0 // pred_region
    _
  $region9: #{resnet_forward.27} parent=0 // pred_fallthru
    _
  // Predicated region
  $region10: #{resnet_forward.27} parent=0 // pred_check
    _
  $region11: #{resnet_forward.27} parent=0 // pred_check_branch
    %14 = sbr.rel (0) target = $region13
  $region12: #{resnet_forward.27} parent=0 // pred_region
    _
  $region13: #{resnet_forward.27} parent=0 // pred_fallthru
    _
  // Predicated region
  $region14: #{resnet_forward.27} parent=0 // pred_check
    _
  $region15: #{resnet_forward.27} parent=0 // pred_check_branch
    %16 = sbr.rel (0) target = $region17
  $region16: #{resnet_forward.27} parent=0 // pred_region
    _
  $region17: #{resnet_forward.27} parent=0 // pred_fallthru
    _
  %v17 = vld [vmem:[%s0] sm:$0xff]
  %v18 = vld [vmem:[%s0 + $0x8] sm:$0xff]
  %v19 = vld [vmem:[%s0 + $0x10] sm:$0xff]
  %v20 = vld [vmem:[%s0 + $0x18] sm:$0xff]
  %v21 = vld [vmem:[%s1] sm:$0xf]
  %v22 = vld [vmem:[%s1 + $0x4] sm:$0xf]
  %v23 = vld [vmem:[%s1 + $0x8] sm:$0xf]
  %v24 = vld [vmem:[%s1 + $0xc] sm:$0xf]
  %v25 = vld [vmem:[%s1 + $0x10] sm:$0xf]
  %v26 = vld [vmem:[%s1 + $0x14] sm:$0xf]
  %v27 = vld [vmem:[%s1 + $0x18] sm:$0xf]
  %v28 = vld [vmem:[%s1 + $0x1c] sm:$0xf]
  %v29 = vld [vmem:[%s1 + $0x20] sm:$0xf]
  %v30 = vld [vmem:[%s1 + $0x24] sm:$0xf]
  %v31 = vld [vmem:[%s1 + $0x28] sm:$0xf]
  %v32 = vld [vmem:[%s1 + $0x2c] sm:$0xf]
  %v33 = vld [vmem:[%s1 + $0x30] sm:$0xf]
  %v34 = vld [vmem:[%s1 + $0x34] sm:$0xf]
  %v35 = vld [vmem:[%s1 + $0x38] sm:$0xf]
  %v36 = vld [vmem:[%s1 + $0x3c] sm:$0xf]
  %v37 = vld [vmem:[%s1 + $0x40] sm:$0xf]
  %v38 = vld [vmem:[%s1 + $0x44] sm:$0xf]
  %v39 = vld [vmem:[%s1 + $0x48] sm:$0xf]
  %v40 = vld [vmem:[%s1 + $0x4c] sm:$0xf]
  %v41 = vld [vmem:[%s1 + $0x50] sm:$0xf]
  %v42 = vld [vmem:[%s1 + $0x54] sm:$0xf]
  %v43 = vld [vmem:[%s1 + $0x58] sm:$0xf]
  %v44 = vld [vmem:[%s1 + $0x5c] sm:$0xf]
  %v45 = vld [vmem:[%s1 + $0x60] sm:$0xf]
  %v46 = vld [vmem:[%s1 + $0x64] sm:$0xf]
  %v47 = vld [vmem:[%s1 + $0x68] sm:$0xf]
  %v48 = vld [vmem:[%s1 + $0x6c] sm:$0xf]
  %v49 = vld [vmem:[%s1 + $0x70] sm:$0xf]
  %v50 = vld [vmem:[%s1 + $0x74] sm:$0xf]
  %v51 = vld [vmem:[%s1 + $0x78] sm:$0xf]
  %v52 = vld [vmem:[%s1 + $0x7c] sm:$0xf]
  %v53 = vld [vmem:[%s2] sm:$0x1]
  %v55 = vperm.slane %v53, 0
  %v61 = vunpack.c.l.b16 %v17
  %v62 = vunpack.c.h.b16 %v17
  %v63 = vunpack.c.l.b16 %v18
  %v64 = vunpack.c.h.b16 %v18
  %v65 = vunpack.c.l.b16 %v19
  %v66 = vunpack.c.h.b16 %v19
  %v67 = vunpack.c.l.b16 %v20
  %v68 = vunpack.c.h.b16 %v20
  %v69 = vpack.c.b16 %v63, %v61
  %v70 = vpack.c.b16 %v64, %v62
  %v71 = vpack.c.b16 %v67, %v65
  %v72 = vpack.c.b16 %v68, %v66
  %v109 = vunpack.c.l.b16 %v21
  %v110 = vunpack.c.l.b16 %v22
  %v111 = vunpack.c.l.b16 %v23
  %v112 = vunpack.c.l.b16 %v24
  %v113 = vunpack.c.l.b16 %v25
  %v114 = vunpack.c.l.b16 %v26
  %v115 = vunpack.c.l.b16 %v27
  %v116 = vunpack.c.l.b16 %v28
  %v117 = vunpack.c.l.b16 %v29
  %v118 = vunpack.c.l.b16 %v30
  %v119 = vunpack.c.l.b16 %v31
  %v120 = vunpack.c.l.b16 %v32
  %v121 = vunpack.c.l.b16 %v33
  %v122 = vunpack.c.l.b16 %v34
  %v123 = vunpack.c.l.b16 %v35
  %v124 = vunpack.c.l.b16 %v36
  %v125 = vunpack.c.l.b16 %v37
  %v126 = vunpack.c.l.b16 %v38
  %v127 = vunpack.c.l.b16 %v39
  %v128 = vunpack.c.l.b16 %v40
  %v129 = vunpack.c.l.b16 %v41
  %v130 = vunpack.c.l.b16 %v42
  %v131 = vunpack.c.l.b16 %v43
  %v132 = vunpack.c.l.b16 %v44
  %v133 = vunpack.c.l.b16 %v45
  %v134 = vunpack.c.l.b16 %v46
  %v135 = vunpack.c.l.b16 %v47
  %v136 = vunpack.c.l.b16 %v48
  %v137 = vunpack.c.l.b16 %v49
  %v138 = vunpack.c.l.b16 %v50
  %v139 = vunpack.c.l.b16 %v51
  %v140 = vunpack.c.l.b16 %v52
  %v141 = vpack.c.b16 %v110, %v109
  %v142 = vpack.c.b16 %v112, %v111
  %v143 = vpack.c.b16 %v114, %v113
  %v144 = vpack.c.b16 %v116, %v115
  %v145 = vpack.c.b16 %v118, %v117
  %v146 = vpack.c.b16 %v120, %v119
  %v147 = vpack.c.b16 %v122, %v121
  %v148 = vpack.c.b16 %v124, %v123
  %v149 = vpack.c.b16 %v126, %v125
  %v150 = vpack.c.b16 %v128, %v127
  %v151 = vpack.c.b16 %v130, %v129
  %v152 = vpack.c.b16 %v132, %v131
  %v153 = vpack.c.b16 %v134, %v133
  %v154 = vpack.c.b16 %v136, %v135
  %v155 = vpack.c.b16 %v138, %v137
  %v156 = vpack.c.b16 %v140, %v139
  %173 = vmatpush.bf16.msra.mxu0 %v148
  %174 = vmatpush.bf16.msra.mxu0 %v147
  %175 = vmatpush.bf16.msra.mxu0 %v146
  %176 = vmatpush.bf16.msra.mxu0 %v145
  %177 = vmatpush.bf16.msra.mxu0 %v144
  %178 = vmatpush.bf16.msra.mxu0 %v143
  %179 = vmatpush.bf16.msra.mxu0 %v142
  %180 = vmatpush.bf16.msra.mxu0 %v141
  %181 = vmatmul.bf16.gmra.mxu0 %v69
  %v182 = vpop.f32.mrf.mxu0
  %v183 = vadd.f32 %v55, %v182
  %v184 = vpop.f32.mrf.mxu0
  %v185 = vadd.f32 %v55, %v184
  %186 = vmatmul.bf16.gmra.mxu0 %v71
  %v187 = vpop.f32.mrf.mxu0
  %v188 = vadd.f32 %v55, %v187
  %v189 = vpop.f32.mrf.mxu0
  %v190 = vadd.f32 %v55, %v189
  %191 = vdwg.mxu0
  %192 = vmatpush.bf16.msra.mxu0 %v156
  %193 = vmatpush.bf16.msra.mxu0 %v155
  %194 = vmatpush.bf16.msra.mxu0 %v154
  %195 = vmatpush.bf16.msra.mxu0 %v153
  %196 = vmatpush.bf16.msra.mxu0 %v152
  %197 = vmatpush.bf16.msra.mxu0 %v151
  %198 = vmatpush.bf16.msra.mxu0 %v150
  %199 = vmatpush.bf16.msra.mxu0 %v149
  %200 = vmatmul.bf16.gmra.mxu0 %v70
  %v201 = vpop.f32.mrf.mxu0
  %v202 = vadd.f32 %v183, %v201
  %v203 = vpop.f32.mrf.mxu0
  %v204 = vadd.f32 %v185, %v203
  %205 = vmatmul.bf16.gmra.mxu0 %v72
  %v206 = vpop.f32.mrf.mxu0
  %v207 = vadd.f32 %v188, %v206
  %v208 = vpop.f32.mrf.mxu0
  %v209 = vadd.f32 %v190, %v208
  %210 = vdwg.mxu0
  %v211 = vld [vmem:[%s3] sm:$0xf]
  %v212 = vld [vmem:[%s3 + $0x4] sm:$0xf]
  %v213 = vld [vmem:[%s3 + $0x8] sm:$0xf]
  %v214 = vld [vmem:[%s3 + $0xc] sm:$0xf]
  %v215 = vunpack.c.l.bf16 %v211
  %v216 = vunpack.c.l.bf16 %v212
  %v217 = vunpack.c.l.bf16 %v213
  %v218 = vunpack.c.l.bf16 %v214
  %v219 = vadd.f32 %v202, %v215
  %v220 = vadd.f32 %v204, %v216
  %v221 = vadd.f32 %v207, %v217
  %v222 = vadd.f32 %v209, %v218
  %v223 = vmax.f32 %v219, 0.0
  %v224 = vmax.f32 %v220, 0.0
  %v225 = vmax.f32 %v221, 0.0
  %v226 = vmax.f32 %v222, 0.0
  %v227 = vpack.c.bf16 %v223, %v223
  %v228 = vpack.c.bf16 %v224, %v224
  %v229 = vpack.c.bf16 %v225, %v225
  %v230 = vpack.c.bf16 %v226, %v226
  %231 = vst [vmem:[%s4] sm:$0xf] %v227
  %232 = vst [vmem:[%s4 + $0x4] sm:$0xf] %v228
  %233 = vst [vmem:[%s4 + $0x8] sm:$0xf] %v229
  %234 = vst [vmem:[%s4 + $0xc] sm:$0xf] %v230
  // Predicated region
  $region18: #{resnet_forward.27} parent=0 // pred_check
    _
  $region19: #{resnet_forward.27} parent=0 // pred_check_branch
    %236 = sbr.rel (0) target = $region21
  $region20: #{resnet_forward.27} parent=0 // pred_region
    _
  $region21: #{resnet_forward.27} parent=0 // pred_fallthru
    _
  // Predicated region
  $region22: #{resnet_forward.27} parent=0 // pred_check
    _
  $region23: #{resnet_forward.27} parent=0 // pred_check_branch
    %238 = sbr.rel (0) target = $region25
  $region24: #{resnet_forward.27} parent=0 // pred_region
    _
  $region25: #{resnet_forward.27} parent=0 // pred_fallthru
    _

// kernel: resnet_forward.28
$region0: #{resnet_forward.28}
  #allocation0 [shape = 'u32[]', space=smem, size = 0x4, offset = 0x4, fixed_abs, tag = 'smem constant byte address 0x4 - core index']
  #allocation1 [shape = 'u32[72,128]{1,0:T(1,128)}', space=vmem, size = 0x9000, scoped, tag = 'internal scratch']
  %s0 = inlined_call_operand.vmem [shape: bf16[16,256], index: 0, kind: input, shape index: {}]
  %s1 = inlined_call_operand.vmem [shape: bf16[256,128], index: 1, kind: input, shape index: {}]
  %s2 = inlined_call_operand.vmem [shape: f32[1,128], index: 2, kind: input, shape index: {}]
  %s3 = inlined_call_operand.vmem [shape: bf16[16,128], index: 3, kind: output, shape index: {}]
  %s4 = sld [smem:[#allocation0]]
  $region22: #{resnet_forward.28} parent=0
    _
  %s6 = ssub.s32 1, %s4
  %s7 = scalar_select 0, %s6, %s4
  // Predicated region
  $region2: #{resnet_forward.28} parent=0 // pred_check
    _
  $region3: #{resnet_forward.28} parent=0 // pred_check_branch
    %9 = sbr.rel (0) target = $region5
  $region4: #{resnet_forward.28} parent=0 // pred_region
    _
  $region5: #{resnet_forward.28} parent=0 // pred_fallthru
    _
  // Predicated region
  $region6: #{resnet_forward.28} parent=0 // pred_check
    _
  $region7: #{resnet_forward.28} parent=0 // pred_check_branch
    %11 = sbr.rel (0) target = $region9
  $region8: #{resnet_forward.28} parent=0 // pred_region
    _
  $region9: #{resnet_forward.28} parent=0 // pred_fallthru
    _
  // Predicated region
  $region10: #{resnet_forward.28} parent=0 // pred_check
    _
  $region11: #{resnet_forward.28} parent=0 // pred_check_branch
    %13 = sbr.rel (0) target = $region13
  $region12: #{resnet_forward.28} parent=0 // pred_region
    _
  $region13: #{resnet_forward.28} parent=0 // pred_fallthru
    _
  %v14 = vld [vmem:[%s0] sm:$0xff]
  %v15 = vld [vmem:[%s0 + $0x8] sm:$0xff]
  %v16 = vld [vmem:[%s1] sm:$0xf]
  %v17 = vld [vmem:[%s1 + $0x4] sm:$0xf]
  %v18 = vld [vmem:[%s1 + $0x8] sm:$0xf]
  %v19 = vld [vmem:[%s1 + $0xc] sm:$0xf]
  %v20 = vld [vmem:[%s1 + $0x10] sm:$0xf]
  %v21 = vld [vmem:[%s1 + $0x14] sm:$0xf]
  %v22 = vld [vmem:[%s1 + $0x18] sm:$0xf]
  %v23 = vld [vmem:[%s1 + $0x1c] sm:$0xf]
  %v24 = vld [vmem:[%s1 + $0x20] sm:$0xf]
  %v25 = vld [vmem:[%s1 + $0x24] sm:$0xf]
  %v26 = vld [vmem:[%s1 + $0x28] sm:$0xf]
  %v27 = vld [vmem:[%s1 + $0x2c] sm:$0xf]
  %v28 = vld [vmem:[%s1 + $0x30] sm:$0xf]
  %v29 = vld [vmem:[%s1 + $0x34] sm:$0xf]
  %v30 = vld [vmem:[%s1 + $0x38] sm:$0xf]
  %v31 = vld [vmem:[%s1 + $0x3c] sm:$0xf]
  %v32 = vld [vmem:[%s1 + $0x40] sm:$0xf]
  %v33 = vld [vmem:[%s1 + $0x44] sm:$0xf]
  %v34 = vld [vmem:[%s1 + $0x48] sm:$0xf]
  %v35 = vld [vmem:[%s1 + $0x4c] sm:$0xf]
  %v36 = vld [vmem:[%s1 + $0x50] sm:$0xf]
  %v37 = vld [vmem:[%s1 + $0x54] sm:$0xf]
  %v38 = vld [vmem:[%s1 + $0x58] sm:$0xf]
  %v39 = vld [vmem:[%s1 + $0x5c] sm:$0xf]
  %v40 = vld [vmem:[%s1 + $0x60] sm:$0xf]
  %v41 = vld [vmem:[%s1 + $0x64] sm:$0xf]
  %v42 = vld [vmem:[%s1 + $0x68] sm:$0xf]
  %v43 = vld [vmem:[%s1 + $0x6c] sm:$0xf]
  %v44 = vld [vmem:[%s1 + $0x70] sm:$0xf]
  %v45 = vld [vmem:[%s1 + $0x74] sm:$0xf]
  %v46 = vld [vmem:[%s1 + $0x78] sm:$0xf]
  %v47 = vld [vmem:[%s1 + $0x7c] sm:$0xf]
  %v48 = vld [vmem:[%s2] sm:$0x1]
  %v50 = vperm.slane %v48, 0
  %v54 = vunpack.c.l.b16 %v14
  %v55 = vunpack.c.h.b16 %v14
  %v56 = vunpack.c.l.b16 %v15
  %v57 = vunpack.c.h.b16 %v15
  %v58 = vpack.c.b16 %v56, %v54
  %v59 = vpack.c.b16 %v57, %v55
  %v94 = vunpack.c.l.b16 %v16
  %v95 = vunpack.c.l.b16 %v17
  %v96 = vunpack.c.l.b16 %v18
  %v97 = vunpack.c.l.b16 %v19
  %v98 = vunpack.c.l.b16 %v20
  %v99 = vunpack.c.l.b16 %v21
  %v100 = vunpack.c.l.b16 %v22
  %v101 = vunpack.c.l.b16 %v23
  %v102 = vunpack.c.l.b16 %v24
  %v103 = vunpack.c.l.b16 %v25
  %v104 = vunpack.c.l.b16 %v26
  %v105 = vunpack.c.l.b16 %v27
  %v106 = vunpack.c.l.b16 %v28
  %v107 = vunpack.c.l.b16 %v29
  %v108 = vunpack.c.l.b16 %v30
  %v109 = vunpack.c.l.b16 %v31
  %v110 = vunpack.c.l.b16 %v32
  %v111 = vunpack.c.l.b16 %v33
  %v112 = vunpack.c.l.b16 %v34
  %v113 = vunpack.c.l.b16 %v35
  %v114 = vunpack.c.l.b16 %v36
  %v115 = vunpack.c.l.b16 %v37
  %v116 = vunpack.c.l.b16 %v38
  %v117 = vunpack.c.l.b16 %v39
  %v118 = vunpack.c.l.b16 %v40
  %v119 = vunpack.c.l.b16 %v41
  %v120 = vunpack.c.l.b16 %v42
  %v121 = vunpack.c.l.b16 %v43
  %v122 = vunpack.c.l.b16 %v44
  %v123 = vunpack.c.l.b16 %v45
  %v124 = vunpack.c.l.b16 %v46
  %v125 = vunpack.c.l.b16 %v47
  %v126 = vpack.c.b16 %v95, %v94
  %v127 = vpack.c.b16 %v97, %v96
  %v128 = vpack.c.b16 %v99, %v98
  %v129 = vpack.c.b16 %v101, %v100
  %v130 = vpack.c.b16 %v103, %v102
  %v131 = vpack.c.b16 %v105, %v104
  %v132 = vpack.c.b16 %v107, %v106
  %v133 = vpack.c.b16 %v109, %v108
  %v134 = vpack.c.b16 %v111, %v110
  %v135 = vpack.c.b16 %v113, %v112
  %v136 = vpack.c.b16 %v115, %v114
  %v137 = vpack.c.b16 %v117, %v116
  %v138 = vpack.c.b16 %v119, %v118
  %v139 = vpack.c.b16 %v121, %v120
  %v140 = vpack.c.b16 %v123, %v122
  %v141 = vpack.c.b16 %v125, %v124
  %158 = vmatpush.bf16.msra.mxu0 %v133
  %159 = vmatpush.bf16.msra.mxu0 %v132
  %160 = vmatpush.bf16.msra.mxu0 %v131
  %161 = vmatpush.bf16.msra.mxu0 %v130
  %162 = vmatpush.bf16.msra.mxu0 %v129
  %163 = vmatpush.bf16.msra.mxu0 %v128
  %164 = vmatpush.bf16.msra.mxu0 %v127
  %165 = vmatpush.bf16.msra.mxu0 %v126
  %166 = vmatmul.bf16.gmra.mxu0 %v58
  %v167 = vpop.f32.mrf.mxu0
  %v168 = vadd.f32 %v50, %v167
  %v169 = vpop.f32.mrf.mxu0
  %v170 = vadd.f32 %v50, %v169
  %171 = vdwg.mxu0
  %172 = vmatpush.bf16.msra.mxu0 %v141
  %173 = vmatpush.bf16.msra.mxu0 %v140
  %174 = vmatpush.bf16.msra.mxu0 %v139
  %175 = vmatpush.bf16.msra.mxu0 %v138
  %176 = vmatpush.bf16.msra.mxu0 %v137
  %177 = vmatpush.bf16.msra.mxu0 %v136
  %178 = vmatpush.bf16.msra.mxu0 %v135
  %179 = vmatpush.bf16.msra.mxu0 %v134
  %180 = vmatmul.bf16.gmra.mxu0 %v59
  %v181 = vpop.f32.mrf.mxu0
  %v182 = vadd.f32 %v168, %v181
  %v183 = vpop.f32.mrf.mxu0
  %v184 = vadd.f32 %v170, %v183
  %185 = vdwg.mxu0
  %v186 = vmax.f32 %v182, 0.0
  %v187 = vmax.f32 %v184, 0.0
  %v188 = vpack.c.bf16 %v186, %v186
  %v189 = vpack.c.bf16 %v187, %v187
  %190 = vst [vmem:[%s3] sm:$0xf] %v188
  %191 = vst [vmem:[%s3 + $0x4] sm:$0xf] %v189
  // Predicated region
  $region14: #{resnet_forward.28} parent=0 // pred_check
    _
  $region15: #{resnet_forward.28} parent=0 // pred_check_branch
    %193 = sbr.rel (0) target = $region17
  $region16: #{resnet_forward.28} parent=0 // pred_region
    _
  $region17: #{resnet_forward.28} parent=0 // pred_fallthru
    _
  // Predicated region
  $region18: #{resnet_forward.28} parent=0 // pred_check
    _
  $region19: #{resnet_forward.28} parent=0 // pred_check_branch
    %195 = sbr.rel (0) target = $region21
  $region20: #{resnet_forward.28} parent=0 // pred_region
    _
  $region21: #{resnet_forward.28} parent=0 // pred_fallthru
    _

// kernel: resnet_forward.29
$region0: #{resnet_forward.29}
  #allocation0 [shape = 'u32[]', space=smem, size = 0x4, offset = 0x4, fixed_abs, tag = 'smem constant byte address 0x4 - core index']
  #allocation1 [shape = 'u32[72,128]{1,0:T(1,128)}', space=vmem, size = 0x9000, scoped, tag = 'internal scratch']
  %s0 = inlined_call_operand.vmem [shape: bf16[16,512], index: 0, kind: input, shape index: {}]
  %s1 = inlined_call_operand.vmem [shape: bf16[512,128], index: 1, kind: input, shape index: {}]
  %s2 = inlined_call_operand.vmem [shape: f32[1,128], index: 2, kind: input, shape index: {}]
  %s3 = inlined_call_operand.vmem [shape: bf16[16,128], index: 3, kind: output, shape index: {}]
  %s4 = sld [smem:[#allocation0]]
  $region22: #{resnet_forward.29} parent=0
    _
  %s6 = ssub.s32 1, %s4
  %s7 = scalar_select 0, %s6, %s4
  // Predicated region
  $region2: #{resnet_forward.29} parent=0 // pred_check
    _
  $region3: #{resnet_forward.29} parent=0 // pred_check_branch
    %9 = sbr.rel (0) target = $region5
  $region4: #{resnet_forward.29} parent=0 // pred_region
    _
  $region5: #{resnet_forward.29} parent=0 // pred_fallthru
    _
  // Predicated region
  $region6: #{resnet_forward.29} parent=0 // pred_check
    _
  $region7: #{resnet_forward.29} parent=0 // pred_check_branch
    %11 = sbr.rel (0) target = $region9
  $region8: #{resnet_forward.29} parent=0 // pred_region
    _
  $region9: #{resnet_forward.29} parent=0 // pred_fallthru
    _
  // Predicated region
  $region10: #{resnet_forward.29} parent=0 // pred_check
    _
  $region11: #{resnet_forward.29} parent=0 // pred_check_branch
    %13 = sbr.rel (0) target = $region13
  $region12: #{resnet_forward.29} parent=0 // pred_region
    _
  $region13: #{resnet_forward.29} parent=0 // pred_fallthru
    _
  %v14 = vld [vmem:[%s0] sm:$0xff]
  %v15 = vld [vmem:[%s0 + $0x8] sm:$0xff]
  %v16 = vld [vmem:[%s0 + $0x10] sm:$0xff]
  %v17 = vld [vmem:[%s0 + $0x18] sm:$0xff]
  %v18 = vld [vmem:[%s1] sm:$0xf]
  %v19 = vld [vmem:[%s1 + $0x4] sm:$0xf]
  %v20 = vld [vmem:[%s1 + $0x8] sm:$0xf]
  %v21 = vld [vmem:[%s1 + $0xc] sm:$0xf]
  %v22 = vld [vmem:[%s1 + $0x10] sm:$0xf]
  %v23 = vld [vmem:[%s1 + $0x14] sm:$0xf]
  %v24 = vld [vmem:[%s1 + $0x18] sm:$0xf]
  %v25 = vld [vmem:[%s1 + $0x1c] sm:$0xf]
  %v26 = vld [vmem:[%s1 + $0x20] sm:$0xf]
  %v27 = vld [vmem:[%s1 + $0x24] sm:$0xf]
  %v28 = vld [vmem:[%s1 + $0x28] sm:$0xf]
  %v29 = vld [vmem:[%s1 + $0x2c] sm:$0xf]
  %v30 = vld [vmem:[%s1 + $0x30] sm:$0xf]
  %v31 = vld [vmem:[%s1 + $0x34] sm:$0xf]
  %v32 = vld [vmem:[%s1 + $0x38] sm:$0xf]
  %v33 = vld [vmem:[%s1 + $0x3c] sm:$0xf]
  %v34 = vld [vmem:[%s1 + $0x40] sm:$0xf]
  %v35 = vld [vmem:[%s1 + $0x44] sm:$0xf]
  %v36 = vld [vmem:[%s1 + $0x48] sm:$0xf]
  %v37 = vld [vmem:[%s1 + $0x4c] sm:$0xf]
  %v38 = vld [vmem:[%s1 + $0x50] sm:$0xf]
  %v39 = vld [vmem:[%s1 + $0x54] sm:$0xf]
  %v40 = vld [vmem:[%s1 + $0x58] sm:$0xf]
  %v41 = vld [vmem:[%s1 + $0x5c] sm:$0xf]
  %v42 = vld [vmem:[%s1 + $0x60] sm:$0xf]
  %v43 = vld [vmem:[%s1 + $0x64] sm:$0xf]
  %v44 = vld [vmem:[%s1 + $0x68] sm:$0xf]
  %v45 = vld [vmem:[%s1 + $0x6c] sm:$0xf]
  %v46 = vld [vmem:[%s1 + $0x70] sm:$0xf]
  %v47 = vld [vmem:[%s1 + $0x74] sm:$0xf]
  %v48 = vld [vmem:[%s1 + $0x78] sm:$0xf]
  %v49 = vld [vmem:[%s1 + $0x7c] sm:$0xf]
  %v50 = vld [vmem:[%s1 + $0x80] sm:$0xf]
  %v51 = vld [vmem:[%s1 + $0x84] sm:$0xf]
  %v52 = vld [vmem:[%s1 + $0x88] sm:$0xf]
  %v53 = vld [vmem:[%s1 + $0x8c] sm:$0xf]
  %v54 = vld [vmem:[%s1 + $0x90] sm:$0xf]
  %v55 = vld [vmem:[%s1 + $0x94] sm:$0xf]
  %v56 = vld [vmem:[%s1 + $0x98] sm:$0xf]
  %v57 = vld [vmem:[%s1 + $0x9c] sm:$0xf]
  %v58 = vld [vmem:[%s1 + $0xa0] sm:$0xf]
  %v59 = vld [vmem:[%s1 + $0xa4] sm:$0xf]
  %v60 = vld [vmem:[%s1 + $0xa8] sm:$0xf]
  %v61 = vld [vmem:[%s1 + $0xac] sm:$0xf]
  %v62 = vld [vmem:[%s1 + $0xb0] sm:$0xf]
  %v63 = vld [vmem:[%s1 + $0xb4] sm:$0xf]
  %v64 = vld [vmem:[%s1 + $0xb8] sm:$0xf]
  %v65 = vld [vmem:[%s1 + $0xbc] sm:$0xf]
  %v66 = vld [vmem:[%s1 + $0xc0] sm:$0xf]
  %v67 = vld [vmem:[%s1 + $0xc4] sm:$0xf]
  %v68 = vld [vmem:[%s1 + $0xc8] sm:$0xf]
  %v69 = vld [vmem:[%s1 + $0xcc] sm:$0xf]
  %v70 = vld [vmem:[%s1 + $0xd0] sm:$0xf]
  %v71 = vld [vmem:[%s1 + $0xd4] sm:$0xf]
  %v72 = vld [vmem:[%s1 + $0xd8] sm:$0xf]
  %v73 = vld [vmem:[%s1 + $0xdc] sm:$0xf]
  %v74 = vld [vmem:[%s1 + $0xe0] sm:$0xf]
  %v75 = vld [vmem:[%s1 + $0xe4] sm:$0xf]
  %v76 = vld [vmem:[%s1 + $0xe8] sm:$0xf]
  %v77 = vld [vmem:[%s1 + $0xec] sm:$0xf]
  %v78 = vld [vmem:[%s1 + $0xf0] sm:$0xf]
  %v79 = vld [vmem:[%s1 + $0xf4] sm:$0xf]
  %v80 = vld [vmem:[%s1 + $0xf8] sm:$0xf]
  %v81 = vld [vmem:[%s1 + $0xfc] sm:$0xf]
  %v82 = vld [vmem:[%s2] sm:$0x1]
  %v84 = vperm.slane %v82, 0
  %v90 = vunpack.c.l.b16 %v14
  %v91 = vunpack.c.h.b16 %v14
  %v92 = vunpack.c.l.b16 %v15
  %v93 = vunpack.c.h.b16 %v15
  %v94 = vunpack.c.l.b16 %v16
  %v95 = vunpack.c.h.b16 %v16
  %v96 = vunpack.c.l.b16 %v17
  %v97 = vunpack.c.h.b16 %v17
  %v98 = vpack.c.b16 %v94, %v90
  %v99 = vpack.c.b16 %v95, %v91
  %v100 = vpack.c.b16 %v96, %v92
  %v101 = vpack.c.b16 %v97, %v93
  %v170 = vunpack.c.l.b16 %v18
  %v171 = vunpack.c.l.b16 %v19
  %v172 = vunpack.c.l.b16 %v20
  %v173 = vunpack.c.l.b16 %v21
  %v174 = vunpack.c.l.b16 %v22
  %v175 = vunpack.c.l.b16 %v23
  %v176 = vunpack.c.l.b16 %v24
  %v177 = vunpack.c.l.b16 %v25
  %v178 = vunpack.c.l.b16 %v26
  %v179 = vunpack.c.l.b16 %v27
  %v180 = vunpack.c.l.b16 %v28
  %v181 = vunpack.c.l.b16 %v29
  %v182 = vunpack.c.l.b16 %v30
  %v183 = vunpack.c.l.b16 %v31
  %v184 = vunpack.c.l.b16 %v32
  %v185 = vunpack.c.l.b16 %v33
  %v186 = vunpack.c.l.b16 %v34
  %v187 = vunpack.c.l.b16 %v35
  %v188 = vunpack.c.l.b16 %v36
  %v189 = vunpack.c.l.b16 %v37
  %v190 = vunpack.c.l.b16 %v38
  %v191 = vunpack.c.l.b16 %v39
  %v192 = vunpack.c.l.b16 %v40
  %v193 = vunpack.c.l.b16 %v41
  %v194 = vunpack.c.l.b16 %v42
  %v195 = vunpack.c.l.b16 %v43
  %v196 = vunpack.c.l.b16 %v44
  %v197 = vunpack.c.l.b16 %v45
  %v198 = vunpack.c.l.b16 %v46
  %v199 = vunpack.c.l.b16 %v47
  %v200 = vunpack.c.l.b16 %v48
  %v201 = vunpack.c.l.b16 %v49
  %v202 = vunpack.c.l.b16 %v50
  %v203 = vunpack.c.l.b16 %v51
  %v204 = vunpack.c.l.b16 %v52
  %v205 = vunpack.c.l.b16 %v53
  %v206 = vunpack.c.l.b16 %v54
  %v207 = vunpack.c.l.b16 %v55
  %v208 = vunpack.c.l.b16 %v56
  %v209 = vunpack.c.l.b16 %v57
  %v210 = vunpack.c.l.b16 %v58
  %v211 = vunpack.c.l.b16 %v59
  %v212 = vunpack.c.l.b16 %v60
  %v213 = vunpack.c.l.b16 %v61
  %v214 = vunpack.c.l.b16 %v62
  %v215 = vunpack.c.l.b16 %v63
  %v216 = vunpack.c.l.b16 %v64
  %v217 = vunpack.c.l.b16 %v65
  %v218 = vunpack.c.l.b16 %v66
  %v219 = vunpack.c.l.b16 %v67
  %v220 = vunpack.c.l.b16 %v68
  %v221 = vunpack.c.l.b16 %v69
  %v222 = vunpack.c.l.b16 %v70
  %v223 = vunpack.c.l.b16 %v71
  %v224 = vunpack.c.l.b16 %v72
  %v225 = vunpack.c.l.b16 %v73
  %v226 = vunpack.c.l.b16 %v74
  %v227 = vunpack.c.l.b16 %v75
  %v228 = vunpack.c.l.b16 %v76
  %v229 = vunpack.c.l.b16 %v77
  %v230 = vunpack.c.l.b16 %v78
  %v231 = vunpack.c.l.b16 %v79
  %v232 = vunpack.c.l.b16 %v80
  %v233 = vunpack.c.l.b16 %v81
  %v234 = vpack.c.b16 %v171, %v170
  %v235 = vpack.c.b16 %v173, %v172
  %v236 = vpack.c.b16 %v175, %v174
  %v237 = vpack.c.b16 %v177, %v176
  %v238 = vpack.c.b16 %v179, %v178
  %v239 = vpack.c.b16 %v181, %v180
  %v240 = vpack.c.b16 %v183, %v182
  %v241 = vpack.c.b16 %v185, %v184
  %v242 = vpack.c.b16 %v187, %v186
  %v243 = vpack.c.b16 %v189, %v188
  %v244 = vpack.c.b16 %v191, %v190
  %v245 = vpack.c.b16 %v193, %v192
  %v246 = vpack.c.b16 %v195, %v194
  %v247 = vpack.c.b16 %v197, %v196
  %v248 = vpack.c.b16 %v199, %v198
  %v249 = vpack.c.b16 %v201, %v200
  %v250 = vpack.c.b16 %v203, %v202
  %v251 = vpack.c.b16 %v205, %v204
  %v252 = vpack.c.b16 %v207, %v206
  %v253 = vpack.c.b16 %v209, %v208
  %v254 = vpack.c.b16 %v211, %v210
  %v255 = vpack.c.b16 %v213, %v212
  %v256 = vpack.c.b16 %v215, %v214
  %v257 = vpack.c.b16 %v217, %v216
  %v258 = vpack.c.b16 %v219, %v218
  %v259 = vpack.c.b16 %v221, %v220
  %v260 = vpack.c.b16 %v223, %v222
  %v261 = vpack.c.b16 %v225, %v224
  %v262 = vpack.c.b16 %v227, %v226
  %v263 = vpack.c.b16 %v229, %v228
  %v264 = vpack.c.b16 %v231, %v230
  %v265 = vpack.c.b16 %v233, %v232
  %298 = vmatpush.bf16.msra.mxu0 %v241
  %299 = vmatpush.bf16.msra.mxu0 %v240
  %300 = vmatpush.bf16.msra.mxu0 %v239
  %301 = vmatpush.bf16.msra.mxu0 %v238
  %302 = vmatpush.bf16.msra.mxu0 %v237
  %303 = vmatpush.bf16.msra.mxu0 %v236
  %304 = vmatpush.bf16.msra.mxu0 %v235
  %305 = vmatpush.bf16.msra.mxu0 %v234
  %306 = vmatmul.bf16.gmra.mxu0 %v98
  %v307 = vpop.f32.mrf.mxu0
  %v308 = vadd.f32 %v84, %v307
  %v309 = vpop.f32.mrf.mxu0
  %v310 = vadd.f32 %v84, %v309
  %311 = vdwg.mxu0
  %312 = vmatpush.bf16.msra.mxu0 %v249
  %313 = vmatpush.bf16.msra.mxu0 %v248
  %314 = vmatpush.bf16.msra.mxu0 %v247
  %315 = vmatpush.bf16.msra.mxu0 %v246
  %316 = vmatpush.bf16.msra.mxu0 %v245
  %317 = vmatpush.bf16.msra.mxu0 %v244
  %318 = vmatpush.bf16.msra.mxu0 %v243
  %319 = vmatpush.bf16.msra.mxu0 %v242
  %320 = vmatmul.bf16.gmra.mxu0 %v99
  %v321 = vpop.f32.mrf.mxu0
  %v322 = vadd.f32 %v308, %v321
  %v323 = vpop.f32.mrf.mxu0
  %v324 = vadd.f32 %v310, %v323
  %325 = vdwg.mxu0
  %326 = vmatpush.bf16.msra.mxu0 %v257
  %327 = vmatpush.bf16.msra.mxu0 %v256
  %328 = vmatpush.bf16.msra.mxu0 %v255
  %329 = vmatpush.bf16.msra.mxu0 %v254
  %330 = vmatpush.bf16.msra.mxu0 %v253
  %331 = vmatpush.bf16.msra.mxu0 %v252
  %332 = vmatpush.bf16.msra.mxu0 %v251
  %333 = vmatpush.bf16.msra.mxu0 %v250
  %334 = vmatmul.bf16.gmra.mxu0 %v100
  %v335 = vpop.f32.mrf.mxu0
  %v336 = vadd.f32 %v322, %v335
  %v337 = vpop.f32.mrf.mxu0
  %v338 = vadd.f32 %v324, %v337
  %339 = vdwg.mxu0
  %340 = vmatpush.bf16.msra.mxu0 %v265
  %341 = vmatpush.bf16.msra.mxu0 %v264
  %342 = vmatpush.bf16.msra.mxu0 %v263
  %343 = vmatpush.bf16.msra.mxu0 %v262
  %344 = vmatpush.bf16.msra.mxu0 %v261
  %345 = vmatpush.bf16.msra.mxu0 %v260
  %346 = vmatpush.bf16.msra.mxu0 %v259
  %347 = vmatpush.bf16.msra.mxu0 %v258
  %348 = vmatmul.bf16.gmra.mxu0 %v101
  %v349 = vpop.f32.mrf.mxu0
  %v350 = vadd.f32 %v336, %v349
  %v351 = vpop.f32.mrf.mxu0
  %v352 = vadd.f32 %v338, %v351
  %353 = vdwg.mxu0
  %v354 = vmax.f32 %v350, 0.0
  %v355 = vmax.f32 %v352, 0.0
  %v356 = vpack.c.bf16 %v354, %v354
  %v357 = vpack.c.bf16 %v355, %v355
  %358 = vst [vmem:[%s3] sm:$0xf] %v356
  %359 = vst [vmem:[%s3 + $0x4] sm:$0xf] %v357
  // Predicated region
  $region14: #{resnet_forward.29} parent=0 // pred_check
    _
  $region15: #{resnet_forward.29} parent=0 // pred_check_branch
    %361 = sbr.rel (0) target = $region17
  $region16: #{resnet_forward.29} parent=0 // pred_region
    _
  $region17: #{resnet_forward.29} parent=0 // pred_fallthru
    _
  // Predicated region
  $region18: #{resnet_forward.29} parent=0 // pred_check
    _
  $region19: #{resnet_forward.29} parent=0 // pred_check_branch
    %363 = sbr.rel (0) target = $region21
  $region20: #{resnet_forward.29} parent=0 // pred_region
    _
  $region21: #{resnet_forward.29} parent=0 // pred_fallthru
    _

// kernel: resnet_forward.31
$region0: #{resnet_forward.31}
  #allocation0 [shape = 'u32[]', space=smem, size = 0x4, offset = 0x4, fixed_abs, tag = 'smem constant byte address 0x4 - core index']
  #allocation1 [shape = 'u32[72,128]{1,0:T(1,128)}', space=vmem, size = 0x9000, scoped, tag = 'internal scratch']
  %s0 = inlined_call_operand.vmem [shape: bf16[16,384], index: 0, kind: input, shape index: {}]
  %s1 = inlined_call_operand.vmem [shape: bf16[384,128], index: 1, kind: input, shape index: {}]
  %s2 = inlined_call_operand.vmem [shape: f32[1,128], index: 2, kind: input, shape index: {}]
  %s3 = inlined_call_operand.vmem [shape: bf16[16,128], index: 3, kind: input, shape index: {}, may-alias: {3,4}]
  %s4 = inlined_call_operand.vmem [shape: bf16[16,128], index: 4, kind: output, shape index: {}, may-alias: {3,4}]
  %s5 = sld [smem:[#allocation0]]
  $region26: #{resnet_forward.31} parent=0
    _
  %s7 = ssub.s32 1, %s5
  %s8 = scalar_select 0, %s7, %s5
  // Predicated region
  $region2: #{resnet_forward.31} parent=0 // pred_check
    _
  $region3: #{resnet_forward.31} parent=0 // pred_check_branch
    %10 = sbr.rel (0) target = $region5
  $region4: #{resnet_forward.31} parent=0 // pred_region
    _
  $region5: #{resnet_forward.31} parent=0 // pred_fallthru
    _
  // Predicated region
  $region6: #{resnet_forward.31} parent=0 // pred_check
    _
  $region7: #{resnet_forward.31} parent=0 // pred_check_branch
    %12 = sbr.rel (0) target = $region9
  $region8: #{resnet_forward.31} parent=0 // pred_region
    _
  $region9: #{resnet_forward.31} parent=0 // pred_fallthru
    _
  // Predicated region
  $region10: #{resnet_forward.31} parent=0 // pred_check
    _
  $region11: #{resnet_forward.31} parent=0 // pred_check_branch
    %14 = sbr.rel (0) target = $region13
  $region12: #{resnet_forward.31} parent=0 // pred_region
    _
  $region13: #{resnet_forward.31} parent=0 // pred_fallthru
    _
  // Predicated region
  $region14: #{resnet_forward.31} parent=0 // pred_check
    _
  $region15: #{resnet_forward.31} parent=0 // pred_check_branch
    %16 = sbr.rel (0) target = $region17
  $region16: #{resnet_forward.31} parent=0 // pred_region
    _
  $region17: #{resnet_forward.31} parent=0 // pred_fallthru
    _
  %v17 = vld [vmem:[%s0] sm:$0xff]
  %v18 = vld [vmem:[%s0 + $0x8] sm:$0xf]
  %v19 = vld [vmem:[%s0 + $0xc] sm:$0xff]
  %v20 = vld [vmem:[%s0 + $0x14] sm:$0xf]
  %v21 = vld [vmem:[%s1] sm:$0xf]
  %v22 = vld [vmem:[%s1 + $0x4] sm:$0xf]
  %v23 = vld [vmem:[%s1 + $0x8] sm:$0xf]
  %v24 = vld [vmem:[%s1 + $0xc] sm:$0xf]
  %v25 = vld [vmem:[%s1 + $0x10] sm:$0xf]
  %v26 = vld [vmem:[%s1 + $0x14] sm:$0xf]
  %v27 = vld [vmem:[%s1 + $0x18] sm:$0xf]
  %v28 = vld [vmem:[%s1 + $0x1c] sm:$0xf]
  %v29 = vld [vmem:[%s1 + $0x20] sm:$0xf]
  %v30 = vld [vmem:[%s1 + $0x24] sm:$0xf]
  %v31 = vld [vmem:[%s1 + $0x28] sm:$0xf]
  %v32 = vld [vmem:[%s1 + $0x2c] sm:$0xf]
  %v33 = vld [vmem:[%s1 + $0x30] sm:$0xf]
  %v34 = vld [vmem:[%s1 + $0x34] sm:$0xf]
  %v35 = vld [vmem:[%s1 + $0x38] sm:$0xf]
  %v36 = vld [vmem:[%s1 + $0x3c] sm:$0xf]
  %v37 = vld [vmem:[%s1 + $0x40] sm:$0xf]
  %v38 = vld [vmem:[%s1 + $0x44] sm:$0xf]
  %v39 = vld [vmem:[%s1 + $0x48] sm:$0xf]
  %v40 = vld [vmem:[%s1 + $0x4c] sm:$0xf]
  %v41 = vld [vmem:[%s1 + $0x50] sm:$0xf]
  %v42 = vld [vmem:[%s1 + $0x54] sm:$0xf]
  %v43 = vld [vmem:[%s1 + $0x58] sm:$0xf]
  %v44 = vld [vmem:[%s1 + $0x5c] sm:$0xf]
  %v45 = vld [vmem:[%s1 + $0x60] sm:$0xf]
  %v46 = vld [vmem:[%s1 + $0x64] sm:$0xf]
  %v47 = vld [vmem:[%s1 + $0x68] sm:$0xf]
  %v48 = vld [vmem:[%s1 + $0x6c] sm:$0xf]
  %v49 = vld [vmem:[%s1 + $0x70] sm:$0xf]
  %v50 = vld [vmem:[%s1 + $0x74] sm:$0xf]
  %v51 = vld [vmem:[%s1 + $0x78] sm:$0xf]
  %v52 = vld [vmem:[%s1 + $0x7c] sm:$0xf]
  %v53 = vld [vmem:[%s1 + $0x80] sm:$0xf]
  %v54 = vld [vmem:[%s1 + $0x84] sm:$0xf]
  %v55 = vld [vmem:[%s1 + $0x88] sm:$0xf]
  %v56 = vld [vmem:[%s1 + $0x8c] sm:$0xf]
  %v57 = vld [vmem:[%s1 + $0x90] sm:$0xf]
  %v58 = vld [vmem:[%s1 + $0x94] sm:$0xf]
  %v59 = vld [vmem:[%s1 + $0x98] sm:$0xf]
  %v60 = vld [vmem:[%s1 + $0x9c] sm:$0xf]
  %v61 = vld [vmem:[%s1 + $0xa0] sm:$0xf]
  %v62 = vld [vmem:[%s1 + $0xa4] sm:$0xf]
  %v63 = vld [vmem:[%s1 + $0xa8] sm:$0xf]
  %v64 = vld [vmem:[%s1 + $0xac] sm:$0xf]
  %v65 = vld [vmem:[%s1 + $0xb0] sm:$0xf]
  %v66 = vld [vmem:[%s1 + $0xb4] sm:$0xf]
  %v67 = vld [vmem:[%s1 + $0xb8] sm:$0xf]
  %v68 = vld [vmem:[%s1 + $0xbc] sm:$0xf]
  %v69 = vld [vmem:[%s2] sm:$0x1]
  %v71 = vperm.slane %v69, 0
  %v77 = vunpack.c.l.b16 %v17
  %v78 = vunpack.c.h.b16 %v17
  %v79 = vunpack.c.l.b16 %v18
  %v80 = vunpack.c.l.b16 %v19
  %v81 = vunpack.c.h.b16 %v19
  %v82 = vunpack.c.l.b16 %v20
  %v83 = vpack.c.b16 %v80, %v77
  %v84 = vpack.c.b16 %v81, %v78
  %v85 = vpack.c.b16 %v82, %v79
  %v137 = vunpack.c.l.b16 %v21
  %v138 = vunpack.c.l.b16 %v22
  %v139 = vunpack.c.l.b16 %v23
  %v140 = vunpack.c.l.b16 %v24
  %v141 = vunpack.c.l.b16 %v25
  %v142 = vunpack.c.l.b16 %v26
  %v143 = vunpack.c.l.b16 %v27
  %v144 = vunpack.c.l.b16 %v28
  %v145 = vunpack.c.l.b16 %v29
  %v146 = vunpack.c.l.b16 %v30
  %v147 = vunpack.c.l.b16 %v31
  %v148 = vunpack.c.l.b16 %v32
  %v149 = vunpack.c.l.b16 %v33
  %v150 = vunpack.c.l.b16 %v34
  %v151 = vunpack.c.l.b16 %v35
  %v152 = vunpack.c.l.b16 %v36
  %v153 = vunpack.c.l.b16 %v37
  %v154 = vunpack.c.l.b16 %v38
  %v155 = vunpack.c.l.b16 %v39
  %v156 = vunpack.c.l.b16 %v40
  %v157 = vunpack.c.l.b16 %v41
  %v158 = vunpack.c.l.b16 %v42
  %v159 = vunpack.c.l.b16 %v43
  %v160 = vunpack.c.l.b16 %v44
  %v161 = vunpack.c.l.b16 %v45
  %v162 = vunpack.c.l.b16 %v46
  %v163 = vunpack.c.l.b16 %v47
  %v164 = vunpack.c.l.b16 %v48
  %v165 = vunpack.c.l.b16 %v49
  %v166 = vunpack.c.l.b16 %v50
  %v167 = vunpack.c.l.b16 %v51
  %v168 = vunpack.c.l.b16 %v52
  %v169 = vunpack.c.l.b16 %v53
  %v170 = vunpack.c.l.b16 %v54
  %v171 = vunpack.c.l.b16 %v55
  %v172 = vunpack.c.l.b16 %v56
  %v173 = vunpack.c.l.b16 %v57
  %v174 = vunpack.c.l.b16 %v58
  %v175 = vunpack.c.l.b16 %v59
  %v176 = vunpack.c.l.b16 %v60
  %v177 = vunpack.c.l.b16 %v61
  %v178 = vunpack.c.l.b16 %v62
  %v179 = vunpack.c.l.b16 %v63
  %v180 = vunpack.c.l.b16 %v64
  %v181 = vunpack.c.l.b16 %v65
  %v182 = vunpack.c.l.b16 %v66
  %v183 = vunpack.c.l.b16 %v67
  %v184 = vunpack.c.l.b16 %v68
  %v185 = vpack.c.b16 %v138, %v137
  %v186 = vpack.c.b16 %v140, %v139
  %v187 = vpack.c.b16 %v142, %v141
  %v188 = vpack.c.b16 %v144, %v143
  %v189 = vpack.c.b16 %v146, %v145
  %v190 = vpack.c.b16 %v148, %v147
  %v191 = vpack.c.b16 %v150, %v149
  %v192 = vpack.c.b16 %v152, %v151
  %v193 = vpack.c.b16 %v154, %v153
  %v194 = vpack.c.b16 %v156, %v155
  %v195 = vpack.c.b16 %v158, %v157
  %v196 = vpack.c.b16 %v160, %v159
  %v197 = vpack.c.b16 %v162, %v161
  %v198 = vpack.c.b16 %v164, %v163
  %v199 = vpack.c.b16 %v166, %v165
  %v200 = vpack.c.b16 %v168, %v167
  %v201 = vpack.c.b16 %v170, %v169
  %v202 = vpack.c.b16 %v172, %v171
  %v203 = vpack.c.b16 %v174, %v173
  %v204 = vpack.c.b16 %v176, %v175
  %v205 = vpack.c.b16 %v178, %v177
  %v206 = vpack.c.b16 %v180, %v179
  %v207 = vpack.c.b16 %v182, %v181
  %v208 = vpack.c.b16 %v184, %v183
  %233 = vmatpush.bf16.msra.mxu0 %v192
  %234 = vmatpush.bf16.msra.mxu0 %v191
  %235 = vmatpush.bf16.msra.mxu0 %v190
  %236 = vmatpush.bf16.msra.mxu0 %v189
  %237 = vmatpush.bf16.msra.mxu0 %v188
  %238 = vmatpush.bf16.msra.mxu0 %v187
  %239 = vmatpush.bf16.msra.mxu0 %v186
  %240 = vmatpush.bf16.msra.mxu0 %v185
  %241 = vmatmul.bf16.gmra.mxu0 %v83
  %v242 = vpop.f32.mrf.mxu0
  %v243 = vadd.f32 %v71, %v242
  %v244 = vpop.f32.mrf.mxu0
  %v245 = vadd.f32 %v71, %v244
  %246 = vdwg.mxu0
  %247 = vmatpush.bf16.msra.mxu0 %v200
  %248 = vmatpush.bf16.msra.mxu0 %v199
  %249 = vmatpush.bf16.msra.mxu0 %v198
  %250 = vmatpush.bf16.msra.mxu0 %v197
  %251 = vmatpush.bf16.msra.mxu0 %v196
  %252 = vmatpush.bf16.msra.mxu0 %v195
  %253 = vmatpush.bf16.msra.mxu0 %v194
  %254 = vmatpush.bf16.msra.mxu0 %v193
  %255 = vmatmul.bf16.gmra.mxu0 %v84
  %v256 = vpop.f32.mrf.mxu0
  %v257 = vadd.f32 %v243, %v256
  %v258 = vpop.f32.mrf.mxu0
  %v259 = vadd.f32 %v245, %v258
  %260 = vdwg.mxu0
  %261 = vmatpush.bf16.msra.mxu0 %v208
  %262 = vmatpush.bf16.msra.mxu0 %v207
  %263 = vmatpush.bf16.msra.mxu0 %v206
  %264 = vmatpush.bf16.msra.mxu0 %v205
  %265 = vmatpush.bf16.msra.mxu0 %v204
  %266 = vmatpush.bf16.msra.mxu0 %v203
  %267 = vmatpush.bf16.msra.mxu0 %v202
  %268 = vmatpush.bf16.msra.mxu0 %v201
  %269 = vmatmul.bf16.gmra.mxu0 %v85
  %v270 = vpop.f32.mrf.mxu0
  %v271 = vadd.f32 %v257, %v270
  %v272 = vpop.f32.mrf.mxu0
  %v273 = vadd.f32 %v259, %v272
  %274 = vdwg.mxu0
  %v275 = vld [vmem:[%s3] sm:$0xf]
  %v276 = vld [vmem:[%s3 + $0x4] sm:$0xf]
  %v277 = vunpack.c.l.bf16 %v275
  %v278 = vunpack.c.l.bf16 %v276
  %v279 = vadd.f32 %v271, %v277
  %v280 = vadd.f32 %v273, %v278
  %v281 = vmax.f32 %v279, 0.0
  %v282 = vmax.f32 %v280, 0.0
  %v283 = vpack.c.bf16 %v281, %v281
  %v284 = vpack.c.bf16 %v282, %v282
  %285 = vst [vmem:[%s4] sm:$0xf] %v283
  %286 = vst [vmem:[%s4 + $0x4] sm:$0xf] %v284
  // Predicated region
  $region18: #{resnet_forward.31} parent=0 // pred_check
    _
  $region19: #{resnet_forward.31} parent=0 // pred_check_branch
    %288 = sbr.rel (0) target = $region21
  $region20: #{resnet_forward.31} parent=0 // pred_region
    _
  $region21: #{resnet_forward.31} parent=0 // pred_fallthru
    _
  // Predicated region
  $region22: #{resnet_forward.31} parent=0 // pred_check
    _
  $region23: #{resnet_forward.31} parent=0 // pred_check_branch
    %290 = sbr.rel (0) target = $region25
  $region24: #{resnet_forward.31} parent=0 // pred_region
    _
  $region25: #{resnet_forward.31} parent=0 // pred_fallthru
    _

// kernel: resnet_forward.30
$region0: #{resnet_forward.30}
  #allocation0 [shape = 'u32[]', space=smem, size = 0x4, offset = 0x4, fixed_abs, tag = 'smem constant byte address 0x4 - core index']
  #allocation1 [shape = 'u32[72,128]{1,0:T(1,128)}', space=vmem, size = 0x9000, scoped, tag = 'internal scratch']
  %s0 = inlined_call_operand.vmem [shape: bf16[16,384], index: 0, kind: input, shape index: {}]
  %s1 = inlined_call_operand.vmem [shape: bf16[384,128], index: 1, kind: input, shape index: {}]
  %s2 = inlined_call_operand.vmem [shape: f32[1,128], index: 2, kind: input, shape index: {}]
  %s3 = inlined_call_operand.vmem [shape: bf16[16,128], index: 3, kind: output, shape index: {}]
  %s4 = sld [smem:[#allocation0]]
  $region22: #{resnet_forward.30} parent=0
    _
  %s6 = ssub.s32 1, %s4
  %s7 = scalar_select 0, %s6, %s4
  // Predicated region
  $region2: #{resnet_forward.30} parent=0 // pred_check
    _
  $region3: #{resnet_forward.30} parent=0 // pred_check_branch
    %9 = sbr.rel (0) target = $region5
  $region4: #{resnet_forward.30} parent=0 // pred_region
    _
  $region5: #{resnet_forward.30} parent=0 // pred_fallthru
    _
  // Predicated region
  $region6: #{resnet_forward.30} parent=0 // pred_check
    _
  $region7: #{resnet_forward.30} parent=0 // pred_check_branch
    %11 = sbr.rel (0) target = $region9
  $region8: #{resnet_forward.30} parent=0 // pred_region
    _
  $region9: #{resnet_forward.30} parent=0 // pred_fallthru
    _
  // Predicated region
  $region10: #{resnet_forward.30} parent=0 // pred_check
    _
  $region11: #{resnet_forward.30} parent=0 // pred_check_branch
    %13 = sbr.rel (0) target = $region13
  $region12: #{resnet_forward.30} parent=0 // pred_region
    _
  $region13: #{resnet_forward.30} parent=0 // pred_fallthru
    _
  %v14 = vld [vmem:[%s0] sm:$0xff]
  %v15 = vld [vmem:[%s0 + $0x8] sm:$0xf]
  %v16 = vld [vmem:[%s0 + $0xc] sm:$0xff]
  %v17 = vld [vmem:[%s0 + $0x14] sm:$0xf]
  %v18 = vld [vmem:[%s1] sm:$0xf]
  %v19 = vld [vmem:[%s1 + $0x4] sm:$0xf]
  %v20 = vld [vmem:[%s1 + $0x8] sm:$0xf]
  %v21 = vld [vmem:[%s1 + $0xc] sm:$0xf]
  %v22 = vld [vmem:[%s1 + $0x10] sm:$0xf]
  %v23 = vld [vmem:[%s1 + $0x14] sm:$0xf]
  %v24 = vld [vmem:[%s1 + $0x18] sm:$0xf]
  %v25 = vld [vmem:[%s1 + $0x1c] sm:$0xf]
  %v26 = vld [vmem:[%s1 + $0x20] sm:$0xf]
  %v27 = vld [vmem:[%s1 + $0x24] sm:$0xf]
  %v28 = vld [vmem:[%s1 + $0x28] sm:$0xf]
  %v29 = vld [vmem:[%s1 + $0x2c] sm:$0xf]
  %v30 = vld [vmem:[%s1 + $0x30] sm:$0xf]
  %v31 = vld [vmem:[%s1 + $0x34] sm:$0xf]
  %v32 = vld [vmem:[%s1 + $0x38] sm:$0xf]
  %v33 = vld [vmem:[%s1 + $0x3c] sm:$0xf]
  %v34 = vld [vmem:[%s1 + $0x40] sm:$0xf]
  %v35 = vld [vmem:[%s1 + $0x44] sm:$0xf]
  %v36 = vld [vmem:[%s1 + $0x48] sm:$0xf]
  %v37 = vld [vmem:[%s1 + $0x4c] sm:$0xf]
  %v38 = vld [vmem:[%s1 + $0x50] sm:$0xf]
  %v39 = vld [vmem:[%s1 + $0x54] sm:$0xf]
  %v40 = vld [vmem:[%s1 + $0x58] sm:$0xf]
  %v41 = vld [vmem:[%s1 + $0x5c] sm:$0xf]
  %v42 = vld [vmem:[%s1 + $0x60] sm:$0xf]
  %v43 = vld [vmem:[%s1 + $0x64] sm:$0xf]
  %v44 = vld [vmem:[%s1 + $0x68] sm:$0xf]
  %v45 = vld [vmem:[%s1 + $0x6c] sm:$0xf]
  %v46 = vld [vmem:[%s1 + $0x70] sm:$0xf]
  %v47 = vld [vmem:[%s1 + $0x74] sm:$0xf]
  %v48 = vld [vmem:[%s1 + $0x78] sm:$0xf]
  %v49 = vld [vmem:[%s1 + $0x7c] sm:$0xf]
  %v50 = vld [vmem:[%s1 + $0x80] sm:$0xf]
  %v51 = vld [vmem:[%s1 + $0x84] sm:$0xf]
  %v52 = vld [vmem:[%s1 + $0x88] sm:$0xf]
  %v53 = vld [vmem:[%s1 + $0x8c] sm:$0xf]
  %v54 = vld [vmem:[%s1 + $0x90] sm:$0xf]
  %v55 = vld [vmem:[%s1 + $0x94] sm:$0xf]
  %v56 = vld [vmem:[%s1 + $0x98] sm:$0xf]
  %v57 = vld [vmem:[%s1 + $0x9c] sm:$0xf]
  %v58 = vld [vmem:[%s1 + $0xa0] sm:$0xf]
  %v59 = vld [vmem:[%s1 + $0xa4] sm:$0xf]
  %v60 = vld [vmem:[%s1 + $0xa8] sm:$0xf]
  %v61 = vld [vmem:[%s1 + $0xac] sm:$0xf]
  %v62 = vld [vmem:[%s1 + $0xb0] sm:$0xf]
  %v63 = vld [vmem:[%s1 + $0xb4] sm:$0xf]
  %v64 = vld [vmem:[%s1 + $0xb8] sm:$0xf]
  %v65 = vld [vmem:[%s1 + $0xbc] sm:$0xf]
  %v66 = vld [vmem:[%s2] sm:$0x1]
  %v68 = vperm.slane %v66, 0
  %v74 = vunpack.c.l.b16 %v14
  %v75 = vunpack.c.h.b16 %v14
  %v76 = vunpack.c.l.b16 %v15
  %v77 = vunpack.c.l.b16 %v16
  %v78 = vunpack.c.h.b16 %v16
  %v79 = vunpack.c.l.b16 %v17
  %v80 = vpack.c.b16 %v77, %v74
  %v81 = vpack.c.b16 %v78, %v75
  %v82 = vpack.c.b16 %v79, %v76
  %v134 = vunpack.c.l.b16 %v18
  %v135 = vunpack.c.l.b16 %v19
  %v136 = vunpack.c.l.b16 %v20
  %v137 = vunpack.c.l.b16 %v21
  %v138 = vunpack.c.l.b16 %v22
  %v139 = vunpack.c.l.b16 %v23
  %v140 = vunpack.c.l.b16 %v24
  %v141 = vunpack.c.l.b16 %v25
  %v142 = vunpack.c.l.b16 %v26
  %v143 = vunpack.c.l.b16 %v27
  %v144 = vunpack.c.l.b16 %v28
  %v145 = vunpack.c.l.b16 %v29
  %v146 = vunpack.c.l.b16 %v30
  %v147 = vunpack.c.l.b16 %v31
  %v148 = vunpack.c.l.b16 %v32
  %v149 = vunpack.c.l.b16 %v33
  %v150 = vunpack.c.l.b16 %v34
  %v151 = vunpack.c.l.b16 %v35
  %v152 = vunpack.c.l.b16 %v36
  %v153 = vunpack.c.l.b16 %v37
  %v154 = vunpack.c.l.b16 %v38
  %v155 = vunpack.c.l.b16 %v39
  %v156 = vunpack.c.l.b16 %v40
  %v157 = vunpack.c.l.b16 %v41
  %v158 = vunpack.c.l.b16 %v42
  %v159 = vunpack.c.l.b16 %v43
  %v160 = vunpack.c.l.b16 %v44
  %v161 = vunpack.c.l.b16 %v45
  %v162 = vunpack.c.l.b16 %v46
  %v163 = vunpack.c.l.b16 %v47
  %v164 = vunpack.c.l.b16 %v48
  %v165 = vunpack.c.l.b16 %v49
  %v166 = vunpack.c.l.b16 %v50
  %v167 = vunpack.c.l.b16 %v51
  %v168 = vunpack.c.l.b16 %v52
  %v169 = vunpack.c.l.b16 %v53
  %v170 = vunpack.c.l.b16 %v54
  %v171 = vunpack.c.l.b16 %v55
  %v172 = vunpack.c.l.b16 %v56
  %v173 = vunpack.c.l.b16 %v57
  %v174 = vunpack.c.l.b16 %v58
  %v175 = vunpack.c.l.b16 %v59
  %v176 = vunpack.c.l.b16 %v60
  %v177 = vunpack.c.l.b16 %v61
  %v178 = vunpack.c.l.b16 %v62
  %v179 = vunpack.c.l.b16 %v63
  %v180 = vunpack.c.l.b16 %v64
  %v181 = vunpack.c.l.b16 %v65
  %v182 = vpack.c.b16 %v135, %v134
  %v183 = vpack.c.b16 %v137, %v136
  %v184 = vpack.c.b16 %v139, %v138
  %v185 = vpack.c.b16 %v141, %v140
  %v186 = vpack.c.b16 %v143, %v142
  %v187 = vpack.c.b16 %v145, %v144
  %v188 = vpack.c.b16 %v147, %v146
  %v189 = vpack.c.b16 %v149, %v148
  %v190 = vpack.c.b16 %v151, %v150
  %v191 = vpack.c.b16 %v153, %v152
  %v192 = vpack.c.b16 %v155, %v154
  %v193 = vpack.c.b16 %v157, %v156
  %v194 = vpack.c.b16 %v159, %v158
  %v195 = vpack.c.b16 %v161, %v160
  %v196 = vpack.c.b16 %v163, %v162
  %v197 = vpack.c.b16 %v165, %v164
  %v198 = vpack.c.b16 %v167, %v166
  %v199 = vpack.c.b16 %v169, %v168
  %v200 = vpack.c.b16 %v171, %v170
  %v201 = vpack.c.b16 %v173, %v172
  %v202 = vpack.c.b16 %v175, %v174
  %v203 = vpack.c.b16 %v177, %v176
  %v204 = vpack.c.b16 %v179, %v178
  %v205 = vpack.c.b16 %v181, %v180
  %230 = vmatpush.bf16.msra.mxu0 %v189
  %231 = vmatpush.bf16.msra.mxu0 %v188
  %232 = vmatpush.bf16.msra.mxu0 %v187
  %233 = vmatpush.bf16.msra.mxu0 %v186
  %234 = vmatpush.bf16.msra.mxu0 %v185
  %235 = vmatpush.bf16.msra.mxu0 %v184
  %236 = vmatpush.bf16.msra.mxu0 %v183
  %237 = vmatpush.bf16.msra.mxu0 %v182
  %238 = vmatmul.bf16.gmra.mxu0 %v80
  %v239 = vpop.f32.mrf.mxu0
  %v240 = vadd.f32 %v68, %v239
  %v241 = vpop.f32.mrf.mxu0
  %v242 = vadd.f32 %v68, %v241
  %243 = vdwg.mxu0
  %244 = vmatpush.bf16.msra.mxu0 %v197
  %245 = vmatpush.bf16.msra.mxu0 %v196
  %246 = vmatpush.bf16.msra.mxu0 %v195
  %247 = vmatpush.bf16.msra.mxu0 %v194
  %248 = vmatpush.bf16.msra.mxu0 %v193
  %249 = vmatpush.bf16.msra.mxu0 %v192
  %250 = vmatpush.bf16.msra.mxu0 %v191
  %251 = vmatpush.bf16.msra.mxu0 %v190
  %252 = vmatmul.bf16.gmra.mxu0 %v81
  %v253 = vpop.f32.mrf.mxu0
  %v254 = vadd.f32 %v240, %v253
  %v255 = vpop.f32.mrf.mxu0
  %v256 = vadd.f32 %v242, %v255
  %257 = vdwg.mxu0
  %258 = vmatpush.bf16.msra.mxu0 %v205
  %259 = vmatpush.bf16.msra.mxu0 %v204
  %260 = vmatpush.bf16.msra.mxu0 %v203
  %261 = vmatpush.bf16.msra.mxu0 %v202
  %262 = vmatpush.bf16.msra.mxu0 %v201
  %263 = vmatpush.bf16.msra.mxu0 %v200
  %264 = vmatpush.bf16.msra.mxu0 %v199
  %265 = vmatpush.bf16.msra.mxu0 %v198
  %266 = vmatmul.bf16.gmra.mxu0 %v82
  %v267 = vpop.f32.mrf.mxu0
  %v268 = vadd.f32 %v254, %v267
  %v269 = vpop.f32.mrf.mxu0
  %v270 = vadd.f32 %v256, %v269
  %271 = vdwg.mxu0
  %v272 = vmax.f32 %v268, 0.0
  %v273 = vmax.f32 %v270, 0.0
  %v274 = vpack.c.bf16 %v272, %v272
  %v275 = vpack.c.bf16 %v273, %v273
  %276 = vst [vmem:[%s3] sm:$0xf] %v274
  %277 = vst [vmem:[%s3 + $0x4] sm:$0xf] %v275
  // Predicated region
  $region14: #{resnet_forward.30} parent=0 // pred_check
    _
  $region15: #{resnet_forward.30} parent=0 // pred_check_branch
    %279 = sbr.rel (0) target = $region17
  $region16: #{resnet_forward.30} parent=0 // pred_region
    _
  $region17: #{resnet_forward.30} parent=0 // pred_fallthru
    _
  // Predicated region
  $region18: #{resnet_forward.30} parent=0 // pred_check
    _
  $region19: #{resnet_forward.30} parent=0 // pred_check_branch
    %281 = sbr.rel (0) target = $region21
  $region20: #{resnet_forward.30} parent=0 // pred_region
    _
  $region21: #{resnet_forward.30} parent=0 // pred_fallthru
    _

// kernel: resnet_forward.33
$region0: #{resnet_forward.33}
  #allocation0 [shape = 'u32[]', space=smem, size = 0x4, offset = 0x4, fixed_abs, tag = 'smem constant byte address 0x4 - core index']
  #allocation1 [shape = 'u32[72,128]{1,0:T(1,128)}', space=vmem, size = 0x9000, scoped, tag = 'internal scratch']
  %s0 = inlined_call_operand.vmem [shape: bf16[16,768], index: 0, kind: input, shape index: {}]
  %s1 = inlined_call_operand.vmem [shape: bf16[768,128], index: 1, kind: input, shape index: {}]
  %s2 = inlined_call_operand.vmem [shape: f32[1,128], index: 2, kind: input, shape index: {}]
  %s3 = inlined_call_operand.vmem [shape: bf16[16,128], index: 3, kind: output, shape index: {}]
  %s4 = sld [smem:[#allocation0]]
  $region22: #{resnet_forward.33} parent=0
    _
  %s6 = ssub.s32 1, %s4
  %s7 = scalar_select 0, %s6, %s4
  // Predicated region
  $region2: #{resnet_forward.33} parent=0 // pred_check
    _
  $region3: #{resnet_forward.33} parent=0 // pred_check_branch
    %9 = sbr.rel (0) target = $region5
  $region4: #{resnet_forward.33} parent=0 // pred_region
    _
  $region5: #{resnet_forward.33} parent=0 // pred_fallthru
    _
  // Predicated region
  $region6: #{resnet_forward.33} parent=0 // pred_check
    _
  $region7: #{resnet_forward.33} parent=0 // pred_check_branch
    %11 = sbr.rel (0) target = $region9
  $region8: #{resnet_forward.33} parent=0 // pred_region
    _
  $region9: #{resnet_forward.33} parent=0 // pred_fallthru
    _
  // Predicated region
  $region10: #{resnet_forward.33} parent=0 // pred_check
    _
  $region11: #{resnet_forward.33} parent=0 // pred_check_branch
    %13 = sbr.rel (0) target = $region13
  $region12: #{resnet_forward.33} parent=0 // pred_region
    _
  $region13: #{resnet_forward.33} parent=0 // pred_fallthru
    _
  %v14 = vld [vmem:[%s0] sm:$0xff]
  %v15 = vld [vmem:[%s0 + $0x8] sm:$0xff]
  %v16 = vld [vmem:[%s0 + $0x10] sm:$0xff]
  %v17 = vld [vmem:[%s0 + $0x18] sm:$0xff]
  %v18 = vld [vmem:[%s0 + $0x20] sm:$0xff]
  %v19 = vld [vmem:[%s0 + $0x28] sm:$0xff]
  %v20 = vld [vmem:[%s1] sm:$0xf]
  %v21 = vld [vmem:[%s1 + $0x4] sm:$0xf]
  %v22 = vld [vmem:[%s1 + $0x8] sm:$0xf]
  %v23 = vld [vmem:[%s1 + $0xc] sm:$0xf]
  %v24 = vld [vmem:[%s1 + $0x10] sm:$0xf]
  %v25 = vld [vmem:[%s1 + $0x14] sm:$0xf]
  %v26 = vld [vmem:[%s1 + $0x18] sm:$0xf]
  %v27 = vld [vmem:[%s1 + $0x1c] sm:$0xf]
  %v28 = vld [vmem:[%s1 + $0x20] sm:$0xf]
  %v29 = vld [vmem:[%s1 + $0x24] sm:$0xf]
  %v30 = vld [vmem:[%s1 + $0x28] sm:$0xf]
  %v31 = vld [vmem:[%s1 + $0x2c] sm:$0xf]
  %v32 = vld [vmem:[%s1 + $0x30] sm:$0xf]
  %v33 = vld [vmem:[%s1 + $0x34] sm:$0xf]
  %v34 = vld [vmem:[%s1 + $0x38] sm:$0xf]
  %v35 = vld [vmem:[%s1 + $0x3c] sm:$0xf]
  %v36 = vld [vmem:[%s1 + $0x40] sm:$0xf]
  %v37 = vld [vmem:[%s1 + $0x44] sm:$0xf]
  %v38 = vld [vmem:[%s1 + $0x48] sm:$0xf]
  %v39 = vld [vmem:[%s1 + $0x4c] sm:$0xf]
  %v40 = vld [vmem:[%s1 + $0x50] sm:$0xf]
  %v41 = vld [vmem:[%s1 + $0x54] sm:$0xf]
  %v42 = vld [vmem:[%s1 + $0x58] sm:$0xf]
  %v43 = vld [vmem:[%s1 + $0x5c] sm:$0xf]
  %v44 = vld [vmem:[%s1 + $0x60] sm:$0xf]
  %v45 = vld [vmem:[%s1 + $0x64] sm:$0xf]
  %v46 = vld [vmem:[%s1 + $0x68] sm:$0xf]
  %v47 = vld [vmem:[%s1 + $0x6c] sm:$0xf]
  %v48 = vld [vmem:[%s1 + $0x70] sm:$0xf]
  %v49 = vld [vmem:[%s1 + $0x74] sm:$0xf]
  %v50 = vld [vmem:[%s1 + $0x78] sm:$0xf]
  %v51 = vld [vmem:[%s1 + $0x7c] sm:$0xf]
  %v52 = vld [vmem:[%s1 + $0x80] sm:$0xf]
  %v53 = vld [vmem:[%s1 + $0x84] sm:$0xf]
  %v54 = vld [vmem:[%s1 + $0x88] sm:$0xf]
  %v55 = vld [vmem:[%s1 + $0x8c] sm:$0xf]
  %v56 = vld [vmem:[%s1 + $0x90] sm:$0xf]
  %v57 = vld [vmem:[%s1 + $0x94] sm:$0xf]
  %v58 = vld [vmem:[%s1 + $0x98] sm:$0xf]
  %v59 = vld [vmem:[%s1 + $0x9c] sm:$0xf]
  %v60 = vld [vmem:[%s1 + $0xa0] sm:$0xf]
  %v61 = vld [vmem:[%s1 + $0xa4] sm:$0xf]
  %v62 = vld [vmem:[%s1 + $0xa8] sm:$0xf]
  %v63 = vld [vmem:[%s1 + $0xac] sm:$0xf]
  %v64 = vld [vmem:[%s1 + $0xb0] sm:$0xf]
  %v65 = vld [vmem:[%s1 + $0xb4] sm:$0xf]
  %v66 = vld [vmem:[%s1 + $0xb8] sm:$0xf]
  %v67 = vld [vmem:[%s1 + $0xbc] sm:$0xf]
  %v68 = vld [vmem:[%s1 + $0xc0] sm:$0xf]
  %v69 = vld [vmem:[%s1 + $0xc4] sm:$0xf]
  %v70 = vld [vmem:[%s1 + $0xc8] sm:$0xf]
  %v71 = vld [vmem:[%s1 + $0xcc] sm:$0xf]
  %v72 = vld [vmem:[%s1 + $0xd0] sm:$0xf]
  %v73 = vld [vmem:[%s1 + $0xd4] sm:$0xf]
  %v74 = vld [vmem:[%s1 + $0xd8] sm:$0xf]
  %v75 = vld [vmem:[%s1 + $0xdc] sm:$0xf]
  %v76 = vld [vmem:[%s1 + $0xe0] sm:$0xf]
  %v77 = vld [vmem:[%s1 + $0xe4] sm:$0xf]
  %v78 = vld [vmem:[%s1 + $0xe8] sm:$0xf]
  %v79 = vld [vmem:[%s1 + $0xec] sm:$0xf]
  %v80 = vld [vmem:[%s1 + $0xf0] sm:$0xf]
  %v81 = vld [vmem:[%s1 + $0xf4] sm:$0xf]
  %v82 = vld [vmem:[%s1 + $0xf8] sm:$0xf]
  %v83 = vld [vmem:[%s1 + $0xfc] sm:$0xf]
  %v84 = vld [vmem:[%s1 + $0x100] sm:$0xf]
  %v85 = vld [vmem:[%s1 + $0x104] sm:$0xf]
  %v86 = vld [vmem:[%s1 + $0x108] sm:$0xf]
  %v87 = vld [vmem:[%s1 + $0x10c] sm:$0xf]
  %v88 = vld [vmem:[%s1 + $0x110] sm:$0xf]
  %v89 = vld [vmem:[%s1 + $0x114] sm:$0xf]
  %v90 = vld [vmem:[%s1 + $0x118] sm:$0xf]
  %v91 = vld [vmem:[%s1 + $0x11c] sm:$0xf]
  %v92 = vld [vmem:[%s1 + $0x120] sm:$0xf]
  %v93 = vld [vmem:[%s1 + $0x124] sm:$0xf]
  %v94 = vld [vmem:[%s1 + $0x128] sm:$0xf]
  %v95 = vld [vmem:[%s1 + $0x12c] sm:$0xf]
  %v96 = vld [vmem:[%s1 + $0x130] sm:$0xf]
  %v97 = vld [vmem:[%s1 + $0x134] sm:$0xf]
  %v98 = vld [vmem:[%s1 + $0x138] sm:$0xf]
  %v99 = vld [vmem:[%s1 + $0x13c] sm:$0xf]
  %v100 = vld [vmem:[%s1 + $0x140] sm:$0xf]
  %v101 = vld [vmem:[%s1 + $0x144] sm:$0xf]
  %v102 = vld [vmem:[%s1 + $0x148] sm:$0xf]
  %v103 = vld [vmem:[%s1 + $0x14c] sm:$0xf]
  %v104 = vld [vmem:[%s1 + $0x150] sm:$0xf]
  %v105 = vld [vmem:[%s1 + $0x154] sm:$0xf]
  %v106 = vld [vmem:[%s1 + $0x158] sm:$0xf]
  %v107 = vld [vmem:[%s1 + $0x15c] sm:$0xf]
  %v108 = vld [vmem:[%s1 + $0x160] sm:$0xf]
  %v109 = vld [vmem:[%s1 + $0x164] sm:$0xf]
  %v110 = vld [vmem:[%s1 + $0x168] sm:$0xf]
  %v111 = vld [vmem:[%s1 + $0x16c] sm:$0xf]
  %v112 = vld [vmem:[%s1 + $0x170] sm:$0xf]
  %v113 = vld [vmem:[%s1 + $0x174] sm:$0xf]
  %v114 = vld [vmem:[%s1 + $0x178] sm:$0xf]
  %v115 = vld [vmem:[%s1 + $0x17c] sm:$0xf]
  %v116 = vld [vmem:[%s2] sm:$0x1]
  %v118 = vperm.slane %v116, 0
  %v126 = vunpack.c.l.b16 %v14
  %v127 = vunpack.c.h.b16 %v14
  %v128 = vunpack.c.l.b16 %v15
  %v129 = vunpack.c.h.b16 %v15
  %v130 = vunpack.c.l.b16 %v16
  %v131 = vunpack.c.h.b16 %v16
  %v132 = vunpack.c.l.b16 %v17
  %v133 = vunpack.c.h.b16 %v17
  %v134 = vunpack.c.l.b16 %v18
  %v135 = vunpack.c.h.b16 %v18
  %v136 = vunpack.c.l.b16 %v19
  %v137 = vunpack.c.h.b16 %v19
  %v138 = vpack.c.b16 %v132, %v126
  %v139 = vpack.c.b16 %v133, %v127
  %v140 = vpack.c.b16 %v134, %v128
  %v141 = vpack.c.b16 %v135, %v129
  %v142 = vpack.c.b16 %v136, %v130
  %v143 = vpack.c.b16 %v137, %v131
  %v246 = vunpack.c.l.b16 %v20
  %v247 = vunpack.c.l.b16 %v21
  %v248 = vunpack.c.l.b16 %v22
  %v249 = vunpack.c.l.b16 %v23
  %v250 = vunpack.c.l.b16 %v24
  %v251 = vunpack.c.l.b16 %v25
  %v252 = vunpack.c.l.b16 %v26
  %v253 = vunpack.c.l.b16 %v27
  %v254 = vunpack.c.l.b16 %v28
  %v255 = vunpack.c.l.b16 %v29
  %v256 = vunpack.c.l.b16 %v30
  %v257 = vunpack.c.l.b16 %v31
  %v258 = vunpack.c.l.b16 %v32
  %v259 = vunpack.c.l.b16 %v33
  %v260 = vunpack.c.l.b16 %v34
  %v261 = vunpack.c.l.b16 %v35
  %v262 = vunpack.c.l.b16 %v36
  %v263 = vunpack.c.l.b16 %v37
  %v264 = vunpack.c.l.b16 %v38
  %v265 = vunpack.c.l.b16 %v39
  %v266 = vunpack.c.l.b16 %v40
  %v267 = vunpack.c.l.b16 %v41
  %v268 = vunpack.c.l.b16 %v42
  %v269 = vunpack.c.l.b16 %v43
  %v270 = vunpack.c.l.b16 %v44
  %v271 = vunpack.c.l.b16 %v45
  %v272 = vunpack.c.l.b16 %v46
  %v273 = vunpack.c.l.b16 %v47
  %v274 = vunpack.c.l.b16 %v48
  %v275 = vunpack.c.l.b16 %v49
  %v276 = vunpack.c.l.b16 %v50
  %v277 = vunpack.c.l.b16 %v51
  %v278 = vunpack.c.l.b16 %v52
  %v279 = vunpack.c.l.b16 %v53
  %v280 = vunpack.c.l.b16 %v54
  %v281 = vunpack.c.l.b16 %v55
  %v282 = vunpack.c.l.b16 %v56
  %v283 = vunpack.c.l.b16 %v57
  %v284 = vunpack.c.l.b16 %v58
  %v285 = vunpack.c.l.b16 %v59
  %v286 = vunpack.c.l.b16 %v60
  %v287 = vunpack.c.l.b16 %v61
  %v288 = vunpack.c.l.b16 %v62
  %v289 = vunpack.c.l.b16 %v63
  %v290 = vunpack.c.l.b16 %v64
  %v291 = vunpack.c.l.b16 %v65
  %v292 = vunpack.c.l.b16 %v66
  %v293 = vunpack.c.l.b16 %v67
  %v294 = vunpack.c.l.b16 %v68
  %v295 = vunpack.c.l.b16 %v69
  %v296 = vunpack.c.l.b16 %v70
  %v297 = vunpack.c.l.b16 %v71
  %v298 = vunpack.c.l.b16 %v72
  %v299 = vunpack.c.l.b16 %v73
  %v300 = vunpack.c.l.b16 %v74
  %v301 = vunpack.c.l.b16 %v75
  %v302 = vunpack.c.l.b16 %v76
  %v303 = vunpack.c.l.b16 %v77
  %v304 = vunpack.c.l.b16 %v78
  %v305 = vunpack.c.l.b16 %v79
  %v306 = vunpack.c.l.b16 %v80
  %v307 = vunpack.c.l.b16 %v81
  %v308 = vunpack.c.l.b16 %v82
  %v309 = vunpack.c.l.b16 %v83
  %v310 = vunpack.c.l.b16 %v84
  %v311 = vunpack.c.l.b16 %v85
  %v312 = vunpack.c.l.b16 %v86
  %v313 = vunpack.c.l.b16 %v87
  %v314 = vunpack.c.l.b16 %v88
  %v315 = vunpack.c.l.b16 %v89
  %v316 = vunpack.c.l.b16 %v90
  %v317 = vunpack.c.l.b16 %v91
  %v318 = vunpack.c.l.b16 %v92
  %v319 = vunpack.c.l.b16 %v93
  %v320 = vunpack.c.l.b16 %v94
  %v321 = vunpack.c.l.b16 %v95
  %v322 = vunpack.c.l.b16 %v96
  %v323 = vunpack.c.l.b16 %v97
  %v324 = vunpack.c.l.b16 %v98
  %v325 = vunpack.c.l.b16 %v99
  %v326 = vunpack.c.l.b16 %v100
  %v327 = vunpack.c.l.b16 %v101
  %v328 = vunpack.c.l.b16 %v102
  %v329 = vunpack.c.l.b16 %v103
  %v330 = vunpack.c.l.b16 %v104
  %v331 = vunpack.c.l.b16 %v105
  %v332 = vunpack.c.l.b16 %v106
  %v333 = vunpack.c.l.b16 %v107
  %v334 = vunpack.c.l.b16 %v108
  %v335 = vunpack.c.l.b16 %v109
  %v336 = vunpack.c.l.b16 %v110
  %v337 = vunpack.c.l.b16 %v111
  %v338 = vunpack.c.l.b16 %v112
  %v339 = vunpack.c.l.b16 %v113
  %v340 = vunpack.c.l.b16 %v114
  %v341 = vunpack.c.l.b16 %v115
  %v342 = vpack.c.b16 %v247, %v246
  %v343 = vpack.c.b16 %v249, %v248
  %v344 = vpack.c.b16 %v251, %v250
  %v345 = vpack.c.b16 %v253, %v252
  %v346 = vpack.c.b16 %v255, %v254
  %v347 = vpack.c.b16 %v257, %v256
  %v348 = vpack.c.b16 %v259, %v258
  %v349 = vpack.c.b16 %v261, %v260
  %v350 = vpack.c.b16 %v263, %v262
  %v351 = vpack.c.b16 %v265, %v264
  %v352 = vpack.c.b16 %v267, %v266
  %v353 = vpack.c.b16 %v269, %v268
  %v354 = vpack.c.b16 %v271, %v270
  %v355 = vpack.c.b16 %v273, %v272
  %v356 = vpack.c.b16 %v275, %v274
  %v357 = vpack.c.b16 %v277, %v276
  %v358 = vpack.c.b16 %v279, %v278
  %v359 = vpack.c.b16 %v281, %v280
  %v360 = vpack.c.b16 %v283, %v282
  %v361 = vpack.c.b16 %v285, %v284
  %v362 = vpack.c.b16 %v287, %v286
  %v363 = vpack.c.b16 %v289, %v288
  %v364 = vpack.c.b16 %v291, %v290
  %v365 = vpack.c.b16 %v293, %v292
  %v366 = vpack.c.b16 %v295, %v294
  %v367 = vpack.c.b16 %v297, %v296
  %v368 = vpack.c.b16 %v299, %v298
  %v369 = vpack.c.b16 %v301, %v300
  %v370 = vpack.c.b16 %v303, %v302
  %v371 = vpack.c.b16 %v305, %v304
  %v372 = vpack.c.b16 %v307, %v306
  %v373 = vpack.c.b16 %v309, %v308
  %v374 = vpack.c.b16 %v311, %v310
  %v375 = vpack.c.b16 %v313, %v312
  %v376 = vpack.c.b16 %v315, %v314
  %v377 = vpack.c.b16 %v317, %v316
  %v378 = vpack.c.b16 %v319, %v318
  %v379 = vpack.c.b16 %v321, %v320
  %v380 = vpack.c.b16 %v323, %v322
  %v381 = vpack.c.b16 %v325, %v324
  %v382 = vpack.c.b16 %v327, %v326
  %v383 = vpack.c.b16 %v329, %v328
  %v384 = vpack.c.b16 %v331, %v330
  %v385 = vpack.c.b16 %v333, %v332
  %v386 = vpack.c.b16 %v335, %v334
  %v387 = vpack.c.b16 %v337, %v336
  %v388 = vpack.c.b16 %v339, %v338
  %v389 = vpack.c.b16 %v341, %v340
  %438 = vmatpush.bf16.msra.mxu0 %v349
  %439 = vmatpush.bf16.msra.mxu0 %v348
  %440 = vmatpush.bf16.msra.mxu0 %v347
  %441 = vmatpush.bf16.msra.mxu0 %v346
  %442 = vmatpush.bf16.msra.mxu0 %v345
  %443 = vmatpush.bf16.msra.mxu0 %v344
  %444 = vmatpush.bf16.msra.mxu0 %v343
  %445 = vmatpush.bf16.msra.mxu0 %v342
  %446 = vmatmul.bf16.gmra.mxu0 %v138
  %v447 = vpop.f32.mrf.mxu0
  %v448 = vadd.f32 %v118, %v447
  %v449 = vpop.f32.mrf.mxu0
  %v450 = vadd.f32 %v118, %v449
  %451 = vdwg.mxu0
  %452 = vmatpush.bf16.msra.mxu0 %v357
  %453 = vmatpush.bf16.msra.mxu0 %v356
  %454 = vmatpush.bf16.msra.mxu0 %v355
  %455 = vmatpush.bf16.msra.mxu0 %v354
  %456 = vmatpush.bf16.msra.mxu0 %v353
  %457 = vmatpush.bf16.msra.mxu0 %v352
  %458 = vmatpush.bf16.msra.mxu0 %v351
  %459 = vmatpush.bf16.msra.mxu0 %v350
  %460 = vmatmul.bf16.gmra.mxu0 %v139
  %v461 = vpop.f32.mrf.mxu0
  %v462 = vadd.f32 %v448, %v461
  %v463 = vpop.f32.mrf.mxu0
  %v464 = vadd.f32 %v450, %v463
  %465 = vdwg.mxu0
  %466 = vmatpush.bf16.msra.mxu0 %v365
  %467 = vmatpush.bf16.msra.mxu0 %v364
  %468 = vmatpush.bf16.msra.mxu0 %v363
  %469 = vmatpush.bf16.msra.mxu0 %v362
  %470 = vmatpush.bf16.msra.mxu0 %v361
  %471 = vmatpush.bf16.msra.mxu0 %v360
  %472 = vmatpush.bf16.msra.mxu0 %v359
  %473 = vmatpush.bf16.msra.mxu0 %v358
  %474 = vmatmul.bf16.gmra.mxu0 %v140
  %v475 = vpop.f32.mrf.mxu0
  %v476 = vadd.f32 %v462, %v475
  %v477 = vpop.f32.mrf.mxu0
  %v478 = vadd.f32 %v464, %v477
  %479 = vdwg.mxu0
  %480 = vmatpush.bf16.msra.mxu0 %v373
  %481 = vmatpush.bf16.msra.mxu0 %v372
  %482 = vmatpush.bf16.msra.mxu0 %v371
  %483 = vmatpush.bf16.msra.mxu0 %v370
  %484 = vmatpush.bf16.msra.mxu0 %v369
  %485 = vmatpush.bf16.msra.mxu0 %v368
  %486 = vmatpush.bf16.msra.mxu0 %v367
  %487 = vmatpush.bf16.msra.mxu0 %v366
  %488 = vmatmul.bf16.gmra.mxu0 %v141
  %v489 = vpop.f32.mrf.mxu0
  %v490 = vadd.f32 %v476, %v489
  %v491 = vpop.f32.mrf.mxu0
  %v492 = vadd.f32 %v478, %v491
  %493 = vdwg.mxu0
  %494 = vmatpush.bf16.msra.mxu0 %v381
  %495 = vmatpush.bf16.msra.mxu0 %v380
  %496 = vmatpush.bf16.msra.mxu0 %v379
  %497 = vmatpush.bf16.msra.mxu0 %v378
  %498 = vmatpush.bf16.msra.mxu0 %v377
  %499 = vmatpush.bf16.msra.mxu0 %v376
  %500 = vmatpush.bf16.msra.mxu0 %v375
  %501 = vmatpush.bf16.msra.mxu0 %v374
  %502 = vmatmul.bf16.gmra.mxu0 %v142
  %v503 = vpop.f32.mrf.mxu0
  %v504 = vadd.f32 %v490, %v503
  %v505 = vpop.f32.mrf.mxu0
  %v506 = vadd.f32 %v492, %v505
  %507 = vdwg.mxu0
  %508 = vmatpush.bf16.msra.mxu0 %v389
  %509 = vmatpush.bf16.msra.mxu0 %v388
  %510 = vmatpush.bf16.msra.mxu0 %v387
  %511 = vmatpush.bf16.msra.mxu0 %v386
  %512 = vmatpush.bf16.msra.mxu0 %v385
  %513 = vmatpush.bf16.msra.mxu0 %v384
  %514 = vmatpush.bf16.msra.mxu0 %v383
  %515 = vmatpush.bf16.msra.mxu0 %v382
  %516 = vmatmul.bf16.gmra.mxu0 %v143
  %v517 = vpop.f32.mrf.mxu0
  %v518 = vadd.f32 %v504, %v517
  %v519 = vpop.f32.mrf.mxu0
  %v520 = vadd.f32 %v506, %v519
  %521 = vdwg.mxu0
  %v522 = vmax.f32 %v518, 0.0
  %v523 = vmax.f32 %v520, 0.0
  %v524 = vpack.c.bf16 %v522, %v522
  %v525 = vpack.c.bf16 %v523, %v523
  %526 = vst [vmem:[%s3] sm:$0xf] %v524
  %527 = vst [vmem:[%s3 + $0x4] sm:$0xf] %v525
  // Predicated region
  $region14: #{resnet_forward.33} parent=0 // pred_check
    _
  $region15: #{resnet_forward.33} parent=0 // pred_check_branch
    %529 = sbr.rel (0) target = $region17
  $region16: #{resnet_forward.33} parent=0 // pred_region
    _
  $region17: #{resnet_forward.33} parent=0 // pred_fallthru
    _
  // Predicated region
  $region18: #{resnet_forward.33} parent=0 // pred_check
    _
  $region19: #{resnet_forward.33} parent=0 // pred_check_branch
    %531 = sbr.rel (0) target = $region21
  $region20: #{resnet_forward.33} parent=0 // pred_region
    _
  $region21: #{resnet_forward.33} parent=0 // pred_fallthru
    _

// kernel: resnet_forward.35
$region0: #{resnet_forward.35}
  #allocation0 [shape = 'u32[]', space=smem, size = 0x4, offset = 0x4, fixed_abs, tag = 'smem constant byte address 0x4 - core index']
  #allocation1 [shape = 'u32[72,128]{1,0:T(1,128)}', space=vmem, size = 0x9000, scoped, tag = 'internal scratch']
  %s0 = inlined_call_operand.vmem [shape: bf16[16,640], index: 0, kind: input, shape index: {}]
  %s1 = inlined_call_operand.vmem [shape: bf16[640,128], index: 1, kind: input, shape index: {}]
  %s2 = inlined_call_operand.vmem [shape: f32[1,128], index: 2, kind: input, shape index: {}]
  %s3 = inlined_call_operand.vmem [shape: bf16[16,128], index: 3, kind: input, shape index: {}, may-alias: {3,4}]
  %s4 = inlined_call_operand.vmem [shape: bf16[16,128], index: 4, kind: output, shape index: {}, may-alias: {3,4}]
  %s5 = sld [smem:[#allocation0]]
  $region26: #{resnet_forward.35} parent=0
    _
  %s7 = ssub.s32 1, %s5
  %s8 = scalar_select 0, %s7, %s5
  // Predicated region
  $region2: #{resnet_forward.35} parent=0 // pred_check
    _
  $region3: #{resnet_forward.35} parent=0 // pred_check_branch
    %10 = sbr.rel (0) target = $region5
  $region4: #{resnet_forward.35} parent=0 // pred_region
    _
  $region5: #{resnet_forward.35} parent=0 // pred_fallthru
    _
  // Predicated region
  $region6: #{resnet_forward.35} parent=0 // pred_check
    _
  $region7: #{resnet_forward.35} parent=0 // pred_check_branch
    %12 = sbr.rel (0) target = $region9
  $region8: #{resnet_forward.35} parent=0 // pred_region
    _
  $region9: #{resnet_forward.35} parent=0 // pred_fallthru
    _
  // Predicated region
  $region10: #{resnet_forward.35} parent=0 // pred_check
    _
  $region11: #{resnet_forward.35} parent=0 // pred_check_branch
    %14 = sbr.rel (0) target = $region13
  $region12: #{resnet_forward.35} parent=0 // pred_region
    _
  $region13: #{resnet_forward.35} parent=0 // pred_fallthru
    _
  // Predicated region
  $region14: #{resnet_forward.35} parent=0 // pred_check
    _
  $region15: #{resnet_forward.35} parent=0 // pred_check_branch
    %16 = sbr.rel (0) target = $region17
  $region16: #{resnet_forward.35} parent=0 // pred_region
    _
  $region17: #{resnet_forward.35} parent=0 // pred_fallthru
    _
  %v17 = vld [vmem:[%s0] sm:$0xff]
  %v18 = vld [vmem:[%s0 + $0x8] sm:$0xff]
  %v19 = vld [vmem:[%s0 + $0x10] sm:$0xf]
  %v20 = vld [vmem:[%s0 + $0x14] sm:$0xff]
  %v21 = vld [vmem:[%s0 + $0x1c] sm:$0xff]
  %v22 = vld [vmem:[%s0 + $0x24] sm:$0xf]
  %v23 = vld [vmem:[%s1] sm:$0xf]
  %v24 = vld [vmem:[%s1 + $0x4] sm:$0xf]
  %v25 = vld [vmem:[%s1 + $0x8] sm:$0xf]
  %v26 = vld [vmem:[%s1 + $0xc] sm:$0xf]
  %v27 = vld [vmem:[%s1 + $0x10] sm:$0xf]
  %v28 = vld [vmem:[%s1 + $0x14] sm:$0xf]
  %v29 = vld [vmem:[%s1 + $0x18] sm:$0xf]
  %v30 = vld [vmem:[%s1 + $0x1c] sm:$0xf]
  %v31 = vld [vmem:[%s1 + $0x20] sm:$0xf]
  %v32 = vld [vmem:[%s1 + $0x24] sm:$0xf]
  %v33 = vld [vmem:[%s1 + $0x28] sm:$0xf]
  %v34 = vld [vmem:[%s1 + $0x2c] sm:$0xf]
  %v35 = vld [vmem:[%s1 + $0x30] sm:$0xf]
  %v36 = vld [vmem:[%s1 + $0x34] sm:$0xf]
  %v37 = vld [vmem:[%s1 + $0x38] sm:$0xf]
  %v38 = vld [vmem:[%s1 + $0x3c] sm:$0xf]
  %v39 = vld [vmem:[%s1 + $0x40] sm:$0xf]
  %v40 = vld [vmem:[%s1 + $0x44] sm:$0xf]
  %v41 = vld [vmem:[%s1 + $0x48] sm:$0xf]
  %v42 = vld [vmem:[%s1 + $0x4c] sm:$0xf]
  %v43 = vld [vmem:[%s1 + $0x50] sm:$0xf]
  %v44 = vld [vmem:[%s1 + $0x54] sm:$0xf]
  %v45 = vld [vmem:[%s1 + $0x58] sm:$0xf]
  %v46 = vld [vmem:[%s1 + $0x5c] sm:$0xf]
  %v47 = vld [vmem:[%s1 + $0x60] sm:$0xf]
  %v48 = vld [vmem:[%s1 + $0x64] sm:$0xf]
  %v49 = vld [vmem:[%s1 + $0x68] sm:$0xf]
  %v50 = vld [vmem:[%s1 + $0x6c] sm:$0xf]
  %v51 = vld [vmem:[%s1 + $0x70] sm:$0xf]
  %v52 = vld [vmem:[%s1 + $0x74] sm:$0xf]
  %v53 = vld [vmem:[%s1 + $0x78] sm:$0xf]
  %v54 = vld [vmem:[%s1 + $0x7c] sm:$0xf]
  %v55 = vld [vmem:[%s1 + $0x80] sm:$0xf]
  %v56 = vld [vmem:[%s1 + $0x84] sm:$0xf]
  %v57 = vld [vmem:[%s1 + $0x88] sm:$0xf]
  %v58 = vld [vmem:[%s1 + $0x8c] sm:$0xf]
  %v59 = vld [vmem:[%s1 + $0x90] sm:$0xf]
  %v60 = vld [vmem:[%s1 + $0x94] sm:$0xf]
  %v61 = vld [vmem:[%s1 + $0x98] sm:$0xf]
  %v62 = vld [vmem:[%s1 + $0x9c] sm:$0xf]
  %v63 = vld [vmem:[%s1 + $0xa0] sm:$0xf]
  %v64 = vld [vmem:[%s1 + $0xa4] sm:$0xf]
  %v65 = vld [vmem:[%s1 + $0xa8] sm:$0xf]
  %v66 = vld [vmem:[%s1 + $0xac] sm:$0xf]
  %v67 = vld [vmem:[%s1 + $0xb0] sm:$0xf]
  %v68 = vld [vmem:[%s1 + $0xb4] sm:$0xf]
  %v69 = vld [vmem:[%s1 + $0xb8] sm:$0xf]
  %v70 = vld [vmem:[%s1 + $0xbc] sm:$0xf]
  %v71 = vld [vmem:[%s1 + $0xc0] sm:$0xf]
  %v72 = vld [vmem:[%s1 + $0xc4] sm:$0xf]
  %v73 = vld [vmem:[%s1 + $0xc8] sm:$0xf]
  %v74 = vld [vmem:[%s1 + $0xcc] sm:$0xf]
  %v75 = vld [vmem:[%s1 + $0xd0] sm:$0xf]
  %v76 = vld [vmem:[%s1 + $0xd4] sm:$0xf]
  %v77 = vld [vmem:[%s1 + $0xd8] sm:$0xf]
  %v78 = vld [vmem:[%s1 + $0xdc] sm:$0xf]
  %v79 = vld [vmem:[%s1 + $0xe0] sm:$0xf]
  %v80 = vld [vmem:[%s1 + $0xe4] sm:$0xf]
  %v81 = vld [vmem:[%s1 + $0xe8] sm:$0xf]
  %v82 = vld [vmem:[%s1 + $0xec] sm:$0xf]
  %v83 = vld [vmem:[%s1 + $0xf0] sm:$0xf]
  %v84 = vld [vmem:[%s1 + $0xf4] sm:$0xf]
  %v85 = vld [vmem:[%s1 + $0xf8] sm:$0xf]
  %v86 = vld [vmem:[%s1 + $0xfc] sm:$0xf]
  %v87 = vld [vmem:[%s1 + $0x100] sm:$0xf]
  %v88 = vld [vmem:[%s1 + $0x104] sm:$0xf]
  %v89 = vld [vmem:[%s1 + $0x108] sm:$0xf]
  %v90 = vld [vmem:[%s1 + $0x10c] sm:$0xf]
  %v91 = vld [vmem:[%s1 + $0x110] sm:$0xf]
  %v92 = vld [vmem:[%s1 + $0x114] sm:$0xf]
  %v93 = vld [vmem:[%s1 + $0x118] sm:$0xf]
  %v94 = vld [vmem:[%s1 + $0x11c] sm:$0xf]
  %v95 = vld [vmem:[%s1 + $0x120] sm:$0xf]
  %v96 = vld [vmem:[%s1 + $0x124] sm:$0xf]
  %v97 = vld [vmem:[%s1 + $0x128] sm:$0xf]
  %v98 = vld [vmem:[%s1 + $0x12c] sm:$0xf]
  %v99 = vld [vmem:[%s1 + $0x130] sm:$0xf]
  %v100 = vld [vmem:[%s1 + $0x134] sm:$0xf]
  %v101 = vld [vmem:[%s1 + $0x138] sm:$0xf]
  %v102 = vld [vmem:[%s1 + $0x13c] sm:$0xf]
  %v103 = vld [vmem:[%s2] sm:$0x1]
  %v105 = vperm.slane %v103, 0
  %v113 = vunpack.c.l.b16 %v17
  %v114 = vunpack.c.h.b16 %v17
  %v115 = vunpack.c.l.b16 %v18
  %v116 = vunpack.c.h.b16 %v18
  %v117 = vunpack.c.l.b16 %v19
  %v118 = vunpack.c.l.b16 %v20
  %v119 = vunpack.c.h.b16 %v20
  %v120 = vunpack.c.l.b16 %v21
  %v121 = vunpack.c.h.b16 %v21
  %v122 = vunpack.c.l.b16 %v22
  %v123 = vpack.c.b16 %v118, %v113
  %v124 = vpack.c.b16 %v119, %v114
  %v125 = vpack.c.b16 %v120, %v115
  %v126 = vpack.c.b16 %v121, %v116
  %v127 = vpack.c.b16 %v122, %v117
  %v213 = vunpack.c.l.b16 %v23
  %v214 = vunpack.c.l.b16 %v24
  %v215 = vunpack.c.l.b16 %v25
  %v216 = vunpack.c.l.b16 %v26
  %v217 = vunpack.c.l.b16 %v27
  %v218 = vunpack.c.l.b16 %v28
  %v219 = vunpack.c.l.b16 %v29
  %v220 = vunpack.c.l.b16 %v30
  %v221 = vunpack.c.l.b16 %v31
  %v222 = vunpack.c.l.b16 %v32
  %v223 = vunpack.c.l.b16 %v33
  %v224 = vunpack.c.l.b16 %v34
  %v225 = vunpack.c.l.b16 %v35
  %v226 = vunpack.c.l.b16 %v36
  %v227 = vunpack.c.l.b16 %v37
  %v228 = vunpack.c.l.b16 %v38
  %v229 = vunpack.c.l.b16 %v39
  %v230 = vunpack.c.l.b16 %v40
  %v231 = vunpack.c.l.b16 %v41
  %v232 = vunpack.c.l.b16 %v42
  %v233 = vunpack.c.l.b16 %v43
  %v234 = vunpack.c.l.b16 %v44
  %v235 = vunpack.c.l.b16 %v45
  %v236 = vunpack.c.l.b16 %v46
  %v237 = vunpack.c.l.b16 %v47
  %v238 = vunpack.c.l.b16 %v48
  %v239 = vunpack.c.l.b16 %v49
  %v240 = vunpack.c.l.b16 %v50
  %v241 = vunpack.c.l.b16 %v51
  %v242 = vunpack.c.l.b16 %v52
  %v243 = vunpack.c.l.b16 %v53
  %v244 = vunpack.c.l.b16 %v54
  %v245 = vunpack.c.l.b16 %v55
  %v246 = vunpack.c.l.b16 %v56
  %v247 = vunpack.c.l.b16 %v57
  %v248 = vunpack.c.l.b16 %v58
  %v249 = vunpack.c.l.b16 %v59
  %v250 = vunpack.c.l.b16 %v60
  %v251 = vunpack.c.l.b16 %v61
  %v252 = vunpack.c.l.b16 %v62
  %v253 = vunpack.c.l.b16 %v63
  %v254 = vunpack.c.l.b16 %v64
  %v255 = vunpack.c.l.b16 %v65
  %v256 = vunpack.c.l.b16 %v66
  %v257 = vunpack.c.l.b16 %v67
  %v258 = vunpack.c.l.b16 %v68
  %v259 = vunpack.c.l.b16 %v69
  %v260 = vunpack.c.l.b16 %v70
  %v261 = vunpack.c.l.b16 %v71
  %v262 = vunpack.c.l.b16 %v72
  %v263 = vunpack.c.l.b16 %v73
  %v264 = vunpack.c.l.b16 %v74
  %v265 = vunpack.c.l.b16 %v75
  %v266 = vunpack.c.l.b16 %v76
  %v267 = vunpack.c.l.b16 %v77
  %v268 = vunpack.c.l.b16 %v78
  %v269 = vunpack.c.l.b16 %v79
  %v270 = vunpack.c.l.b16 %v80
  %v271 = vunpack.c.l.b16 %v81
  %v272 = vunpack.c.l.b16 %v82
  %v273 = vunpack.c.l.b16 %v83
  %v274 = vunpack.c.l.b16 %v84
  %v275 = vunpack.c.l.b16 %v85
  %v276 = vunpack.c.l.b16 %v86
  %v277 = vunpack.c.l.b16 %v87
  %v278 = vunpack.c.l.b16 %v88
  %v279 = vunpack.c.l.b16 %v89
  %v280 = vunpack.c.l.b16 %v90
  %v281 = vunpack.c.l.b16 %v91
  %v282 = vunpack.c.l.b16 %v92
  %v283 = vunpack.c.l.b16 %v93
  %v284 = vunpack.c.l.b16 %v94
  %v285 = vunpack.c.l.b16 %v95
  %v286 = vunpack.c.l.b16 %v96
  %v287 = vunpack.c.l.b16 %v97
  %v288 = vunpack.c.l.b16 %v98
  %v289 = vunpack.c.l.b16 %v99
  %v290 = vunpack.c.l.b16 %v100
  %v291 = vunpack.c.l.b16 %v101
  %v292 = vunpack.c.l.b16 %v102
  %v293 = vpack.c.b16 %v214, %v213
  %v294 = vpack.c.b16 %v216, %v215
  %v295 = vpack.c.b16 %v218, %v217
  %v296 = vpack.c.b16 %v220, %v219
  %v297 = vpack.c.b16 %v222, %v221
  %v298 = vpack.c.b16 %v224, %v223
  %v299 = vpack.c.b16 %v226, %v225
  %v300 = vpack.c.b16 %v228, %v227
  %v301 = vpack.c.b16 %v230, %v229
  %v302 = vpack.c.b16 %v232, %v231
  %v303 = vpack.c.b16 %v234, %v233
  %v304 = vpack.c.b16 %v236, %v235
  %v305 = vpack.c.b16 %v238, %v237
  %v306 = vpack.c.b16 %v240, %v239
  %v307 = vpack.c.b16 %v242, %v241
  %v308 = vpack.c.b16 %v244, %v243
  %v309 = vpack.c.b16 %v246, %v245
  %v310 = vpack.c.b16 %v248, %v247
  %v311 = vpack.c.b16 %v250, %v249
  %v312 = vpack.c.b16 %v252, %v251
  %v313 = vpack.c.b16 %v254, %v253
  %v314 = vpack.c.b16 %v256, %v255
  %v315 = vpack.c.b16 %v258, %v257
  %v316 = vpack.c.b16 %v260, %v259
  %v317 = vpack.c.b16 %v262, %v261
  %v318 = vpack.c.b16 %v264, %v263
  %v319 = vpack.c.b16 %v266, %v265
  %v320 = vpack.c.b16 %v268, %v267
  %v321 = vpack.c.b16 %v270, %v269
  %v322 = vpack.c.b16 %v272, %v271
  %v323 = vpack.c.b16 %v274, %v273
  %v324 = vpack.c.b16 %v276, %v275
  %v325 = vpack.c.b16 %v278, %v277
  %v326 = vpack.c.b16 %v280, %v279
  %v327 = vpack.c.b16 %v282, %v281
  %v328 = vpack.c.b16 %v284, %v283
  %v329 = vpack.c.b16 %v286, %v285
  %v330 = vpack.c.b16 %v288, %v287
  %v331 = vpack.c.b16 %v290, %v289
  %v332 = vpack.c.b16 %v292, %v291
  %373 = vmatpush.bf16.msra.mxu0 %v300
  %374 = vmatpush.bf16.msra.mxu0 %v299
  %375 = vmatpush.bf16.msra.mxu0 %v298
  %376 = vmatpush.bf16.msra.mxu0 %v297
  %377 = vmatpush.bf16.msra.mxu0 %v296
  %378 = vmatpush.bf16.msra.mxu0 %v295
  %379 = vmatpush.bf16.msra.mxu0 %v294
  %380 = vmatpush.bf16.msra.mxu0 %v293
  %381 = vmatmul.bf16.gmra.mxu0 %v123
  %v382 = vpop.f32.mrf.mxu0
  %v383 = vadd.f32 %v105, %v382
  %v384 = vpop.f32.mrf.mxu0
  %v385 = vadd.f32 %v105, %v384
  %386 = vdwg.mxu0
  %387 = vmatpush.bf16.msra.mxu0 %v308
  %388 = vmatpush.bf16.msra.mxu0 %v307
  %389 = vmatpush.bf16.msra.mxu0 %v306
  %390 = vmatpush.bf16.msra.mxu0 %v305
  %391 = vmatpush.bf16.msra.mxu0 %v304
  %392 = vmatpush.bf16.msra.mxu0 %v303
  %393 = vmatpush.bf16.msra.mxu0 %v302
  %394 = vmatpush.bf16.msra.mxu0 %v301
  %395 = vmatmul.bf16.gmra.mxu0 %v124
  %v396 = vpop.f32.mrf.mxu0
  %v397 = vadd.f32 %v383, %v396
  %v398 = vpop.f32.mrf.mxu0
  %v399 = vadd.f32 %v385, %v398
  %400 = vdwg.mxu0
  %401 = vmatpush.bf16.msra.mxu0 %v316
  %402 = vmatpush.bf16.msra.mxu0 %v315
  %403 = vmatpush.bf16.msra.mxu0 %v314
  %404 = vmatpush.bf16.msra.mxu0 %v313
  %405 = vmatpush.bf16.msra.mxu0 %v312
  %406 = vmatpush.bf16.msra.mxu0 %v311
  %407 = vmatpush.bf16.msra.mxu0 %v310
  %408 = vmatpush.bf16.msra.mxu0 %v309
  %409 = vmatmul.bf16.gmra.mxu0 %v125
  %v410 = vpop.f32.mrf.mxu0
  %v411 = vadd.f32 %v397, %v410
  %v412 = vpop.f32.mrf.mxu0
  %v413 = vadd.f32 %v399, %v412
  %414 = vdwg.mxu0
  %415 = vmatpush.bf16.msra.mxu0 %v324
  %416 = vmatpush.bf16.msra.mxu0 %v323
  %417 = vmatpush.bf16.msra.mxu0 %v322
  %418 = vmatpush.bf16.msra.mxu0 %v321
  %419 = vmatpush.bf16.msra.mxu0 %v320
  %420 = vmatpush.bf16.msra.mxu0 %v319
  %421 = vmatpush.bf16.msra.mxu0 %v318
  %422 = vmatpush.bf16.msra.mxu0 %v317
  %423 = vmatmul.bf16.gmra.mxu0 %v126
  %v424 = vpop.f32.mrf.mxu0
  %v425 = vadd.f32 %v411, %v424
  %v426 = vpop.f32.mrf.mxu0
  %v427 = vadd.f32 %v413, %v426
  %428 = vdwg.mxu0
  %429 = vmatpush.bf16.msra.mxu0 %v332
  %430 = vmatpush.bf16.msra.mxu0 %v331
  %431 = vmatpush.bf16.msra.mxu0 %v330
  %432 = vmatpush.bf16.msra.mxu0 %v329
  %433 = vmatpush.bf16.msra.mxu0 %v328
  %434 = vmatpush.bf16.msra.mxu0 %v327
  %435 = vmatpush.bf16.msra.mxu0 %v326
  %436 = vmatpush.bf16.msra.mxu0 %v325
  %437 = vmatmul.bf16.gmra.mxu0 %v127
  %v438 = vpop.f32.mrf.mxu0
  %v439 = vadd.f32 %v425, %v438
  %v440 = vpop.f32.mrf.mxu0
  %v441 = vadd.f32 %v427, %v440
  %442 = vdwg.mxu0
  %v443 = vld [vmem:[%s3] sm:$0xf]
  %v444 = vld [vmem:[%s3 + $0x4] sm:$0xf]
  %v445 = vunpack.c.l.bf16 %v443
  %v446 = vunpack.c.l.bf16 %v444
  %v447 = vadd.f32 %v439, %v445
  %v448 = vadd.f32 %v441, %v446
  %v449 = vmax.f32 %v447, 0.0
  %v450 = vmax.f32 %v448, 0.0
  %v451 = vpack.c.bf16 %v449, %v449
  %v452 = vpack.c.bf16 %v450, %v450
  %453 = vst [vmem:[%s4] sm:$0xf] %v451
  %454 = vst [vmem:[%s4 + $0x4] sm:$0xf] %v452
  // Predicated region
  $region18: #{resnet_forward.35} parent=0 // pred_check
    _
  $region19: #{resnet_forward.35} parent=0 // pred_check_branch
    %456 = sbr.rel (0) target = $region21
  $region20: #{resnet_forward.35} parent=0 // pred_region
    _
  $region21: #{resnet_forward.35} parent=0 // pred_fallthru
    _
  // Predicated region
  $region22: #{resnet_forward.35} parent=0 // pred_check
    _
  $region23: #{resnet_forward.35} parent=0 // pred_check_branch
    %458 = sbr.rel (0) target = $region25
  $region24: #{resnet_forward.35} parent=0 // pred_region
    _
  $region25: #{resnet_forward.35} parent=0 // pred_fallthru
    _

// kernel: resnet_forward.34
$region0: #{resnet_forward.34}
  #allocation0 [shape = 'u32[]', space=smem, size = 0x4, offset = 0x4, fixed_abs, tag = 'smem constant byte address 0x4 - core index']
  #allocation1 [shape = 'u32[72,128]{1,0:T(1,128)}', space=vmem, size = 0x9000, scoped, tag = 'internal scratch']
  %s0 = inlined_call_operand.vmem [shape: bf16[16,640], index: 0, kind: input, shape index: {}]
  %s1 = inlined_call_operand.vmem [shape: bf16[640,128], index: 1, kind: input, shape index: {}]
  %s2 = inlined_call_operand.vmem [shape: f32[1,128], index: 2, kind: input, shape index: {}]
  %s3 = inlined_call_operand.vmem [shape: bf16[16,128], index: 3, kind: output, shape index: {}]
  %s4 = sld [smem:[#allocation0]]
  $region22: #{resnet_forward.34} parent=0
    _
  %s6 = ssub.s32 1, %s4
  %s7 = scalar_select 0, %s6, %s4
  // Predicated region
  $region2: #{resnet_forward.34} parent=0 // pred_check
    _
  $region3: #{resnet_forward.34} parent=0 // pred_check_branch
    %9 = sbr.rel (0) target = $region5
  $region4: #{resnet_forward.34} parent=0 // pred_region
    _
  $region5: #{resnet_forward.34} parent=0 // pred_fallthru
    _
  // Predicated region
  $region6: #{resnet_forward.34} parent=0 // pred_check
    _
  $region7: #{resnet_forward.34} parent=0 // pred_check_branch
    %11 = sbr.rel (0) target = $region9
  $region8: #{resnet_forward.34} parent=0 // pred_region
    _
  $region9: #{resnet_forward.34} parent=0 // pred_fallthru
    _
  // Predicated region
  $region10: #{resnet_forward.34} parent=0 // pred_check
    _
  $region11: #{resnet_forward.34} parent=0 // pred_check_branch
    %13 = sbr.rel (0) target = $region13
  $region12: #{resnet_forward.34} parent=0 // pred_region
    _
  $region13: #{resnet_forward.34} parent=0 // pred_fallthru
    _
  %v14 = vld [vmem:[%s0] sm:$0xff]
  %v15 = vld [vmem:[%s0 + $0x8] sm:$0xff]
  %v16 = vld [vmem:[%s0 + $0x10] sm:$0xf]
  %v17 = vld [vmem:[%s0 + $0x14] sm:$0xff]
  %v18 = vld [vmem:[%s0 + $0x1c] sm:$0xff]
  %v19 = vld [vmem:[%s0 + $0x24] sm:$0xf]
  %v20 = vld [vmem:[%s1] sm:$0xf]
  %v21 = vld [vmem:[%s1 + $0x4] sm:$0xf]
  %v22 = vld [vmem:[%s1 + $0x8] sm:$0xf]
  %v23 = vld [vmem:[%s1 + $0xc] sm:$0xf]
  %v24 = vld [vmem:[%s1 + $0x10] sm:$0xf]
  %v25 = vld [vmem:[%s1 + $0x14] sm:$0xf]
  %v26 = vld [vmem:[%s1 + $0x18] sm:$0xf]
  %v27 = vld [vmem:[%s1 + $0x1c] sm:$0xf]
  %v28 = vld [vmem:[%s1 + $0x20] sm:$0xf]
  %v29 = vld [vmem:[%s1 + $0x24] sm:$0xf]
  %v30 = vld [vmem:[%s1 + $0x28] sm:$0xf]
  %v31 = vld [vmem:[%s1 + $0x2c] sm:$0xf]
  %v32 = vld [vmem:[%s1 + $0x30] sm:$0xf]
  %v33 = vld [vmem:[%s1 + $0x34] sm:$0xf]
  %v34 = vld [vmem:[%s1 + $0x38] sm:$0xf]
  %v35 = vld [vmem:[%s1 + $0x3c] sm:$0xf]
  %v36 = vld [vmem:[%s1 + $0x40] sm:$0xf]
  %v37 = vld [vmem:[%s1 + $0x44] sm:$0xf]
  %v38 = vld [vmem:[%s1 + $0x48] sm:$0xf]
  %v39 = vld [vmem:[%s1 + $0x4c] sm:$0xf]
  %v40 = vld [vmem:[%s1 + $0x50] sm:$0xf]
  %v41 = vld [vmem:[%s1 + $0x54] sm:$0xf]
  %v42 = vld [vmem:[%s1 + $0x58] sm:$0xf]
  %v43 = vld [vmem:[%s1 + $0x5c] sm:$0xf]
  %v44 = vld [vmem:[%s1 + $0x60] sm:$0xf]
  %v45 = vld [vmem:[%s1 + $0x64] sm:$0xf]
  %v46 = vld [vmem:[%s1 + $0x68] sm:$0xf]
  %v47 = vld [vmem:[%s1 + $0x6c] sm:$0xf]
  %v48 = vld [vmem:[%s1 + $0x70] sm:$0xf]
  %v49 = vld [vmem:[%s1 + $0x74] sm:$0xf]
  %v50 = vld [vmem:[%s1 + $0x78] sm:$0xf]
  %v51 = vld [vmem:[%s1 + $0x7c] sm:$0xf]
  %v52 = vld [vmem:[%s1 + $0x80] sm:$0xf]
  %v53 = vld [vmem:[%s1 + $0x84] sm:$0xf]
  %v54 = vld [vmem:[%s1 + $0x88] sm:$0xf]
  %v55 = vld [vmem:[%s1 + $0x8c] sm:$0xf]
  %v56 = vld [vmem:[%s1 + $0x90] sm:$0xf]
  %v57 = vld [vmem:[%s1 + $0x94] sm:$0xf]
  %v58 = vld [vmem:[%s1 + $0x98] sm:$0xf]
  %v59 = vld [vmem:[%s1 + $0x9c] sm:$0xf]
  %v60 = vld [vmem:[%s1 + $0xa0] sm:$0xf]
  %v61 = vld [vmem:[%s1 + $0xa4] sm:$0xf]
  %v62 = vld [vmem:[%s1 + $0xa8] sm:$0xf]
  %v63 = vld [vmem:[%s1 + $0xac] sm:$0xf]
  %v64 = vld [vmem:[%s1 + $0xb0] sm:$0xf]
  %v65 = vld [vmem:[%s1 + $0xb4] sm:$0xf]
  %v66 = vld [vmem:[%s1 + $0xb8] sm:$0xf]
  %v67 = vld [vmem:[%s1 + $0xbc] sm:$0xf]
  %v68 = vld [vmem:[%s1 + $0xc0] sm:$0xf]
  %v69 = vld [vmem:[%s1 + $0xc4] sm:$0xf]
  %v70 = vld [vmem:[%s1 + $0xc8] sm:$0xf]
  %v71 = vld [vmem:[%s1 + $0xcc] sm:$0xf]
  %v72 = vld [vmem:[%s1 + $0xd0] sm:$0xf]
  %v73 = vld [vmem:[%s1 + $0xd4] sm:$0xf]
  %v74 = vld [vmem:[%s1 + $0xd8] sm:$0xf]
  %v75 = vld [vmem:[%s1 + $0xdc] sm:$0xf]
  %v76 = vld [vmem:[%s1 + $0xe0] sm:$0xf]
  %v77 = vld [vmem:[%s1 + $0xe4] sm:$0xf]
  %v78 = vld [vmem:[%s1 + $0xe8] sm:$0xf]
  %v79 = vld [vmem:[%s1 + $0xec] sm:$0xf]
  %v80 = vld [vmem:[%s1 + $0xf0] sm:$0xf]
  %v81 = vld [vmem:[%s1 + $0xf4] sm:$0xf]
  %v82 = vld [vmem:[%s1 + $0xf8] sm:$0xf]
  %v83 = vld [vmem:[%s1 + $0xfc] sm:$0xf]
  %v84 = vld [vmem:[%s1 + $0x100] sm:$0xf]
  %v85 = vld [vmem:[%s1 + $0x104] sm:$0xf]
  %v86 = vld [vmem:[%s1 + $0x108] sm:$0xf]
  %v87 = vld [vmem:[%s1 + $0x10c] sm:$0xf]
  %v88 = vld [vmem:[%s1 + $0x110] sm:$0xf]
  %v89 = vld [vmem:[%s1 + $0x114] sm:$0xf]
  %v90 = vld [vmem:[%s1 + $0x118] sm:$0xf]
  %v91 = vld [vmem:[%s1 + $0x11c] sm:$0xf]
  %v92 = vld [vmem:[%s1 + $0x120] sm:$0xf]
  %v93 = vld [vmem:[%s1 + $0x124] sm:$0xf]
  %v94 = vld [vmem:[%s1 + $0x128] sm:$0xf]
  %v95 = vld [vmem:[%s1 + $0x12c] sm:$0xf]
  %v96 = vld [vmem:[%s1 + $0x130] sm:$0xf]
  %v97 = vld [vmem:[%s1 + $0x134] sm:$0xf]
  %v98 = vld [vmem:[%s1 + $0x138] sm:$0xf]
  %v99 = vld [vmem:[%s1 + $0x13c] sm:$0xf]
  %v100 = vld [vmem:[%s2] sm:$0x1]
  %v102 = vperm.slane %v100, 0
  %v110 = vunpack.c.l.b16 %v14
  %v111 = vunpack.c.h.b16 %v14
  %v112 = vunpack.c.l.b16 %v15
  %v113 = vunpack.c.h.b16 %v15
  %v114 = vunpack.c.l.b16 %v16
  %v115 = vunpack.c.l.b16 %v17
  %v116 = vunpack.c.h.b16 %v17
  %v117 = vunpack.c.l.b16 %v18
  %v118 = vunpack.c.h.b16 %v18
  %v119 = vunpack.c.l.b16 %v19
  %v120 = vpack.c.b16 %v115, %v110
  %v121 = vpack.c.b16 %v116, %v111
  %v122 = vpack.c.b16 %v117, %v112
  %v123 = vpack.c.b16 %v118, %v113
  %v124 = vpack.c.b16 %v119, %v114
  %v210 = vunpack.c.l.b16 %v20
  %v211 = vunpack.c.l.b16 %v21
  %v212 = vunpack.c.l.b16 %v22
  %v213 = vunpack.c.l.b16 %v23
  %v214 = vunpack.c.l.b16 %v24
  %v215 = vunpack.c.l.b16 %v25
  %v216 = vunpack.c.l.b16 %v26
  %v217 = vunpack.c.l.b16 %v27
  %v218 = vunpack.c.l.b16 %v28
  %v219 = vunpack.c.l.b16 %v29
  %v220 = vunpack.c.l.b16 %v30
  %v221 = vunpack.c.l.b16 %v31
  %v222 = vunpack.c.l.b16 %v32
  %v223 = vunpack.c.l.b16 %v33
  %v224 = vunpack.c.l.b16 %v34
  %v225 = vunpack.c.l.b16 %v35
  %v226 = vunpack.c.l.b16 %v36
  %v227 = vunpack.c.l.b16 %v37
  %v228 = vunpack.c.l.b16 %v38
  %v229 = vunpack.c.l.b16 %v39
  %v230 = vunpack.c.l.b16 %v40
  %v231 = vunpack.c.l.b16 %v41
  %v232 = vunpack.c.l.b16 %v42
  %v233 = vunpack.c.l.b16 %v43
  %v234 = vunpack.c.l.b16 %v44
  %v235 = vunpack.c.l.b16 %v45
  %v236 = vunpack.c.l.b16 %v46
  %v237 = vunpack.c.l.b16 %v47
  %v238 = vunpack.c.l.b16 %v48
  %v239 = vunpack.c.l.b16 %v49
  %v240 = vunpack.c.l.b16 %v50
  %v241 = vunpack.c.l.b16 %v51
  %v242 = vunpack.c.l.b16 %v52
  %v243 = vunpack.c.l.b16 %v53
  %v244 = vunpack.c.l.b16 %v54
  %v245 = vunpack.c.l.b16 %v55
  %v246 = vunpack.c.l.b16 %v56
  %v247 = vunpack.c.l.b16 %v57
  %v248 = vunpack.c.l.b16 %v58
  %v249 = vunpack.c.l.b16 %v59
  %v250 = vunpack.c.l.b16 %v60
  %v251 = vunpack.c.l.b16 %v61
  %v252 = vunpack.c.l.b16 %v62
  %v253 = vunpack.c.l.b16 %v63
  %v254 = vunpack.c.l.b16 %v64
  %v255 = vunpack.c.l.b16 %v65
  %v256 = vunpack.c.l.b16 %v66
  %v257 = vunpack.c.l.b16 %v67
  %v258 = vunpack.c.l.b16 %v68
  %v259 = vunpack.c.l.b16 %v69
  %v260 = vunpack.c.l.b16 %v70
  %v261 = vunpack.c.l.b16 %v71
  %v262 = vunpack.c.l.b16 %v72
  %v263 = vunpack.c.l.b16 %v73
  %v264 = vunpack.c.l.b16 %v74
  %v265 = vunpack.c.l.b16 %v75
  %v266 = vunpack.c.l.b16 %v76
  %v267 = vunpack.c.l.b16 %v77
  %v268 = vunpack.c.l.b16 %v78
  %v269 = vunpack.c.l.b16 %v79
  %v270 = vunpack.c.l.b16 %v80
  %v271 = vunpack.c.l.b16 %v81
  %v272 = vunpack.c.l.b16 %v82
  %v273 = vunpack.c.l.b16 %v83
  %v274 = vunpack.c.l.b16 %v84
  %v275 = vunpack.c.l.b16 %v85
  %v276 = vunpack.c.l.b16 %v86
  %v277 = vunpack.c.l.b16 %v87
  %v278 = vunpack.c.l.b16 %v88
  %v279 = vunpack.c.l.b16 %v89
  %v280 = vunpack.c.l.b16 %v90
  %v281 = vunpack.c.l.b16 %v91
  %v282 = vunpack.c.l.b16 %v92
  %v283 = vunpack.c.l.b16 %v93
  %v284 = vunpack.c.l.b16 %v94
  %v285 = vunpack.c.l.b16 %v95
  %v286 = vunpack.c.l.b16 %v96
  %v287 = vunpack.c.l.b16 %v97
  %v288 = vunpack.c.l.b16 %v98
  %v289 = vunpack.c.l.b16 %v99
  %v290 = vpack.c.b16 %v211, %v210
  %v291 = vpack.c.b16 %v213, %v212
  %v292 = vpack.c.b16 %v215, %v214
  %v293 = vpack.c.b16 %v217, %v216
  %v294 = vpack.c.b16 %v219, %v218
  %v295 = vpack.c.b16 %v221, %v220
  %v296 = vpack.c.b16 %v223, %v222
  %v297 = vpack.c.b16 %v225, %v224
  %v298 = vpack.c.b16 %v227, %v226
  %v299 = vpack.c.b16 %v229, %v228
  %v300 = vpack.c.b16 %v231, %v230
  %v301 = vpack.c.b16 %v233, %v232
  %v302 = vpack.c.b16 %v235, %v234
  %v303 = vpack.c.b16 %v237, %v236
  %v304 = vpack.c.b16 %v239, %v238
  %v305 = vpack.c.b16 %v241, %v240
  %v306 = vpack.c.b16 %v243, %v242
  %v307 = vpack.c.b16 %v245, %v244
  %v308 = vpack.c.b16 %v247, %v246
  %v309 = vpack.c.b16 %v249, %v248
  %v310 = vpack.c.b16 %v251, %v250
  %v311 = vpack.c.b16 %v253, %v252
  %v312 = vpack.c.b16 %v255, %v254
  %v313 = vpack.c.b16 %v257, %v256
  %v314 = vpack.c.b16 %v259, %v258
  %v315 = vpack.c.b16 %v261, %v260
  %v316 = vpack.c.b16 %v263, %v262
  %v317 = vpack.c.b16 %v265, %v264
  %v318 = vpack.c.b16 %v267, %v266
  %v319 = vpack.c.b16 %v269, %v268
  %v320 = vpack.c.b16 %v271, %v270
  %v321 = vpack.c.b16 %v273, %v272
  %v322 = vpack.c.b16 %v275, %v274
  %v323 = vpack.c.b16 %v277, %v276
  %v324 = vpack.c.b16 %v279, %v278
  %v325 = vpack.c.b16 %v281, %v280
  %v326 = vpack.c.b16 %v283, %v282
  %v327 = vpack.c.b16 %v285, %v284
  %v328 = vpack.c.b16 %v287, %v286
  %v329 = vpack.c.b16 %v289, %v288
  %370 = vmatpush.bf16.msra.mxu0 %v297
  %371 = vmatpush.bf16.msra.mxu0 %v296
  %372 = vmatpush.bf16.msra.mxu0 %v295
  %373 = vmatpush.bf16.msra.mxu0 %v294
  %374 = vmatpush.bf16.msra.mxu0 %v293
  %375 = vmatpush.bf16.msra.mxu0 %v292
  %376 = vmatpush.bf16.msra.mxu0 %v291
  %377 = vmatpush.bf16.msra.mxu0 %v290
  %378 = vmatmul.bf16.gmra.mxu0 %v120
  %v379 = vpop.f32.mrf.mxu0
  %v380 = vadd.f32 %v102, %v379
  %v381 = vpop.f32.mrf.mxu0
  %v382 = vadd.f32 %v102, %v381
  %383 = vdwg.mxu0
  %384 = vmatpush.bf16.msra.mxu0 %v305
  %385 = vmatpush.bf16.msra.mxu0 %v304
  %386 = vmatpush.bf16.msra.mxu0 %v303
  %387 = vmatpush.bf16.msra.mxu0 %v302
  %388 = vmatpush.bf16.msra.mxu0 %v301
  %389 = vmatpush.bf16.msra.mxu0 %v300
  %390 = vmatpush.bf16.msra.mxu0 %v299
  %391 = vmatpush.bf16.msra.mxu0 %v298
  %392 = vmatmul.bf16.gmra.mxu0 %v121
  %v393 = vpop.f32.mrf.mxu0
  %v394 = vadd.f32 %v380, %v393
  %v395 = vpop.f32.mrf.mxu0
  %v396 = vadd.f32 %v382, %v395
  %397 = vdwg.mxu0
  %398 = vmatpush.bf16.msra.mxu0 %v313
  %399 = vmatpush.bf16.msra.mxu0 %v312
  %400 = vmatpush.bf16.msra.mxu0 %v311
  %401 = vmatpush.bf16.msra.mxu0 %v310
  %402 = vmatpush.bf16.msra.mxu0 %v309
  %403 = vmatpush.bf16.msra.mxu0 %v308
  %404 = vmatpush.bf16.msra.mxu0 %v307
  %405 = vmatpush.bf16.msra.mxu0 %v306
  %406 = vmatmul.bf16.gmra.mxu0 %v122
  %v407 = vpop.f32.mrf.mxu0
  %v408 = vadd.f32 %v394, %v407
  %v409 = vpop.f32.mrf.mxu0
  %v410 = vadd.f32 %v396, %v409
  %411 = vdwg.mxu0
  %412 = vmatpush.bf16.msra.mxu0 %v321
  %413 = vmatpush.bf16.msra.mxu0 %v320
  %414 = vmatpush.bf16.msra.mxu0 %v319
  %415 = vmatpush.bf16.msra.mxu0 %v318
  %416 = vmatpush.bf16.msra.mxu0 %v317
  %417 = vmatpush.bf16.msra.mxu0 %v316
  %418 = vmatpush.bf16.msra.mxu0 %v315
  %419 = vmatpush.bf16.msra.mxu0 %v314
  %420 = vmatmul.bf16.gmra.mxu0 %v123
  %v421 = vpop.f32.mrf.mxu0
  %v422 = vadd.f32 %v408, %v421
  %v423 = vpop.f32.mrf.mxu0
  %v424 = vadd.f32 %v410, %v423
  %425 = vdwg.mxu0
  %426 = vmatpush.bf16.msra.mxu0 %v329
  %427 = vmatpush.bf16.msra.mxu0 %v328
  %428 = vmatpush.bf16.msra.mxu0 %v327
  %429 = vmatpush.bf16.msra.mxu0 %v326
  %430 = vmatpush.bf16.msra.mxu0 %v325
  %431 = vmatpush.bf16.msra.mxu0 %v324
  %432 = vmatpush.bf16.msra.mxu0 %v323
  %433 = vmatpush.bf16.msra.mxu0 %v322
  %434 = vmatmul.bf16.gmra.mxu0 %v124
  %v435 = vpop.f32.mrf.mxu0
  %v436 = vadd.f32 %v422, %v435
  %v437 = vpop.f32.mrf.mxu0
  %v438 = vadd.f32 %v424, %v437
  %439 = vdwg.mxu0
  %v440 = vmax.f32 %v436, 0.0
  %v441 = vmax.f32 %v438, 0.0
  %v442 = vpack.c.bf16 %v440, %v440
  %v443 = vpack.c.bf16 %v441, %v441
  %444 = vst [vmem:[%s3] sm:$0xf] %v442
  %445 = vst [vmem:[%s3 + $0x4] sm:$0xf] %v443
  // Predicated region
  $region14: #{resnet_forward.34} parent=0 // pred_check
    _
  $region15: #{resnet_forward.34} parent=0 // pred_check_branch
    %447 = sbr.rel (0) target = $region17
  $region16: #{resnet_forward.34} parent=0 // pred_region
    _
  $region17: #{resnet_forward.34} parent=0 // pred_fallthru
    _
  // Predicated region
  $region18: #{resnet_forward.34} parent=0 // pred_check
    _
  $region19: #{resnet_forward.34} parent=0 // pred_check_branch
    %449 = sbr.rel (0) target = $region21
  $region20: #{resnet_forward.34} parent=0 // pred_region
    _
  $region21: #{resnet_forward.34} parent=0 // pred_fallthru
    _

</llo_original>
